<compile_context>
chip_gen: v5e
topology: v5e:2x2
jax: 0.10.0
libtpu: 0.0.40
codegen_flags: <defaults>
</compile_context>

<pallas_src>
import jax
import jax.numpy as jnp
from jax.experimental import pallas as pl
from jax.experimental.pallas import tpu as pltpu

# ----------------------------------------------------------------------------
# Model hyperparameters (matching the PyTorch module's __init__)
# ----------------------------------------------------------------------------
INPUT_SIZE = 256
OUTPUT_SIZE = 10
HIDDEN_SIZES = [784, 624, 312, 156, 78]
LAYER_DIMS = [INPUT_SIZE] + HIDDEN_SIZES + [OUTPUT_SIZE]   # 7 entries, 6 layers
NUM_LAYERS = len(LAYER_DIMS) - 1


def _round_up(n, m):
    return ((n + m - 1) // m) * m


# 128-padded dims: [256, 896, 640, 384, 256, 128, 128]
PADDED_DIMS = [_round_up(d, 128) for d in LAYER_DIMS]
IN_PAD = PADDED_DIMS[0]
OUT_PAD = PADDED_DIMS[-1]


# ----------------------------------------------------------------------------
# Pallas kernel: fused 6x (bf16 matmul + f32 bias [+ ReLU]) on the MXU/VPU.
# One grid axis over batch tiles; weights are VMEM-resident across iterations.
# ----------------------------------------------------------------------------
def mlp_kernel(x_ref,
               w1_ref, b1_ref, w2_ref, b2_ref, w3_ref, b3_ref,
               w4_ref, b4_ref, w5_ref, b5_ref, w6_ref, b6_ref,
               o_ref):
    def linear(h, w_ref, b_ref, relu):
        # bf16 x bf16 matmul, f32 MXU accumulation.
        y = jnp.dot(h.astype(jnp.bfloat16), w_ref[...],
                    preferred_element_type=jnp.float32)
        y = y + b_ref[...]                     # (1, out) broadcast, single VPU add
        if relu:
            y = jnp.maximum(y, 0.0)            # ReLU on VPU; dropout = identity (eval)
        return y

    h = x_ref[...]
    h = linear(h, w1_ref, b1_ref, True)
    h = linear(h, w2_ref, b2_ref, True)
    h = linear(h, w3_ref, b3_ref, True)
    h = linear(h, w4_ref, b4_ref, True)
    h = linear(h, w5_ref, b5_ref, True)
    y = linear(h, w6_ref, b6_ref, False)       # final layer: no activation
    o_ref[...] = y.astype(o_ref.dtype)


def mlp_forward(x, params, *, batch_tile=256):
    """x: [batch, INPUT_SIZE] float32.
    params: list of (W_pad[in_pad, out_pad] bf16, b_pad[1, out_pad] f32)."""
    batch = x.shape[0]
    tb = batch_tile if batch >= batch_tile else _round_up(batch, 8)
    padded_batch = _round_up(batch, tb)

    # Zero-pad batch and input features (input is already 128-aligned; general code).
    x_pad = jnp.zeros((padded_batch, IN_PAD), jnp.float32)
    x_pad = x_pad.at[:batch, :INPUT_SIZE].set(x)

    flat_args = [x_pad]
    in_specs = [pl.BlockSpec((tb, IN_PAD), lambda i: (i, 0))]
    for (w, b) in params:
        flat_args.extend([w, b])
        # Constant index_map -> weight/bias tiles stay resident across batch tiles.
        in_specs.append(pl.BlockSpec(w.shape, lambda i: (0, 0)))
        in_specs.append(pl.BlockSpec(b.shape, lambda i: (0, 0)))

    flops = 2 * padded_batch * sum(
        PADDED_DIMS[i] * PADDED_DIMS[i + 1] for i in range(NUM_LAYERS))
    weight_bytes = sum(w.size * w.dtype.itemsize + b.size * b.dtype.itemsize
                       for (w, b) in params)
    bytes_accessed = (weight_bytes
                      + x_pad.size * x_pad.dtype.itemsize
                      + padded_batch * OUT_PAD * 4)

    out_pad = pl.pallas_call(
        mlp_kernel,
        out_shape=jax.ShapeDtypeStruct((padded_batch, OUT_PAD), jnp.float32),
        grid=(padded_batch // tb,),
        in_specs=in_specs,
        out_specs=pl.BlockSpec((tb, OUT_PAD), lambda i: (i, 0)),
        compiler_params=pltpu.CompilerParams(
            dimension_semantics=("parallel",),
            vmem_limit_bytes=64 * 1024 * 1024),
        cost_estimate=pl.CostEstimate(
            flops=flops, transcendentals=0, bytes_accessed=bytes_accessed),
    )(*flat_args)

    # Slice away batch padding and the padded output columns (10 real outputs).
    return out_pad[:batch, :OUTPUT_SIZE]


# ----------------------------------------------------------------------------
# Deterministic parameter init (PyTorch-Linear-style uniform), padded + bf16.
# Padded weight rows/cols and bias entries are zero => identical math.
# ----------------------------------------------------------------------------
def init_params(key):
    params = []
    for i in range(NUM_LAYERS):
        fan_in, fan_out = LAYER_DIMS[i], LAYER_DIMS[i + 1]
        pin, pout = PADDED_DIMS[i], PADDED_DIMS[i + 1]
        key, kw, kb = jax.random.split(key, 3)
        bound = 1.0 / (fan_in ** 0.5)
        # PyTorch stores weight as (out, in); we store transposed (in, out).
        w = jax.random.uniform(kw, (fan_in, fan_out), jnp.float32, -bound, bound)
        b = jax.random.uniform(kb, (fan_out,), jnp.float32, -bound, bound)
        w_pad = jnp.zeros((pin, pout), jnp.float32).at[:fan_in, :fan_out].set(w)
        b_pad = jnp.zeros((1, pout), jnp.float32).at[0, :fan_out].set(b)
        params.append((w_pad.astype(jnp.bfloat16), b_pad))
    return params


def reference_forward(x, params):
    """Pure-JAX reference using the exact same (padded, bf16) math as the kernel."""
    batch = x.shape[0]
    h = jnp.zeros((batch, IN_PAD), jnp.float32).at[:, :INPUT_SIZE].set(x)
    for i, (w, b) in enumerate(params):
        h = jnp.dot(h.astype(jnp.bfloat16), w,
                    preferred_element_type=jnp.float32) + b
        if i < len(params) - 1:
            h = jnp.maximum(h, 0.0)
    return h[:, :OUTPUT_SIZE]


if __name__ == "__main__":
    key = jax.random.PRNGKey(0)
    key, kx = jax.random.split(key)

    batch = 8
    x = jax.random.normal(kx, (batch, INPUT_SIZE), jnp.float32)
    params = init_params(key)

    out = mlp_forward(x, params)
    out = jax.block_until_ready(out)

    ref = reference_forward(x, params)
    assert out.shape == (batch, OUTPUT_SIZE)
    assert jnp.allclose(out, ref, atol=1e-2, rtol=1e-2)

    print("KERNEL_OK")
</pallas_src>

<mosaic_0001>
module attributes {stable_mosaic.version = 11 : i64} {
  func.func @mlp_kernel(%arg0: i32, %arg1: memref<8x256xf32, #tpu.memory_space<vmem>>, %arg2: memref<256x896xbf16, #tpu.memory_space<vmem>>, %arg3: memref<1x896xf32, #tpu.memory_space<vmem>>, %arg4: memref<896x640xbf16, #tpu.memory_space<vmem>>, %arg5: memref<1x640xf32, #tpu.memory_space<vmem>>, %arg6: memref<640x384xbf16, #tpu.memory_space<vmem>>, %arg7: memref<1x384xf32, #tpu.memory_space<vmem>>, %arg8: memref<384x256xbf16, #tpu.memory_space<vmem>>, %arg9: memref<1x256xf32, #tpu.memory_space<vmem>>, %arg10: memref<256x128xbf16, #tpu.memory_space<vmem>>, %arg11: memref<1x128xf32, #tpu.memory_space<vmem>>, %arg12: memref<128x128xbf16, #tpu.memory_space<vmem>>, %arg13: memref<1x128xf32, #tpu.memory_space<vmem>>, %arg14: memref<8x128xf32, #tpu.memory_space<vmem>>) attributes {dimension_semantics = [#tpu.dimension_semantics<parallel>], iteration_bounds = array<i64: 1>, scalar_prefetch = 0 : i64, scratch_operands = 0 : i64, tpu.core_type = #tpu.core_type<tc>, window_params = [{transform_indices = @transform_0, window_bounds = array<i64: 8, 256>}, {pipeline_mode = #tpu.pipeline_mode<synchronous>, transform_indices = @transform_1, window_bounds = array<i64: 256, 896>}, {pipeline_mode = #tpu.pipeline_mode<synchronous>, transform_indices = @transform_2, window_bounds = array<i64: 1, 896>}, {pipeline_mode = #tpu.pipeline_mode<synchronous>, transform_indices = @transform_3, window_bounds = array<i64: 896, 640>}, {pipeline_mode = #tpu.pipeline_mode<synchronous>, transform_indices = @transform_4, window_bounds = array<i64: 1, 640>}, {pipeline_mode = #tpu.pipeline_mode<synchronous>, transform_indices = @transform_5, window_bounds = array<i64: 640, 384>}, {pipeline_mode = #tpu.pipeline_mode<synchronous>, transform_indices = @transform_6, window_bounds = array<i64: 1, 384>}, {pipeline_mode = #tpu.pipeline_mode<synchronous>, transform_indices = @transform_7, window_bounds = array<i64: 384, 256>}, {pipeline_mode = #tpu.pipeline_mode<synchronous>, transform_indices = @transform_8, window_bounds = array<i64: 1, 256>}, {pipeline_mode = #tpu.pipeline_mode<synchronous>, transform_indices = @transform_9, window_bounds = array<i64: 256, 128>}, {pipeline_mode = #tpu.pipeline_mode<synchronous>, transform_indices = @transform_10, window_bounds = array<i64: 1, 128>}, {pipeline_mode = #tpu.pipeline_mode<synchronous>, transform_indices = @transform_11, window_bounds = array<i64: 128, 128>}, {pipeline_mode = #tpu.pipeline_mode<synchronous>, transform_indices = @transform_12, window_bounds = array<i64: 1, 128>}, {transform_indices = @transform_13, window_bounds = array<i64: 8, 128>}]} {
    %c0 = arith.constant 0 : index
    %c0_0 = arith.constant 0 : index
    %0 = vector.load %arg1[%c0, %c0_0] : memref<8x256xf32, #tpu.memory_space<vmem>>, vector<8x256xf32>
    %1 = arith.truncf %0 : vector<8x256xf32> to vector<8x256xbf16>
    %c0_1 = arith.constant 0 : index
    %c0_2 = arith.constant 0 : index
    %2 = vector.load %arg2[%c0_1, %c0_2] : memref<256x896xbf16, #tpu.memory_space<vmem>>, vector<256x896xbf16>
    %cst = arith.constant dense<0.000000e+00> : vector<8x896xf32>
    %3 = tpu.matmul %1, %2, %cst {dimension_numbers = #tpu.dot_dimension_numbers<[1], [0], [0], [1], [0, 0, 1, 1], [], []>} : vector<8x256xbf16>, vector<256x896xbf16>, vector<8x896xf32> -> vector<8x896xf32>
    %c0_3 = arith.constant 0 : index
    %c0_4 = arith.constant 0 : index
    %4 = vector.load %arg3[%c0_3, %c0_4] : memref<1x896xf32, #tpu.memory_space<vmem>>, vector<1x896xf32>
    %5 = vector.broadcast %4 : vector<1x896xf32> to vector<8x896xf32>
    %6 = arith.addf %3, %5 : vector<8x896xf32>
    %cst_5 = arith.constant 0.000000e+00 : f32
    %7 = vector.broadcast %cst_5 : f32 to vector<8x896xf32>
    %8 = arith.maximumf %6, %7 : vector<8x896xf32>
    %9 = arith.truncf %8 : vector<8x896xf32> to vector<8x896xbf16>
    %c0_6 = arith.constant 0 : index
    %c0_7 = arith.constant 0 : index
    %10 = vector.load %arg4[%c0_6, %c0_7] : memref<896x640xbf16, #tpu.memory_space<vmem>>, vector<896x640xbf16>
    %cst_8 = arith.constant dense<0.000000e+00> : vector<8x640xf32>
    %11 = tpu.matmul %9, %10, %cst_8 {dimension_numbers = #tpu.dot_dimension_numbers<[1], [0], [0], [1], [0, 0, 1, 1], [], []>} : vector<8x896xbf16>, vector<896x640xbf16>, vector<8x640xf32> -> vector<8x640xf32>
    %c0_9 = arith.constant 0 : index
    %c0_10 = arith.constant 0 : index
    %12 = vector.load %arg5[%c0_9, %c0_10] : memref<1x640xf32, #tpu.memory_space<vmem>>, vector<1x640xf32>
    %13 = vector.broadcast %12 : vector<1x640xf32> to vector<8x640xf32>
    %14 = arith.addf %11, %13 : vector<8x640xf32>
    %cst_11 = arith.constant 0.000000e+00 : f32
    %15 = vector.broadcast %cst_11 : f32 to vector<8x640xf32>
    %16 = arith.maximumf %14, %15 : vector<8x640xf32>
    %17 = arith.truncf %16 : vector<8x640xf32> to vector<8x640xbf16>
    %c0_12 = arith.constant 0 : index
    %c0_13 = arith.constant 0 : index
    %18 = vector.load %arg6[%c0_12, %c0_13] : memref<640x384xbf16, #tpu.memory_space<vmem>>, vector<640x384xbf16>
    %cst_14 = arith.constant dense<0.000000e+00> : vector<8x384xf32>
    %19 = tpu.matmul %17, %18, %cst_14 {dimension_numbers = #tpu.dot_dimension_numbers<[1], [0], [0], [1], [0, 0, 1, 1], [], []>} : vector<8x640xbf16>, vector<640x384xbf16>, vector<8x384xf32> -> vector<8x384xf32>
    %c0_15 = arith.constant 0 : index
    %c0_16 = arith.constant 0 : index
    %20 = vector.load %arg7[%c0_15, %c0_16] : memref<1x384xf32, #tpu.memory_space<vmem>>, vector<1x384xf32>
    %21 = vector.broadcast %20 : vector<1x384xf32> to vector<8x384xf32>
    %22 = arith.addf %19, %21 : vector<8x384xf32>
    %cst_17 = arith.constant 0.000000e+00 : f32
    %23 = vector.broadcast %cst_17 : f32 to vector<8x384xf32>
    %24 = arith.maximumf %22, %23 : vector<8x384xf32>
    %25 = arith.truncf %24 : vector<8x384xf32> to vector<8x384xbf16>
    %c0_18 = arith.constant 0 : index
    %c0_19 = arith.constant 0 : index
    %26 = vector.load %arg8[%c0_18, %c0_19] : memref<384x256xbf16, #tpu.memory_space<vmem>>, vector<384x256xbf16>
    %cst_20 = arith.constant dense<0.000000e+00> : vector<8x256xf32>
    %27 = tpu.matmul %25, %26, %cst_20 {dimension_numbers = #tpu.dot_dimension_numbers<[1], [0], [0], [1], [0, 0, 1, 1], [], []>} : vector<8x384xbf16>, vector<384x256xbf16>, vector<8x256xf32> -> vector<8x256xf32>
    %c0_21 = arith.constant 0 : index
    %c0_22 = arith.constant 0 : index
    %28 = vector.load %arg9[%c0_21, %c0_22] : memref<1x256xf32, #tpu.memory_space<vmem>>, vector<1x256xf32>
    %29 = vector.broadcast %28 : vector<1x256xf32> to vector<8x256xf32>
    %30 = arith.addf %27, %29 : vector<8x256xf32>
    %cst_23 = arith.constant 0.000000e+00 : f32
    %31 = vector.broadcast %cst_23 : f32 to vector<8x256xf32>
    %32 = arith.maximumf %30, %31 : vector<8x256xf32>
    %33 = arith.truncf %32 : vector<8x256xf32> to vector<8x256xbf16>
    %c0_24 = arith.constant 0 : index
    %c0_25 = arith.constant 0 : index
    %34 = vector.load %arg10[%c0_24, %c0_25] : memref<256x128xbf16, #tpu.memory_space<vmem>>, vector<256x128xbf16>
    %cst_26 = arith.constant dense<0.000000e+00> : vector<8x128xf32>
    %35 = tpu.matmul %33, %34, %cst_26 {dimension_numbers = #tpu.dot_dimension_numbers<[1], [0], [0], [1], [0, 0, 1, 1], [], []>} : vector<8x256xbf16>, vector<256x128xbf16>, vector<8x128xf32> -> vector<8x128xf32>
    %c0_27 = arith.constant 0 : index
    %c0_28 = arith.constant 0 : index
    %36 = vector.load %arg11[%c0_27, %c0_28] : memref<1x128xf32, #tpu.memory_space<vmem>>, vector<1x128xf32>
    %37 = vector.broadcast %36 : vector<1x128xf32> to vector<8x128xf32>
    %38 = arith.addf %35, %37 : vector<8x128xf32>
    %cst_29 = arith.constant 0.000000e+00 : f32
    %39 = vector.broadcast %cst_29 : f32 to vector<8x128xf32>
    %40 = arith.maximumf %38, %39 : vector<8x128xf32>
    %41 = arith.truncf %40 : vector<8x128xf32> to vector<8x128xbf16>
    %c0_30 = arith.constant 0 : index
    %c0_31 = arith.constant 0 : index
    %42 = vector.load %arg12[%c0_30, %c0_31] : memref<128x128xbf16, #tpu.memory_space<vmem>>, vector<128x128xbf16>
    %cst_32 = arith.constant dense<0.000000e+00> : vector<8x128xf32>
    %43 = tpu.matmul %41, %42, %cst_32 {dimension_numbers = #tpu.dot_dimension_numbers<[1], [0], [0], [1], [0, 0, 1, 1], [], []>} : vector<8x128xbf16>, vector<128x128xbf16>, vector<8x128xf32> -> vector<8x128xf32>
    %c0_33 = arith.constant 0 : index
    %c0_34 = arith.constant 0 : index
    %44 = vector.load %arg13[%c0_33, %c0_34] : memref<1x128xf32, #tpu.memory_space<vmem>>, vector<1x128xf32>
    %45 = vector.broadcast %44 : vector<1x128xf32> to vector<8x128xf32>
    %46 = arith.addf %43, %45 : vector<8x128xf32>
    %c0_35 = arith.constant 0 : index
    %c0_36 = arith.constant 0 : index
    %47 = vector.load %arg14[%c0_35, %c0_36] : memref<8x128xf32, #tpu.memory_space<vmem>>, vector<8x128xf32>
    tpu.vector_store %arg14[%c0_35, %c0_36], %46 {strides = array<i32>} : memref<8x128xf32, #tpu.memory_space<vmem>>, vector<8x128xf32>,
    return
  }
  func.func @transform_0(%arg0: i32) -> (i32, i32) {
    %c0_i32 = arith.constant 0 : i32
    %c0_i32_0 = arith.constant 0 : i32
    return %arg0, %c0_i32 : i32, i32
  }
  func.func @transform_1(%arg0: i32) -> (i32, i32) {
    %c0_i32 = arith.constant 0 : i32
    %c0_i32_0 = arith.constant 0 : i32
    %c0_i32_1 = arith.constant 0 : i32
    return %c0_i32, %c0_i32_0 : i32, i32
  }
  func.func @transform_2(%arg0: i32) -> (i32, i32) {
    %c0_i32 = arith.constant 0 : i32
    %c0_i32_0 = arith.constant 0 : i32
    %c0_i32_1 = arith.constant 0 : i32
    return %c0_i32, %c0_i32_0 : i32, i32
  }
  func.func @transform_3(%arg0: i32) -> (i32, i32) {
    %c0_i32 = arith.constant 0 : i32
    %c0_i32_0 = arith.constant 0 : i32
    %c0_i32_1 = arith.constant 0 : i32
    return %c0_i32, %c0_i32_0 : i32, i32
  }
  func.func @transform_4(%arg0: i32) -> (i32, i32) {
    %c0_i32 = arith.constant 0 : i32
    %c0_i32_0 = arith.constant 0 : i32
    %c0_i32_1 = arith.constant 0 : i32
    return %c0_i32, %c0_i32_0 : i32, i32
  }
  func.func @transform_5(%arg0: i32) -> (i32, i32) {
    %c0_i32 = arith.constant 0 : i32
    %c0_i32_0 = arith.constant 0 : i32
    %c0_i32_1 = arith.constant 0 : i32
    return %c0_i32, %c0_i32_0 : i32, i32
  }
  func.func @transform_6(%arg0: i32) -> (i32, i32) {
    %c0_i32 = arith.constant 0 : i32
    %c0_i32_0 = arith.constant 0 : i32
    %c0_i32_1 = arith.constant 0 : i32
    return %c0_i32, %c0_i32_0 : i32, i32
  }
  func.func @transform_7(%arg0: i32) -> (i32, i32) {
    %c0_i32 = arith.constant 0 : i32
    %c0_i32_0 = arith.constant 0 : i32
    %c0_i32_1 = arith.constant 0 : i32
    return %c0_i32, %c0_i32_0 : i32, i32
  }
  func.func @transform_8(%arg0: i32) -> (i32, i32) {
    %c0_i32 = arith.constant 0 : i32
    %c0_i32_0 = arith.constant 0 : i32
    %c0_i32_1 = arith.constant 0 : i32
    return %c0_i32, %c0_i32_0 : i32, i32
  }
  func.func @transform_9(%arg0: i32) -> (i32, i32) {
    %c0_i32 = arith.constant 0 : i32
    %c0_i32_0 = arith.constant 0 : i32
    %c0_i32_1 = arith.constant 0 : i32
    return %c0_i32, %c0_i32_0 : i32, i32
  }
  func.func @transform_10(%arg0: i32) -> (i32, i32) {
    %c0_i32 = arith.constant 0 : i32
    %c0_i32_0 = arith.constant 0 : i32
    %c0_i32_1 = arith.constant 0 : i32
    return %c0_i32, %c0_i32_0 : i32, i32
  }
  func.func @transform_11(%arg0: i32) -> (i32, i32) {
    %c0_i32 = arith.constant 0 : i32
    %c0_i32_0 = arith.constant 0 : i32
    %c0_i32_1 = arith.constant 0 : i32
    return %c0_i32, %c0_i32_0 : i32, i32
  }
  func.func @transform_12(%arg0: i32) -> (i32, i32) {
    %c0_i32 = arith.constant 0 : i32
    %c0_i32_0 = arith.constant 0 : i32
    %c0_i32_1 = arith.constant 0 : i32
    return %c0_i32, %c0_i32_0 : i32, i32
  }
  func.func @transform_13(%arg0: i32) -> (i32, i32) {
    %c0_i32 = arith.constant 0 : i32
    %c0_i32_0 = arith.constant 0 : i32
    return %arg0, %c0_i32 : i32, i32
  }
}

</mosaic_0001>

<llo_original>
// kernel: tpu_custom_call.1
$region0: #{tpu_custom_call.1}
  #allocation0 [shape = 'u32[]', space=smem, size = 0x4, offset = 0x4, fixed_abs, tag = 'smem constant byte address 0x4 - core index']
  #allocation1 [shape = 'u32[72,128]{1,0:T(1,128)}', space=vmem, size = 0x9000, scoped, tag = 'internal scratch']
  %s0 = inlined_call_operand.hbm [shape: f32[8,256], index: 0, kind: input, shape index: {}]
  %s1 = inlined_call_operand.hbm [shape: bf16[256,896], index: 1, kind: input, shape index: {}]
  %s2 = inlined_call_operand.hbm [shape: f32[1,896], index: 2, kind: input, shape index: {}]
  %s3 = inlined_call_operand.hbm [shape: bf16[896,640], index: 3, kind: input, shape index: {}]
  %s4 = inlined_call_operand.hbm [shape: f32[1,640], index: 4, kind: input, shape index: {}]
  %s5 = inlined_call_operand.hbm [shape: bf16[640,384], index: 5, kind: input, shape index: {}]
  %s6 = inlined_call_operand.hbm [shape: f32[1,384], index: 6, kind: input, shape index: {}]
  %s7 = inlined_call_operand.hbm [shape: bf16[384,256], index: 7, kind: input, shape index: {}]
  %s8 = inlined_call_operand.hbm [shape: f32[1,256], index: 8, kind: input, shape index: {}]
  %s9 = inlined_call_operand.hbm [shape: bf16[256,128], index: 9, kind: input, shape index: {}]
  %s10 = inlined_call_operand.hbm [shape: f32[1,128], index: 10, kind: input, shape index: {}]
  %s11 = inlined_call_operand.hbm [shape: bf16[128,128], index: 11, kind: input, shape index: {}]
  %s12 = inlined_call_operand.hbm [shape: f32[1,128], index: 12, kind: input, shape index: {}]
  %s13 = inlined_call_operand.hbm [shape: f32[8,128], index: 13, kind: output, shape index: {}]
  %s14 = sld [smem:[#allocation0]]
  $region114: #{tpu_custom_call.1} parent=0
    _
  %s16 = ssub.s32 1, %s14
  %s17 = scalar_select 0, %s16, %s14
  $region1: #{tpu_custom_call.1} parent=0
    #allocation2 [shape = 'u8[8192]{0}', space=vmem, size = 0x2000, scoped, tag = 'input window, operand 0, single buffered']
    #allocation3 [shape = 's32[1]{0}', space=sflag, size = 0x4, scoped, tag = 'scoped memory for tpu_custom_call.1']
    #allocation4 [shape = 's32[1]{0}', space=sflag, size = 0x4, scoped, tag = 'scoped memory for tpu_custom_call.1']
    #allocation5 [shape = 'u8[458752]{0}', space=vmem, size = 0x70000, scoped, tag = 'input window, operand 1, single buffered']
    #allocation6 [shape = 's32[1]{0}', space=sflag, size = 0x4, scoped, tag = 'scoped memory for tpu_custom_call.1']
    #allocation7 [shape = 'u8[3584]{0}', space=vmem, size = 0x1000, scoped, tag = 'input window, operand 2, single buffered']
    #allocation8 [shape = 'u8[1146880]{0}', space=vmem, size = 0x118000, scoped, tag = 'input window, operand 3, single buffered']
    #allocation9 [shape = 's32[1]{0}', space=sflag, size = 0x4, scoped, tag = 'scoped memory for tpu_custom_call.1']
    #allocation10 [shape = 'u8[2560]{0}', space=vmem, size = 0xc00, scoped, tag = 'input window, operand 4, single buffered']
    #allocation11 [shape = 'u8[491520]{0}', space=vmem, size = 0x78000, scoped, tag = 'input window, operand 5, single buffered']
    #allocation12 [shape = 's32[1]{0}', space=sflag, size = 0x4, scoped, tag = 'scoped memory for tpu_custom_call.1']
    #allocation13 [shape = 'u8[1536]{0}', space=vmem, size = 0x800, scoped, tag = 'input window, operand 6, single buffered']
    #allocation14 [shape = 'u8[196608]{0}', space=vmem, size = 0x30000, scoped, tag = 'input window, operand 7, single buffered']
    #allocation15 [shape = 's32[1]{0}', space=sflag, size = 0x4, scoped, tag = 'scoped memory for tpu_custom_call.1']
    #allocation16 [shape = 'u8[1024]{0}', space=vmem, size = 0x400, scoped, tag = 'input window, operand 8, single buffered']
    #allocation17 [shape = 'u8[65536]{0}', space=vmem, size = 0x10000, scoped, tag = 'input window, operand 9, single buffered']
    #allocation18 [shape = 's32[1]{0}', space=sflag, size = 0x4, scoped, tag = 'scoped memory for tpu_custom_call.1']
    #allocation19 [shape = 'u8[512]{0}', space=vmem, size = 0x400, scoped, tag = 'input window, operand 10, single buffered']
    #allocation20 [shape = 'u8[32768]{0}', space=vmem, size = 0x8000, scoped, tag = 'input window, operand 11, single buffered']
    #allocation21 [shape = 's32[1]{0}', space=sflag, size = 0x4, scoped, tag = 'scoped memory for tpu_custom_call.1']
    #allocation22 [shape = 'u8[512]{0}', space=vmem, size = 0x400, scoped, tag = 'input window, operand 12, single buffered']
    #allocation23 [shape = 'u8[4096]{0}', space=vmem, size = 0x1000, scoped, tag = 'output window, operand 0, single buffered']
    %18 = vsyncpa [#allocation3], 0
    %19 = vsyncpa [#allocation6], 0
    %20 = vsyncpa [#allocation9], 0
    %21 = vsyncpa [#allocation12], 0
    %22 = vsyncpa [#allocation15], 0
    %23 = vsyncpa [#allocation18], 0
    %24 = vsyncpa [#allocation21], 0
    %25 = vsyncpa [#allocation4], 0
    // Predicated region
    $region2: #{tpu_custom_call.1} parent=1 // pred_check
      _
    $region3: #{tpu_custom_call.1} parent=1 // pred_check_branch
      %27 = sbr.rel (0) target = $region5
    $region4: #{tpu_custom_call.1} parent=1 // pred_region
      %29 = vsyncadd [#allocation3], 0
      %s31 = sshll.u32 %s0, 4
      %s32 = int_to_ptr.hbm [resolvable:$true] %s31
      %s33 = sshll.u32 [#allocation2], 4
      %s34 = int_to_ptr.vmem [resolvable:$true] %s33
      %36 = dma.hbm_to_vmem [thread:$0]  %s32, 256, %s34, [#allocation3]
    $region5: #{tpu_custom_call.1} parent=1 // pred_fallthru
      _
    // Predicated region
    $region6: #{tpu_custom_call.1} parent=1 // pred_check
      _
    $region7: #{tpu_custom_call.1} parent=1 // pred_check_branch
      %38 = sbr.rel (0) target = $region9
    $region8: #{tpu_custom_call.1} parent=1 // pred_region
      %40 = vsyncadd [#allocation6], 0
      %s41 = sshll.u32 %s1, 4
      %s42 = int_to_ptr.hbm [resolvable:$true] %s41
      %s43 = sshll.u32 [#allocation5], 4
      %s44 = int_to_ptr.vmem [resolvable:$true] %s43
      %49 = dma.hbm_to_vmem [thread:$0]  %s42, 14336, %s44, [#allocation6], 448, 448, 28
    $region9: #{tpu_custom_call.1} parent=1 // pred_fallthru
      _
    // Predicated region
    $region10: #{tpu_custom_call.1} parent=1 // pred_check
      _
    $region11: #{tpu_custom_call.1} parent=1 // pred_check_branch
      %51 = sbr.rel (0) target = $region13
    $region12: #{tpu_custom_call.1} parent=1 // pred_region
      %53 = vsyncadd [#allocation6], 0
      %s55 = sshll.u32 %s2, 4
      %s56 = int_to_ptr.hbm [resolvable:$true] %s55
      %s57 = sshll.u32 [#allocation7], 4
      %s58 = int_to_ptr.vmem [resolvable:$true] %s57
      %60 = dma.hbm_to_vmem [thread:$0]  %s56, 112, %s58, [#allocation6]
    $region13: #{tpu_custom_call.1} parent=1 // pred_fallthru
      _
    // Predicated region
    $region14: #{tpu_custom_call.1} parent=1 // pred_check
      _
    $region15: #{tpu_custom_call.1} parent=1 // pred_check_branch
      %62 = sbr.rel (0) target = $region17
    $region16: #{tpu_custom_call.1} parent=1 // pred_region
      %64 = vsyncadd [#allocation9], 0
      %s65 = sshll.u32 %s3, 4
      %s66 = int_to_ptr.hbm [resolvable:$true] %s65
      %s67 = sshll.u32 [#allocation8], 4
      %s68 = int_to_ptr.vmem [resolvable:$true] %s67
      %73 = dma.hbm_to_vmem [thread:$0]  %s66, 35840, %s68, [#allocation9], 320, 320, 20
    $region17: #{tpu_custom_call.1} parent=1 // pred_fallthru
      _
    // Predicated region
    $region18: #{tpu_custom_call.1} parent=1 // pred_check
      _
    $region19: #{tpu_custom_call.1} parent=1 // pred_check_branch
      %75 = sbr.rel (0) target = $region21
    $region20: #{tpu_custom_call.1} parent=1 // pred_region
      %77 = vsyncadd [#allocation9], 0
      %s79 = sshll.u32 %s4, 4
      %s80 = int_to_ptr.hbm [resolvable:$true] %s79
      %s81 = sshll.u32 [#allocation10], 4
      %s82 = int_to_ptr.vmem [resolvable:$true] %s81
      %84 = dma.hbm_to_vmem [thread:$0]  %s80, 80, %s82, [#allocation9]
    $region21: #{tpu_custom_call.1} parent=1 // pred_fallthru
      _
    // Predicated region
    $region22: #{tpu_custom_call.1} parent=1 // pred_check
      _
    $region23: #{tpu_custom_call.1} parent=1 // pred_check_branch
      %86 = sbr.rel (0) target = $region25
    $region24: #{tpu_custom_call.1} parent=1 // pred_region
      %88 = vsyncadd [#allocation12], 0
      %s89 = sshll.u32 %s5, 4
      %s90 = int_to_ptr.hbm [resolvable:$true] %s89
      %s91 = sshll.u32 [#allocation11], 4
      %s92 = int_to_ptr.vmem [resolvable:$true] %s91
      %97 = dma.hbm_to_vmem [thread:$0]  %s90, 15360, %s92, [#allocation12], 192, 192, 12
    $region25: #{tpu_custom_call.1} parent=1 // pred_fallthru
      _
    // Predicated region
    $region26: #{tpu_custom_call.1} parent=1 // pred_check
      _
    $region27: #{tpu_custom_call.1} parent=1 // pred_check_branch
      %99 = sbr.rel (0) target = $region29
    $region28: #{tpu_custom_call.1} parent=1 // pred_region
      %101 = vsyncadd [#allocation12], 0
      %s103 = sshll.u32 %s6, 4
      %s104 = int_to_ptr.hbm [resolvable:$true] %s103
      %s105 = sshll.u32 [#allocation13], 4
      %s106 = int_to_ptr.vmem [resolvable:$true] %s105
      %108 = dma.hbm_to_vmem [thread:$0]  %s104, 48, %s106, [#allocation12]
    $region29: #{tpu_custom_call.1} parent=1 // pred_fallthru
      _
    // Predicated region
    $region30: #{tpu_custom_call.1} parent=1 // pred_check
      _
    $region31: #{tpu_custom_call.1} parent=1 // pred_check_branch
      %110 = sbr.rel (0) target = $region33
    $region32: #{tpu_custom_call.1} parent=1 // pred_region
      %112 = vsyncadd [#allocation15], 0
      %s113 = sshll.u32 %s7, 4
      %s114 = int_to_ptr.hbm [resolvable:$true] %s113
      %s115 = sshll.u32 [#allocation14], 4
      %s116 = int_to_ptr.vmem [resolvable:$true] %s115
      %121 = dma.hbm_to_vmem [thread:$0]  %s114, 6144, %s116, [#allocation15], 128, 128, 8
    $region33: #{tpu_custom_call.1} parent=1 // pred_fallthru
      _
    // Predicated region
    $region34: #{tpu_custom_call.1} parent=1 // pred_check
      _
    $region35: #{tpu_custom_call.1} parent=1 // pred_check_branch
      %123 = sbr.rel (0) target = $region37
    $region36: #{tpu_custom_call.1} parent=1 // pred_region
      %125 = vsyncadd [#allocation15], 0
      %s127 = sshll.u32 %s8, 4
      %s128 = int_to_ptr.hbm [resolvable:$true] %s127
      %s129 = sshll.u32 [#allocation16], 4
      %s130 = int_to_ptr.vmem [resolvable:$true] %s129
      %132 = dma.hbm_to_vmem [thread:$0]  %s128, 32, %s130, [#allocation15]
    $region37: #{tpu_custom_call.1} parent=1 // pred_fallthru
      _
    // Predicated region
    $region38: #{tpu_custom_call.1} parent=1 // pred_check
      _
    $region39: #{tpu_custom_call.1} parent=1 // pred_check_branch
      %134 = sbr.rel (0) target = $region41
    $region40: #{tpu_custom_call.1} parent=1 // pred_region
      %136 = vsyncadd [#allocation18], 0
      %s137 = sshll.u32 %s9, 4
      %s138 = int_to_ptr.hbm [resolvable:$true] %s137
      %s139 = sshll.u32 [#allocation17], 4
      %s140 = int_to_ptr.vmem [resolvable:$true] %s139
      %145 = dma.hbm_to_vmem [thread:$0]  %s138, 2048, %s140, [#allocation18], 64, 64, 4
    $region41: #{tpu_custom_call.1} parent=1 // pred_fallthru
      _
    // Predicated region
    $region42: #{tpu_custom_call.1} parent=1 // pred_check
      _
    $region43: #{tpu_custom_call.1} parent=1 // pred_check_branch
      %147 = sbr.rel (0) target = $region45
    $region44: #{tpu_custom_call.1} parent=1 // pred_region
      %149 = vsyncadd [#allocation18], 0
      %s151 = sshll.u32 %s10, 4
      %s152 = int_to_ptr.hbm [resolvable:$true] %s151
      %s153 = sshll.u32 [#allocation19], 4
      %s154 = int_to_ptr.vmem [resolvable:$true] %s153
      %156 = dma.hbm_to_vmem [thread:$0]  %s152, 16, %s154, [#allocation18]
    $region45: #{tpu_custom_call.1} parent=1 // pred_fallthru
      _
    // Predicated region
    $region46: #{tpu_custom_call.1} parent=1 // pred_check
      _
    $region47: #{tpu_custom_call.1} parent=1 // pred_check_branch
      %158 = sbr.rel (0) target = $region49
    $region48: #{tpu_custom_call.1} parent=1 // pred_region
      %160 = vsyncadd [#allocation21], 0
      %s161 = sshll.u32 %s11, 4
      %s162 = int_to_ptr.hbm [resolvable:$true] %s161
      %s163 = sshll.u32 [#allocation20], 4
      %s164 = int_to_ptr.vmem [resolvable:$true] %s163
      %169 = dma.hbm_to_vmem [thread:$0]  %s162, 1024, %s164, [#allocation21], 64, 64, 4
    $region49: #{tpu_custom_call.1} parent=1 // pred_fallthru
      _
    // Predicated region
    $region50: #{tpu_custom_call.1} parent=1 // pred_check
      _
    $region51: #{tpu_custom_call.1} parent=1 // pred_check_branch
      %171 = sbr.rel (0) target = $region53
    $region52: #{tpu_custom_call.1} parent=1 // pred_region
      %173 = vsyncadd [#allocation21], 0
      %s175 = sshll.u32 %s12, 4
      %s176 = int_to_ptr.hbm [resolvable:$true] %s175
      %s177 = sshll.u32 [#allocation22], 4
      %s178 = int_to_ptr.vmem [resolvable:$true] %s177
      %180 = dma.hbm_to_vmem [thread:$0]  %s176, 16, %s178, [#allocation21]
    $region53: #{tpu_custom_call.1} parent=1 // pred_fallthru
      _
    // Predicated region
    $region54: #{tpu_custom_call.1} parent=1 // pred_check
      _
    $region55: #{tpu_custom_call.1} parent=1 // pred_check_branch
      %182 = sbr.rel (0) target = $region57
    $region56: #{tpu_custom_call.1} parent=1 // pred_region
      %184 = dma.done [#allocation3], 256
    $region57: #{tpu_custom_call.1} parent=1 // pred_fallthru
      _
    // Predicated region
    $region58: #{tpu_custom_call.1} parent=1 // pred_check
      _
    $region59: #{tpu_custom_call.1} parent=1 // pred_check_branch
      %186 = sbr.rel (0) target = $region61
    $region60: #{tpu_custom_call.1} parent=1 // pred_region
      %188 = dma.done [#allocation6], 14336
    $region61: #{tpu_custom_call.1} parent=1 // pred_fallthru
      _
    // Predicated region
    $region62: #{tpu_custom_call.1} parent=1 // pred_check
      _
    $region63: #{tpu_custom_call.1} parent=1 // pred_check_branch
      %190 = sbr.rel (0) target = $region65
    $region64: #{tpu_custom_call.1} parent=1 // pred_region
      %192 = dma.done [#allocation6], 112
    $region65: #{tpu_custom_call.1} parent=1 // pred_fallthru
      _
    // Predicated region
    $region66: #{tpu_custom_call.1} parent=1 // pred_check
      _
    $region67: #{tpu_custom_call.1} parent=1 // pred_check_branch
      %194 = sbr.rel (0) target = $region69
    $region68: #{tpu_custom_call.1} parent=1 // pred_region
      %196 = dma.done [#allocation9], 35840
    $region69: #{tpu_custom_call.1} parent=1 // pred_fallthru
      _
    // Predicated region
    $region70: #{tpu_custom_call.1} parent=1 // pred_check
      _
    $region71: #{tpu_custom_call.1} parent=1 // pred_check_branch
      %198 = sbr.rel (0) target = $region73
    $region72: #{tpu_custom_call.1} parent=1 // pred_region
      %200 = dma.done [#allocation9], 80
    $region73: #{tpu_custom_call.1} parent=1 // pred_fallthru
      _
    // Predicated region
    $region74: #{tpu_custom_call.1} parent=1 // pred_check
      _
    $region75: #{tpu_custom_call.1} parent=1 // pred_check_branch
      %202 = sbr.rel (0) target = $region77
    $region76: #{tpu_custom_call.1} parent=1 // pred_region
      %204 = dma.done [#allocation12], 15360
    $region77: #{tpu_custom_call.1} parent=1 // pred_fallthru
      _
    // Predicated region
    $region78: #{tpu_custom_call.1} parent=1 // pred_check
      _
    $region79: #{tpu_custom_call.1} parent=1 // pred_check_branch
      %206 = sbr.rel (0) target = $region81
    $region80: #{tpu_custom_call.1} parent=1 // pred_region
      %208 = dma.done [#allocation12], 48
    $region81: #{tpu_custom_call.1} parent=1 // pred_fallthru
      _
    // Predicated region
    $region82: #{tpu_custom_call.1} parent=1 // pred_check
      _
    $region83: #{tpu_custom_call.1} parent=1 // pred_check_branch
      %210 = sbr.rel (0) target = $region85
    $region84: #{tpu_custom_call.1} parent=1 // pred_region
      %212 = dma.done [#allocation15], 6144
    $region85: #{tpu_custom_call.1} parent=1 // pred_fallthru
      _
    // Predicated region
    $region86: #{tpu_custom_call.1} parent=1 // pred_check
      _
    $region87: #{tpu_custom_call.1} parent=1 // pred_check_branch
      %214 = sbr.rel (0) target = $region89
    $region88: #{tpu_custom_call.1} parent=1 // pred_region
      %216 = dma.done [#allocation15], 32
    $region89: #{tpu_custom_call.1} parent=1 // pred_fallthru
      _
    // Predicated region
    $region90: #{tpu_custom_call.1} parent=1 // pred_check
      _
    $region91: #{tpu_custom_call.1} parent=1 // pred_check_branch
      %218 = sbr.rel (0) target = $region93
    $region92: #{tpu_custom_call.1} parent=1 // pred_region
      %220 = dma.done [#allocation18], 2048
    $region93: #{tpu_custom_call.1} parent=1 // pred_fallthru
      _
    // Predicated region
    $region94: #{tpu_custom_call.1} parent=1 // pred_check
      _
    $region95: #{tpu_custom_call.1} parent=1 // pred_check_branch
      %222 = sbr.rel (0) target = $region97
    $region96: #{tpu_custom_call.1} parent=1 // pred_region
      %224 = dma.done [#allocation18], 16
    $region97: #{tpu_custom_call.1} parent=1 // pred_fallthru
      _
    // Predicated region
    $region98: #{tpu_custom_call.1} parent=1 // pred_check
      _
    $region99: #{tpu_custom_call.1} parent=1 // pred_check_branch
      %226 = sbr.rel (0) target = $region101
    $region100: #{tpu_custom_call.1} parent=1 // pred_region
      %228 = dma.done [#allocation21], 1024
    $region101: #{tpu_custom_call.1} parent=1 // pred_fallthru
      _
    // Predicated region
    $region102: #{tpu_custom_call.1} parent=1 // pred_check
      _
    $region103: #{tpu_custom_call.1} parent=1 // pred_check_branch
      %230 = sbr.rel (0) target = $region105
    $region104: #{tpu_custom_call.1} parent=1 // pred_region
      %232 = dma.done [#allocation21], 16
    $region105: #{tpu_custom_call.1} parent=1 // pred_fallthru
      _
    %v233 = vld [vmem:[#allocation2] sm:$0xff]
    %v234 = vld [vmem:[#allocation2 + $0x8] sm:$0xff]
    %v235 = vpack.c.bf16 %v233, %v233
    %v236 = vpack.c.bf16 %v234, %v234
    %v237 = vld [vmem:[#allocation5] sm:$0xff]
    %v238 = vld [vmem:[#allocation5 + $0x8] sm:$0xff]
    %v239 = vld [vmem:[#allocation5 + $0x10] sm:$0xff]
    %v240 = vld [vmem:[#allocation5 + $0x18] sm:$0xf]
    %v241 = vld [vmem:[#allocation5 + $0x1c] sm:$0xff]
    %v242 = vld [vmem:[#allocation5 + $0x24] sm:$0xff]
    %v243 = vld [vmem:[#allocation5 + $0x2c] sm:$0xff]
    %v244 = vld [vmem:[#allocation5 + $0x34] sm:$0xf]
    %v245 = vld [vmem:[#allocation5 + $0x38] sm:$0xff]
    %v246 = vld [vmem:[#allocation5 + $0x40] sm:$0xff]
    %v247 = vld [vmem:[#allocation5 + $0x48] sm:$0xff]
    %v248 = vld [vmem:[#allocation5 + $0x50] sm:$0xf]
    %v249 = vld [vmem:[#allocation5 + $0x54] sm:$0xff]
    %v250 = vld [vmem:[#allocation5 + $0x5c] sm:$0xff]
    %v251 = vld [vmem:[#allocation5 + $0x64] sm:$0xff]
    %v252 = vld [vmem:[#allocation5 + $0x6c] sm:$0xf]
    %v253 = vld [vmem:[#allocation5 + $0x70] sm:$0xff]
    %v254 = vld [vmem:[#allocation5 + $0x78] sm:$0xff]
    %v255 = vld [vmem:[#allocation5 + $0x80] sm:$0xff]
    %v256 = vld [vmem:[#allocation5 + $0x88] sm:$0xf]
    %v257 = vld [vmem:[#allocation5 + $0x8c] sm:$0xff]
    %v258 = vld [vmem:[#allocation5 + $0x94] sm:$0xff]
    %v259 = vld [vmem:[#allocation5 + $0x9c] sm:$0xff]
    %v260 = vld [vmem:[#allocation5 + $0xa4] sm:$0xf]
    %v261 = vld [vmem:[#allocation5 + $0xa8] sm:$0xff]
    %v262 = vld [vmem:[#allocation5 + $0xb0] sm:$0xff]
    %v263 = vld [vmem:[#allocation5 + $0xb8] sm:$0xff]
    %v264 = vld [vmem:[#allocation5 + $0xc0] sm:$0xf]
    %v265 = vld [vmem:[#allocation5 + $0xc4] sm:$0xff]
    %v266 = vld [vmem:[#allocation5 + $0xcc] sm:$0xff]
    %v267 = vld [vmem:[#allocation5 + $0xd4] sm:$0xff]
    %v268 = vld [vmem:[#allocation5 + $0xdc] sm:$0xf]
    %v269 = vld [vmem:[#allocation5 + $0xe0] sm:$0xff]
    %v270 = vld [vmem:[#allocation5 + $0xe8] sm:$0xff]
    %v271 = vld [vmem:[#allocation5 + $0xf0] sm:$0xff]
    %v272 = vld [vmem:[#allocation5 + $0xf8] sm:$0xf]
    %v273 = vld [vmem:[#allocation5 + $0xfc] sm:$0xff]
    %v274 = vld [vmem:[#allocation5 + $0x104] sm:$0xff]
    %v275 = vld [vmem:[#allocation5 + $0x10c] sm:$0xff]
    %v276 = vld [vmem:[#allocation5 + $0x114] sm:$0xf]
    %v277 = vld [vmem:[#allocation5 + $0x118] sm:$0xff]
    %v278 = vld [vmem:[#allocation5 + $0x120] sm:$0xff]
    %v279 = vld [vmem:[#allocation5 + $0x128] sm:$0xff]
    %v280 = vld [vmem:[#allocation5 + $0x130] sm:$0xf]
    %v281 = vld [vmem:[#allocation5 + $0x134] sm:$0xff]
    %v282 = vld [vmem:[#allocation5 + $0x13c] sm:$0xff]
    %v283 = vld [vmem:[#allocation5 + $0x144] sm:$0xff]
    %v284 = vld [vmem:[#allocation5 + $0x14c] sm:$0xf]
    %v285 = vld [vmem:[#allocation5 + $0x150] sm:$0xff]
    %v286 = vld [vmem:[#allocation5 + $0x158] sm:$0xff]
    %v287 = vld [vmem:[#allocation5 + $0x160] sm:$0xff]
    %v288 = vld [vmem:[#allocation5 + $0x168] sm:$0xf]
    %v289 = vld [vmem:[#allocation5 + $0x16c] sm:$0xff]
    %v290 = vld [vmem:[#allocation5 + $0x174] sm:$0xff]
    %v291 = vld [vmem:[#allocation5 + $0x17c] sm:$0xff]
    %v292 = vld [vmem:[#allocation5 + $0x184] sm:$0xf]
    %v293 = vld [vmem:[#allocation5 + $0x188] sm:$0xff]
    %v294 = vld [vmem:[#allocation5 + $0x190] sm:$0xff]
    %v295 = vld [vmem:[#allocation5 + $0x198] sm:$0xff]
    %v296 = vld [vmem:[#allocation5 + $0x1a0] sm:$0xf]
    %v297 = vld [vmem:[#allocation5 + $0x1a4] sm:$0xff]
    %v298 = vld [vmem:[#allocation5 + $0x1ac] sm:$0xff]
    %v299 = vld [vmem:[#allocation5 + $0x1b4] sm:$0xff]
    %v300 = vld [vmem:[#allocation5 + $0x1bc] sm:$0xf]
    %v301 = vld [vmem:[#allocation5 + $0x1c0] sm:$0xff]
    %v302 = vld [vmem:[#allocation5 + $0x1c8] sm:$0xff]
    %v303 = vld [vmem:[#allocation5 + $0x1d0] sm:$0xff]
    %v304 = vld [vmem:[#allocation5 + $0x1d8] sm:$0xf]
    %v305 = vld [vmem:[#allocation5 + $0x1dc] sm:$0xff]
    %v306 = vld [vmem:[#allocation5 + $0x1e4] sm:$0xff]
    %v307 = vld [vmem:[#allocation5 + $0x1ec] sm:$0xff]
    %v308 = vld [vmem:[#allocation5 + $0x1f4] sm:$0xf]
    %v309 = vld [vmem:[#allocation5 + $0x1f8] sm:$0xff]
    %v310 = vld [vmem:[#allocation5 + $0x200] sm:$0xff]
    %v311 = vld [vmem:[#allocation5 + $0x208] sm:$0xff]
    %v312 = vld [vmem:[#allocation5 + $0x210] sm:$0xf]
    %v313 = vld [vmem:[#allocation5 + $0x214] sm:$0xff]
    %v314 = vld [vmem:[#allocation5 + $0x21c] sm:$0xff]
    %v315 = vld [vmem:[#allocation5 + $0x224] sm:$0xff]
    %v316 = vld [vmem:[#allocation5 + $0x22c] sm:$0xf]
    %v317 = vld [vmem:[#allocation5 + $0x230] sm:$0xff]
    %v318 = vld [vmem:[#allocation5 + $0x238] sm:$0xff]
    %v319 = vld [vmem:[#allocation5 + $0x240] sm:$0xff]
    %v320 = vld [vmem:[#allocation5 + $0x248] sm:$0xf]
    %v321 = vld [vmem:[#allocation5 + $0x24c] sm:$0xff]
    %v322 = vld [vmem:[#allocation5 + $0x254] sm:$0xff]
    %v323 = vld [vmem:[#allocation5 + $0x25c] sm:$0xff]
    %v324 = vld [vmem:[#allocation5 + $0x264] sm:$0xf]
    %v325 = vld [vmem:[#allocation5 + $0x268] sm:$0xff]
    %v326 = vld [vmem:[#allocation5 + $0x270] sm:$0xff]
    %v327 = vld [vmem:[#allocation5 + $0x278] sm:$0xff]
    %v328 = vld [vmem:[#allocation5 + $0x280] sm:$0xf]
    %v329 = vld [vmem:[#allocation5 + $0x284] sm:$0xff]
    %v330 = vld [vmem:[#allocation5 + $0x28c] sm:$0xff]
    %v331 = vld [vmem:[#allocation5 + $0x294] sm:$0xff]
    %v332 = vld [vmem:[#allocation5 + $0x29c] sm:$0xf]
    %v333 = vld [vmem:[#allocation5 + $0x2a0] sm:$0xff]
    %v334 = vld [vmem:[#allocation5 + $0x2a8] sm:$0xff]
    %v335 = vld [vmem:[#allocation5 + $0x2b0] sm:$0xff]
    %v336 = vld [vmem:[#allocation5 + $0x2b8] sm:$0xf]
    %v337 = vld [vmem:[#allocation5 + $0x2bc] sm:$0xff]
    %v338 = vld [vmem:[#allocation5 + $0x2c4] sm:$0xff]
    %v339 = vld [vmem:[#allocation5 + $0x2cc] sm:$0xff]
    %v340 = vld [vmem:[#allocation5 + $0x2d4] sm:$0xf]
    %v341 = vld [vmem:[#allocation5 + $0x2d8] sm:$0xff]
    %v342 = vld [vmem:[#allocation5 + $0x2e0] sm:$0xff]
    %v343 = vld [vmem:[#allocation5 + $0x2e8] sm:$0xff]
    %v344 = vld [vmem:[#allocation5 + $0x2f0] sm:$0xf]
    %v345 = vld [vmem:[#allocation5 + $0x2f4] sm:$0xff]
    %v346 = vld [vmem:[#allocation5 + $0x2fc] sm:$0xff]
    %v347 = vld [vmem:[#allocation5 + $0x304] sm:$0xff]
    %v348 = vld [vmem:[#allocation5 + $0x30c] sm:$0xf]
    %v349 = vld [vmem:[#allocation5 + $0x310] sm:$0xff]
    %v350 = vld [vmem:[#allocation5 + $0x318] sm:$0xff]
    %v351 = vld [vmem:[#allocation5 + $0x320] sm:$0xff]
    %v352 = vld [vmem:[#allocation5 + $0x328] sm:$0xf]
    %v353 = vld [vmem:[#allocation5 + $0x32c] sm:$0xff]
    %v354 = vld [vmem:[#allocation5 + $0x334] sm:$0xff]
    %v355 = vld [vmem:[#allocation5 + $0x33c] sm:$0xff]
    %v356 = vld [vmem:[#allocation5 + $0x344] sm:$0xf]
    %v357 = vld [vmem:[#allocation5 + $0x348] sm:$0xff]
    %v358 = vld [vmem:[#allocation5 + $0x350] sm:$0xff]
    %v359 = vld [vmem:[#allocation5 + $0x358] sm:$0xff]
    %v360 = vld [vmem:[#allocation5 + $0x360] sm:$0xf]
    %v361 = vld [vmem:[#allocation5 + $0x364] sm:$0xff]
    %v362 = vld [vmem:[#allocation5 + $0x36c] sm:$0xff]
    %v363 = vld [vmem:[#allocation5 + $0x374] sm:$0xff]
    %v364 = vld [vmem:[#allocation5 + $0x37c] sm:$0xf]
    %v365 = vld [vmem:[#allocation7] sm:$0xff]
    %v367 = vperm.slane %v365, 0
    %v368 = vperm.slane %v365, 1
    %v369 = vperm.slane %v365, 2
    %v370 = vperm.slane %v365, 3
    %v371 = vperm.slane %v365, 4
    %v372 = vperm.slane %v365, 5
    %v373 = vperm.slane %v365, 6
    %v509 = vunpack.c.l.b16 %v237
    %v510 = vunpack.c.h.b16 %v237
    %v511 = vunpack.c.l.b16 %v238
    %v512 = vunpack.c.h.b16 %v238
    %v513 = vunpack.c.l.b16 %v239
    %v514 = vunpack.c.h.b16 %v239
    %v515 = vunpack.c.l.b16 %v240
    %v516 = vunpack.c.l.b16 %v241
    %v517 = vunpack.c.h.b16 %v241
    %v518 = vunpack.c.l.b16 %v242
    %v519 = vunpack.c.h.b16 %v242
    %v520 = vunpack.c.l.b16 %v243
    %v521 = vunpack.c.h.b16 %v243
    %v522 = vunpack.c.l.b16 %v244
    %v523 = vunpack.c.l.b16 %v245
    %v524 = vunpack.c.h.b16 %v245
    %v525 = vunpack.c.l.b16 %v246
    %v526 = vunpack.c.h.b16 %v246
    %v527 = vunpack.c.l.b16 %v247
    %v528 = vunpack.c.h.b16 %v247
    %v529 = vunpack.c.l.b16 %v248
    %v530 = vunpack.c.l.b16 %v249
    %v531 = vunpack.c.h.b16 %v249
    %v532 = vunpack.c.l.b16 %v250
    %v533 = vunpack.c.h.b16 %v250
    %v534 = vunpack.c.l.b16 %v251
    %v535 = vunpack.c.h.b16 %v251
    %v536 = vunpack.c.l.b16 %v252
    %v537 = vunpack.c.l.b16 %v253
    %v538 = vunpack.c.h.b16 %v253
    %v539 = vunpack.c.l.b16 %v254
    %v540 = vunpack.c.h.b16 %v254
    %v541 = vunpack.c.l.b16 %v255
    %v542 = vunpack.c.h.b16 %v255
    %v543 = vunpack.c.l.b16 %v256
    %v544 = vunpack.c.l.b16 %v257
    %v545 = vunpack.c.h.b16 %v257
    %v546 = vunpack.c.l.b16 %v258
    %v547 = vunpack.c.h.b16 %v258
    %v548 = vunpack.c.l.b16 %v259
    %v549 = vunpack.c.h.b16 %v259
    %v550 = vunpack.c.l.b16 %v260
    %v551 = vunpack.c.l.b16 %v261
    %v552 = vunpack.c.h.b16 %v261
    %v553 = vunpack.c.l.b16 %v262
    %v554 = vunpack.c.h.b16 %v262
    %v555 = vunpack.c.l.b16 %v263
    %v556 = vunpack.c.h.b16 %v263
    %v557 = vunpack.c.l.b16 %v264
    %v558 = vunpack.c.l.b16 %v265
    %v559 = vunpack.c.h.b16 %v265
    %v560 = vunpack.c.l.b16 %v266
    %v561 = vunpack.c.h.b16 %v266
    %v562 = vunpack.c.l.b16 %v267
    %v563 = vunpack.c.h.b16 %v267
    %v564 = vunpack.c.l.b16 %v268
    %v565 = vunpack.c.l.b16 %v269
    %v566 = vunpack.c.h.b16 %v269
    %v567 = vunpack.c.l.b16 %v270
    %v568 = vunpack.c.h.b16 %v270
    %v569 = vunpack.c.l.b16 %v271
    %v570 = vunpack.c.h.b16 %v271
    %v571 = vunpack.c.l.b16 %v272
    %v572 = vunpack.c.l.b16 %v273
    %v573 = vunpack.c.h.b16 %v273
    %v574 = vunpack.c.l.b16 %v274
    %v575 = vunpack.c.h.b16 %v274
    %v576 = vunpack.c.l.b16 %v275
    %v577 = vunpack.c.h.b16 %v275
    %v578 = vunpack.c.l.b16 %v276
    %v579 = vunpack.c.l.b16 %v277
    %v580 = vunpack.c.h.b16 %v277
    %v581 = vunpack.c.l.b16 %v278
    %v582 = vunpack.c.h.b16 %v278
    %v583 = vunpack.c.l.b16 %v279
    %v584 = vunpack.c.h.b16 %v279
    %v585 = vunpack.c.l.b16 %v280
    %v586 = vunpack.c.l.b16 %v281
    %v587 = vunpack.c.h.b16 %v281
    %v588 = vunpack.c.l.b16 %v282
    %v589 = vunpack.c.h.b16 %v282
    %v590 = vunpack.c.l.b16 %v283
    %v591 = vunpack.c.h.b16 %v283
    %v592 = vunpack.c.l.b16 %v284
    %v593 = vunpack.c.l.b16 %v285
    %v594 = vunpack.c.h.b16 %v285
    %v595 = vunpack.c.l.b16 %v286
    %v596 = vunpack.c.h.b16 %v286
    %v597 = vunpack.c.l.b16 %v287
    %v598 = vunpack.c.h.b16 %v287
    %v599 = vunpack.c.l.b16 %v288
    %v600 = vunpack.c.l.b16 %v289
    %v601 = vunpack.c.h.b16 %v289
    %v602 = vunpack.c.l.b16 %v290
    %v603 = vunpack.c.h.b16 %v290
    %v604 = vunpack.c.l.b16 %v291
    %v605 = vunpack.c.h.b16 %v291
    %v606 = vunpack.c.l.b16 %v292
    %v607 = vunpack.c.l.b16 %v293
    %v608 = vunpack.c.h.b16 %v293
    %v609 = vunpack.c.l.b16 %v294
    %v610 = vunpack.c.h.b16 %v294
    %v611 = vunpack.c.l.b16 %v295
    %v612 = vunpack.c.h.b16 %v295
    %v613 = vunpack.c.l.b16 %v296
    %v614 = vunpack.c.l.b16 %v297
    %v615 = vunpack.c.h.b16 %v297
    %v616 = vunpack.c.l.b16 %v298
    %v617 = vunpack.c.h.b16 %v298
    %v618 = vunpack.c.l.b16 %v299
    %v619 = vunpack.c.h.b16 %v299
    %v620 = vunpack.c.l.b16 %v300
    %v621 = vunpack.c.l.b16 %v301
    %v622 = vunpack.c.h.b16 %v301
    %v623 = vunpack.c.l.b16 %v302
    %v624 = vunpack.c.h.b16 %v302
    %v625 = vunpack.c.l.b16 %v303
    %v626 = vunpack.c.h.b16 %v303
    %v627 = vunpack.c.l.b16 %v304
    %v628 = vunpack.c.l.b16 %v305
    %v629 = vunpack.c.h.b16 %v305
    %v630 = vunpack.c.l.b16 %v306
    %v631 = vunpack.c.h.b16 %v306
    %v632 = vunpack.c.l.b16 %v307
    %v633 = vunpack.c.h.b16 %v307
    %v634 = vunpack.c.l.b16 %v308
    %v635 = vunpack.c.l.b16 %v309
    %v636 = vunpack.c.h.b16 %v309
    %v637 = vunpack.c.l.b16 %v310
    %v638 = vunpack.c.h.b16 %v310
    %v639 = vunpack.c.l.b16 %v311
    %v640 = vunpack.c.h.b16 %v311
    %v641 = vunpack.c.l.b16 %v312
    %v642 = vunpack.c.l.b16 %v313
    %v643 = vunpack.c.h.b16 %v313
    %v644 = vunpack.c.l.b16 %v314
    %v645 = vunpack.c.h.b16 %v314
    %v646 = vunpack.c.l.b16 %v315
    %v647 = vunpack.c.h.b16 %v315
    %v648 = vunpack.c.l.b16 %v316
    %v649 = vunpack.c.l.b16 %v317
    %v650 = vunpack.c.h.b16 %v317
    %v651 = vunpack.c.l.b16 %v318
    %v652 = vunpack.c.h.b16 %v318
    %v653 = vunpack.c.l.b16 %v319
    %v654 = vunpack.c.h.b16 %v319
    %v655 = vunpack.c.l.b16 %v320
    %v656 = vunpack.c.l.b16 %v321
    %v657 = vunpack.c.h.b16 %v321
    %v658 = vunpack.c.l.b16 %v322
    %v659 = vunpack.c.h.b16 %v322
    %v660 = vunpack.c.l.b16 %v323
    %v661 = vunpack.c.h.b16 %v323
    %v662 = vunpack.c.l.b16 %v324
    %v663 = vunpack.c.l.b16 %v325
    %v664 = vunpack.c.h.b16 %v325
    %v665 = vunpack.c.l.b16 %v326
    %v666 = vunpack.c.h.b16 %v326
    %v667 = vunpack.c.l.b16 %v327
    %v668 = vunpack.c.h.b16 %v327
    %v669 = vunpack.c.l.b16 %v328
    %v670 = vunpack.c.l.b16 %v329
    %v671 = vunpack.c.h.b16 %v329
    %v672 = vunpack.c.l.b16 %v330
    %v673 = vunpack.c.h.b16 %v330
    %v674 = vunpack.c.l.b16 %v331
    %v675 = vunpack.c.h.b16 %v331
    %v676 = vunpack.c.l.b16 %v332
    %v677 = vunpack.c.l.b16 %v333
    %v678 = vunpack.c.h.b16 %v333
    %v679 = vunpack.c.l.b16 %v334
    %v680 = vunpack.c.h.b16 %v334
    %v681 = vunpack.c.l.b16 %v335
    %v682 = vunpack.c.h.b16 %v335
    %v683 = vunpack.c.l.b16 %v336
    %v684 = vunpack.c.l.b16 %v337
    %v685 = vunpack.c.h.b16 %v337
    %v686 = vunpack.c.l.b16 %v338
    %v687 = vunpack.c.h.b16 %v338
    %v688 = vunpack.c.l.b16 %v339
    %v689 = vunpack.c.h.b16 %v339
    %v690 = vunpack.c.l.b16 %v340
    %v691 = vunpack.c.l.b16 %v341
    %v692 = vunpack.c.h.b16 %v341
    %v693 = vunpack.c.l.b16 %v342
    %v694 = vunpack.c.h.b16 %v342
    %v695 = vunpack.c.l.b16 %v343
    %v696 = vunpack.c.h.b16 %v343
    %v697 = vunpack.c.l.b16 %v344
    %v698 = vunpack.c.l.b16 %v345
    %v699 = vunpack.c.h.b16 %v345
    %v700 = vunpack.c.l.b16 %v346
    %v701 = vunpack.c.h.b16 %v346
    %v702 = vunpack.c.l.b16 %v347
    %v703 = vunpack.c.h.b16 %v347
    %v704 = vunpack.c.l.b16 %v348
    %v705 = vunpack.c.l.b16 %v349
    %v706 = vunpack.c.h.b16 %v349
    %v707 = vunpack.c.l.b16 %v350
    %v708 = vunpack.c.h.b16 %v350
    %v709 = vunpack.c.l.b16 %v351
    %v710 = vunpack.c.h.b16 %v351
    %v711 = vunpack.c.l.b16 %v352
    %v712 = vunpack.c.l.b16 %v353
    %v713 = vunpack.c.h.b16 %v353
    %v714 = vunpack.c.l.b16 %v354
    %v715 = vunpack.c.h.b16 %v354
    %v716 = vunpack.c.l.b16 %v355
    %v717 = vunpack.c.h.b16 %v355
    %v718 = vunpack.c.l.b16 %v356
    %v719 = vunpack.c.l.b16 %v357
    %v720 = vunpack.c.h.b16 %v357
    %v721 = vunpack.c.l.b16 %v358
    %v722 = vunpack.c.h.b16 %v358
    %v723 = vunpack.c.l.b16 %v359
    %v724 = vunpack.c.h.b16 %v359
    %v725 = vunpack.c.l.b16 %v360
    %v726 = vunpack.c.l.b16 %v361
    %v727 = vunpack.c.h.b16 %v361
    %v728 = vunpack.c.l.b16 %v362
    %v729 = vunpack.c.h.b16 %v362
    %v730 = vunpack.c.l.b16 %v363
    %v731 = vunpack.c.h.b16 %v363
    %v732 = vunpack.c.l.b16 %v364
    %v733 = vpack.c.b16 %v516, %v509
    %v734 = vpack.c.b16 %v517, %v510
    %v735 = vpack.c.b16 %v518, %v511
    %v736 = vpack.c.b16 %v519, %v512
    %v737 = vpack.c.b16 %v520, %v513
    %v738 = vpack.c.b16 %v521, %v514
    %v739 = vpack.c.b16 %v522, %v515
    %v740 = vpack.c.b16 %v530, %v523
    %v741 = vpack.c.b16 %v531, %v524
    %v742 = vpack.c.b16 %v532, %v525
    %v743 = vpack.c.b16 %v533, %v526
    %v744 = vpack.c.b16 %v534, %v527
    %v745 = vpack.c.b16 %v535, %v528
    %v746 = vpack.c.b16 %v536, %v529
    %v747 = vpack.c.b16 %v544, %v537
    %v748 = vpack.c.b16 %v545, %v538
    %v749 = vpack.c.b16 %v546, %v539
    %v750 = vpack.c.b16 %v547, %v540
    %v751 = vpack.c.b16 %v548, %v541
    %v752 = vpack.c.b16 %v549, %v542
    %v753 = vpack.c.b16 %v550, %v543
    %v754 = vpack.c.b16 %v558, %v551
    %v755 = vpack.c.b16 %v559, %v552
    %v756 = vpack.c.b16 %v560, %v553
    %v757 = vpack.c.b16 %v561, %v554
    %v758 = vpack.c.b16 %v562, %v555
    %v759 = vpack.c.b16 %v563, %v556
    %v760 = vpack.c.b16 %v564, %v557
    %v761 = vpack.c.b16 %v572, %v565
    %v762 = vpack.c.b16 %v573, %v566
    %v763 = vpack.c.b16 %v574, %v567
    %v764 = vpack.c.b16 %v575, %v568
    %v765 = vpack.c.b16 %v576, %v569
    %v766 = vpack.c.b16 %v577, %v570
    %v767 = vpack.c.b16 %v578, %v571
    %v768 = vpack.c.b16 %v586, %v579
    %v769 = vpack.c.b16 %v587, %v580
    %v770 = vpack.c.b16 %v588, %v581
    %v771 = vpack.c.b16 %v589, %v582
    %v772 = vpack.c.b16 %v590, %v583
    %v773 = vpack.c.b16 %v591, %v584
    %v774 = vpack.c.b16 %v592, %v585
    %v775 = vpack.c.b16 %v600, %v593
    %v776 = vpack.c.b16 %v601, %v594
    %v777 = vpack.c.b16 %v602, %v595
    %v778 = vpack.c.b16 %v603, %v596
    %v779 = vpack.c.b16 %v604, %v597
    %v780 = vpack.c.b16 %v605, %v598
    %v781 = vpack.c.b16 %v606, %v599
    %v782 = vpack.c.b16 %v614, %v607
    %v783 = vpack.c.b16 %v615, %v608
    %v784 = vpack.c.b16 %v616, %v609
    %v785 = vpack.c.b16 %v617, %v610
    %v786 = vpack.c.b16 %v618, %v611
    %v787 = vpack.c.b16 %v619, %v612
    %v788 = vpack.c.b16 %v620, %v613
    %v789 = vpack.c.b16 %v628, %v621
    %v790 = vpack.c.b16 %v629, %v622
    %v791 = vpack.c.b16 %v630, %v623
    %v792 = vpack.c.b16 %v631, %v624
    %v793 = vpack.c.b16 %v632, %v625
    %v794 = vpack.c.b16 %v633, %v626
    %v795 = vpack.c.b16 %v634, %v627
    %v796 = vpack.c.b16 %v642, %v635
    %v797 = vpack.c.b16 %v643, %v636
    %v798 = vpack.c.b16 %v644, %v637
    %v799 = vpack.c.b16 %v645, %v638
    %v800 = vpack.c.b16 %v646, %v639
    %v801 = vpack.c.b16 %v647, %v640
    %v802 = vpack.c.b16 %v648, %v641
    %v803 = vpack.c.b16 %v656, %v649
    %v804 = vpack.c.b16 %v657, %v650
    %v805 = vpack.c.b16 %v658, %v651
    %v806 = vpack.c.b16 %v659, %v652
    %v807 = vpack.c.b16 %v660, %v653
    %v808 = vpack.c.b16 %v661, %v654
    %v809 = vpack.c.b16 %v662, %v655
    %v810 = vpack.c.b16 %v670, %v663
    %v811 = vpack.c.b16 %v671, %v664
    %v812 = vpack.c.b16 %v672, %v665
    %v813 = vpack.c.b16 %v673, %v666
    %v814 = vpack.c.b16 %v674, %v667
    %v815 = vpack.c.b16 %v675, %v668
    %v816 = vpack.c.b16 %v676, %v669
    %v817 = vpack.c.b16 %v684, %v677
    %v818 = vpack.c.b16 %v685, %v678
    %v819 = vpack.c.b16 %v686, %v679
    %v820 = vpack.c.b16 %v687, %v680
    %v821 = vpack.c.b16 %v688, %v681
    %v822 = vpack.c.b16 %v689, %v682
    %v823 = vpack.c.b16 %v690, %v683
    %v824 = vpack.c.b16 %v698, %v691
    %v825 = vpack.c.b16 %v699, %v692
    %v826 = vpack.c.b16 %v700, %v693
    %v827 = vpack.c.b16 %v701, %v694
    %v828 = vpack.c.b16 %v702, %v695
    %v829 = vpack.c.b16 %v703, %v696
    %v830 = vpack.c.b16 %v704, %v697
    %v831 = vpack.c.b16 %v712, %v705
    %v832 = vpack.c.b16 %v713, %v706
    %v833 = vpack.c.b16 %v714, %v707
    %v834 = vpack.c.b16 %v715, %v708
    %v835 = vpack.c.b16 %v716, %v709
    %v836 = vpack.c.b16 %v717, %v710
    %v837 = vpack.c.b16 %v718, %v711
    %v838 = vpack.c.b16 %v726, %v719
    %v839 = vpack.c.b16 %v727, %v720
    %v840 = vpack.c.b16 %v728, %v721
    %v841 = vpack.c.b16 %v729, %v722
    %v842 = vpack.c.b16 %v730, %v723
    %v843 = vpack.c.b16 %v731, %v724
    %v844 = vpack.c.b16 %v732, %v725
    %957 = vmatpush.bf16.msra.mxu0 %v782
    %958 = vmatpush.bf16.msra.mxu0 %v775
    %959 = vmatpush.bf16.msra.mxu0 %v768
    %960 = vmatpush.bf16.msra.mxu0 %v761
    %961 = vmatpush.bf16.msra.mxu0 %v754
    %962 = vmatpush.bf16.msra.mxu0 %v747
    %963 = vmatpush.bf16.msra.mxu0 %v740
    %964 = vmatpush.bf16.msra.mxu0 %v733
    %965 = vmatmul.bf16.gmra.mxu0 %v235
    %v966 = vpop.f32.mrf.mxu0
    %v967 = vadd.f32 %v367, %v966
    %v968 = vpop.f32.mrf.mxu0
    %969 = vdwg.mxu0
    %970 = vmatpush.bf16.msra.mxu0 %v838
    %971 = vmatpush.bf16.msra.mxu0 %v831
    %972 = vmatpush.bf16.msra.mxu0 %v824
    %973 = vmatpush.bf16.msra.mxu0 %v817
    %974 = vmatpush.bf16.msra.mxu0 %v810
    %975 = vmatpush.bf16.msra.mxu0 %v803
    %976 = vmatpush.bf16.msra.mxu0 %v796
    %977 = vmatpush.bf16.msra.mxu0 %v789
    %978 = vmatmul.bf16.gmra.mxu0 %v236
    %v979 = vpop.f32.mrf.mxu0
    %v980 = vadd.f32 %v967, %v979
    %v981 = vpop.f32.mrf.mxu0
    %982 = vdwg.mxu0
    %983 = vmatpush.bf16.msra.mxu0 %v783
    %984 = vmatpush.bf16.msra.mxu0 %v776
    %985 = vmatpush.bf16.msra.mxu0 %v769
    %986 = vmatpush.bf16.msra.mxu0 %v762
    %987 = vmatpush.bf16.msra.mxu0 %v755
    %988 = vmatpush.bf16.msra.mxu0 %v748
    %989 = vmatpush.bf16.msra.mxu0 %v741
    %990 = vmatpush.bf16.msra.mxu0 %v734
    %991 = vmatmul.bf16.gmra.mxu0 %v235
    %v992 = vpop.f32.mrf.mxu0
    %v993 = vadd.f32 %v368, %v992
    %v994 = vpop.f32.mrf.mxu0
    %995 = vdwg.mxu0
    %996 = vmatpush.bf16.msra.mxu0 %v839
    %997 = vmatpush.bf16.msra.mxu0 %v832
    %998 = vmatpush.bf16.msra.mxu0 %v825
    %999 = vmatpush.bf16.msra.mxu0 %v818
    %1000 = vmatpush.bf16.msra.mxu0 %v811
    %1001 = vmatpush.bf16.msra.mxu0 %v804
    %1002 = vmatpush.bf16.msra.mxu0 %v797
    %1003 = vmatpush.bf16.msra.mxu0 %v790
    %1004 = vmatmul.bf16.gmra.mxu0 %v236
    %v1005 = vpop.f32.mrf.mxu0
    %v1006 = vadd.f32 %v993, %v1005
    %v1007 = vpop.f32.mrf.mxu0
    %1008 = vdwg.mxu0
    %1009 = vmatpush.bf16.msra.mxu0 %v784
    %1010 = vmatpush.bf16.msra.mxu0 %v777
    %1011 = vmatpush.bf16.msra.mxu0 %v770
    %1012 = vmatpush.bf16.msra.mxu0 %v763
    %1013 = vmatpush.bf16.msra.mxu0 %v756
    %1014 = vmatpush.bf16.msra.mxu0 %v749
    %1015 = vmatpush.bf16.msra.mxu0 %v742
    %1016 = vmatpush.bf16.msra.mxu0 %v735
    %1017 = vmatmul.bf16.gmra.mxu0 %v235
    %v1018 = vpop.f32.mrf.mxu0
    %v1019 = vadd.f32 %v369, %v1018
    %v1020 = vpop.f32.mrf.mxu0
    %1021 = vdwg.mxu0
    %1022 = vmatpush.bf16.msra.mxu0 %v840
    %1023 = vmatpush.bf16.msra.mxu0 %v833
    %1024 = vmatpush.bf16.msra.mxu0 %v826
    %1025 = vmatpush.bf16.msra.mxu0 %v819
    %1026 = vmatpush.bf16.msra.mxu0 %v812
    %1027 = vmatpush.bf16.msra.mxu0 %v805
    %1028 = vmatpush.bf16.msra.mxu0 %v798
    %1029 = vmatpush.bf16.msra.mxu0 %v791
    %1030 = vmatmul.bf16.gmra.mxu0 %v236
    %v1031 = vpop.f32.mrf.mxu0
    %v1032 = vadd.f32 %v1019, %v1031
    %v1033 = vpop.f32.mrf.mxu0
    %1034 = vdwg.mxu0
    %1035 = vmatpush.bf16.msra.mxu0 %v785
    %1036 = vmatpush.bf16.msra.mxu0 %v778
    %1037 = vmatpush.bf16.msra.mxu0 %v771
    %1038 = vmatpush.bf16.msra.mxu0 %v764
    %1039 = vmatpush.bf16.msra.mxu0 %v757
    %1040 = vmatpush.bf16.msra.mxu0 %v750
    %1041 = vmatpush.bf16.msra.mxu0 %v743
    %1042 = vmatpush.bf16.msra.mxu0 %v736
    %1043 = vmatmul.bf16.gmra.mxu0 %v235
    %v1044 = vpop.f32.mrf.mxu0
    %v1045 = vadd.f32 %v370, %v1044
    %v1046 = vpop.f32.mrf.mxu0
    %1047 = vdwg.mxu0
    %1048 = vmatpush.bf16.msra.mxu0 %v841
    %1049 = vmatpush.bf16.msra.mxu0 %v834
    %1050 = vmatpush.bf16.msra.mxu0 %v827
    %1051 = vmatpush.bf16.msra.mxu0 %v820
    %1052 = vmatpush.bf16.msra.mxu0 %v813
    %1053 = vmatpush.bf16.msra.mxu0 %v806
    %1054 = vmatpush.bf16.msra.mxu0 %v799
    %1055 = vmatpush.bf16.msra.mxu0 %v792
    %1056 = vmatmul.bf16.gmra.mxu0 %v236
    %v1057 = vpop.f32.mrf.mxu0
    %v1058 = vadd.f32 %v1045, %v1057
    %v1059 = vpop.f32.mrf.mxu0
    %1060 = vdwg.mxu0
    %1061 = vmatpush.bf16.msra.mxu0 %v786
    %1062 = vmatpush.bf16.msra.mxu0 %v779
    %1063 = vmatpush.bf16.msra.mxu0 %v772
    %1064 = vmatpush.bf16.msra.mxu0 %v765
    %1065 = vmatpush.bf16.msra.mxu0 %v758
    %1066 = vmatpush.bf16.msra.mxu0 %v751
    %1067 = vmatpush.bf16.msra.mxu0 %v744
    %1068 = vmatpush.bf16.msra.mxu0 %v737
    %1069 = vmatmul.bf16.gmra.mxu0 %v235
    %v1070 = vpop.f32.mrf.mxu0
    %v1071 = vadd.f32 %v371, %v1070
    %v1072 = vpop.f32.mrf.mxu0
    %1073 = vdwg.mxu0
    %1074 = vmatpush.bf16.msra.mxu0 %v842
    %1075 = vmatpush.bf16.msra.mxu0 %v835
    %1076 = vmatpush.bf16.msra.mxu0 %v828
    %1077 = vmatpush.bf16.msra.mxu0 %v821
    %1078 = vmatpush.bf16.msra.mxu0 %v814
    %1079 = vmatpush.bf16.msra.mxu0 %v807
    %1080 = vmatpush.bf16.msra.mxu0 %v800
    %1081 = vmatpush.bf16.msra.mxu0 %v793
    %1082 = vmatmul.bf16.gmra.mxu0 %v236
    %v1083 = vpop.f32.mrf.mxu0
    %v1084 = vadd.f32 %v1071, %v1083
    %v1085 = vpop.f32.mrf.mxu0
    %1086 = vdwg.mxu0
    %1087 = vmatpush.bf16.msra.mxu0 %v787
    %1088 = vmatpush.bf16.msra.mxu0 %v780
    %1089 = vmatpush.bf16.msra.mxu0 %v773
    %1090 = vmatpush.bf16.msra.mxu0 %v766
    %1091 = vmatpush.bf16.msra.mxu0 %v759
    %1092 = vmatpush.bf16.msra.mxu0 %v752
    %1093 = vmatpush.bf16.msra.mxu0 %v745
    %1094 = vmatpush.bf16.msra.mxu0 %v738
    %1095 = vmatmul.bf16.gmra.mxu0 %v235
    %v1096 = vpop.f32.mrf.mxu0
    %v1097 = vadd.f32 %v372, %v1096
    %v1098 = vpop.f32.mrf.mxu0
    %1099 = vdwg.mxu0
    %1100 = vmatpush.bf16.msra.mxu0 %v843
    %1101 = vmatpush.bf16.msra.mxu0 %v836
    %1102 = vmatpush.bf16.msra.mxu0 %v829
    %1103 = vmatpush.bf16.msra.mxu0 %v822
    %1104 = vmatpush.bf16.msra.mxu0 %v815
    %1105 = vmatpush.bf16.msra.mxu0 %v808
    %1106 = vmatpush.bf16.msra.mxu0 %v801
    %1107 = vmatpush.bf16.msra.mxu0 %v794
    %1108 = vmatmul.bf16.gmra.mxu0 %v236
    %v1109 = vpop.f32.mrf.mxu0
    %v1110 = vadd.f32 %v1097, %v1109
    %v1111 = vpop.f32.mrf.mxu0
    %1112 = vdwg.mxu0
    %1113 = vmatpush.bf16.msra.mxu0 %v788
    %1114 = vmatpush.bf16.msra.mxu0 %v781
    %1115 = vmatpush.bf16.msra.mxu0 %v774
    %1116 = vmatpush.bf16.msra.mxu0 %v767
    %1117 = vmatpush.bf16.msra.mxu0 %v760
    %1118 = vmatpush.bf16.msra.mxu0 %v753
    %1119 = vmatpush.bf16.msra.mxu0 %v746
    %1120 = vmatpush.bf16.msra.mxu0 %v739
    %1121 = vmatmul.bf16.gmra.mxu0 %v235
    %v1122 = vpop.f32.mrf.mxu0
    %v1123 = vadd.f32 %v373, %v1122
    %v1124 = vpop.f32.mrf.mxu0
    %1125 = vdwg.mxu0
    %1126 = vmatpush.bf16.msra.mxu0 %v844
    %1127 = vmatpush.bf16.msra.mxu0 %v837
    %1128 = vmatpush.bf16.msra.mxu0 %v830
    %1129 = vmatpush.bf16.msra.mxu0 %v823
    %1130 = vmatpush.bf16.msra.mxu0 %v816
    %1131 = vmatpush.bf16.msra.mxu0 %v809
    %1132 = vmatpush.bf16.msra.mxu0 %v802
    %1133 = vmatpush.bf16.msra.mxu0 %v795
    %1134 = vmatmul.bf16.gmra.mxu0 %v236
    %v1135 = vpop.f32.mrf.mxu0
    %v1136 = vadd.f32 %v1123, %v1135
    %v1137 = vpop.f32.mrf.mxu0
    %1138 = vdwg.mxu0
    %v1139 = vmax.f32 %v980, 0.0
    %v1140 = vmax.f32 %v1006, 0.0
    %v1141 = vmax.f32 %v1032, 0.0
    %v1142 = vmax.f32 %v1058, 0.0
    %v1143 = vmax.f32 %v1084, 0.0
    %v1144 = vmax.f32 %v1110, 0.0
    %v1145 = vmax.f32 %v1136, 0.0
    %v1146 = vpack.c.bf16 %v1139, %v1139
    %v1147 = vpack.c.bf16 %v1140, %v1140
    %v1148 = vpack.c.bf16 %v1141, %v1141
    %v1149 = vpack.c.bf16 %v1142, %v1142
    %v1150 = vpack.c.bf16 %v1143, %v1143
    %v1151 = vpack.c.bf16 %v1144, %v1144
    %v1152 = vpack.c.bf16 %v1145, %v1145
    %v1153 = vld [vmem:[#allocation8] sm:$0xff]
    %v1154 = vld [vmem:[#allocation8 + $0x8] sm:$0xff]
    %v1155 = vld [vmem:[#allocation8 + $0x10] sm:$0xf]
    %v1156 = vld [vmem:[#allocation8 + $0x14] sm:$0xff]
    %v1157 = vld [vmem:[#allocation8 + $0x1c] sm:$0xff]
    %v1158 = vld [vmem:[#allocation8 + $0x24] sm:$0xf]
    %v1159 = vld [vmem:[#allocation8 + $0x28] sm:$0xff]
    %v1160 = vld [vmem:[#allocation8 + $0x30] sm:$0xff]
    %v1161 = vld [vmem:[#allocation8 + $0x38] sm:$0xf]
    %v1162 = vld [vmem:[#allocation8 + $0x3c] sm:$0xff]
    %v1163 = vld [vmem:[#allocation8 + $0x44] sm:$0xff]
    %v1164 = vld [vmem:[#allocation8 + $0x4c] sm:$0xf]
    %v1165 = vld [vmem:[#allocation8 + $0x50] sm:$0xff]
    %v1166 = vld [vmem:[#allocation8 + $0x58] sm:$0xff]
    %v1167 = vld [vmem:[#allocation8 + $0x60] sm:$0xf]
    %v1168 = vld [vmem:[#allocation8 + $0x64] sm:$0xff]
    %v1169 = vld [vmem:[#allocation8 + $0x6c] sm:$0xff]
    %v1170 = vld [vmem:[#allocation8 + $0x74] sm:$0xf]
    %v1171 = vld [vmem:[#allocation8 + $0x78] sm:$0xff]
    %v1172 = vld [vmem:[#allocation8 + $0x80] sm:$0xff]
    %v1173 = vld [vmem:[#allocation8 + $0x88] sm:$0xf]
    %v1174 = vld [vmem:[#allocation8 + $0x8c] sm:$0xff]
    %v1175 = vld [vmem:[#allocation8 + $0x94] sm:$0xff]
    %v1176 = vld [vmem:[#allocation8 + $0x9c] sm:$0xf]
    %v1177 = vld [vmem:[#allocation8 + $0xa0] sm:$0xff]
    %v1178 = vld [vmem:[#allocation8 + $0xa8] sm:$0xff]
    %v1179 = vld [vmem:[#allocation8 + $0xb0] sm:$0xf]
    %v1180 = vld [vmem:[#allocation8 + $0xb4] sm:$0xff]
    %v1181 = vld [vmem:[#allocation8 + $0xbc] sm:$0xff]
    %v1182 = vld [vmem:[#allocation8 + $0xc4] sm:$0xf]
    %v1183 = vld [vmem:[#allocation8 + $0xc8] sm:$0xff]
    %v1184 = vld [vmem:[#allocation8 + $0xd0] sm:$0xff]
    %v1185 = vld [vmem:[#allocation8 + $0xd8] sm:$0xf]
    %v1186 = vld [vmem:[#allocation8 + $0xdc] sm:$0xff]
    %v1187 = vld [vmem:[#allocation8 + $0xe4] sm:$0xff]
    %v1188 = vld [vmem:[#allocation8 + $0xec] sm:$0xf]
    %v1189 = vld [vmem:[#allocation8 + $0xf0] sm:$0xff]
    %v1190 = vld [vmem:[#allocation8 + $0xf8] sm:$0xff]
    %v1191 = vld [vmem:[#allocation8 + $0x100] sm:$0xf]
    %v1192 = vld [vmem:[#allocation8 + $0x104] sm:$0xff]
    %v1193 = vld [vmem:[#allocation8 + $0x10c] sm:$0xff]
    %v1194 = vld [vmem:[#allocation8 + $0x114] sm:$0xf]
    %v1195 = vld [vmem:[#allocation8 + $0x118] sm:$0xff]
    %v1196 = vld [vmem:[#allocation8 + $0x120] sm:$0xff]
    %v1197 = vld [vmem:[#allocation8 + $0x128] sm:$0xf]
    %v1198 = vld [vmem:[#allocation8 + $0x12c] sm:$0xff]
    %v1199 = vld [vmem:[#allocation8 + $0x134] sm:$0xff]
    %v1200 = vld [vmem:[#allocation8 + $0x13c] sm:$0xf]
    %v1201 = vld [vmem:[#allocation8 + $0x140] sm:$0xff]
    %v1202 = vld [vmem:[#allocation8 + $0x148] sm:$0xff]
    %v1203 = vld [vmem:[#allocation8 + $0x150] sm:$0xf]
    %v1204 = vld [vmem:[#allocation8 + $0x154] sm:$0xff]
    %v1205 = vld [vmem:[#allocation8 + $0x15c] sm:$0xff]
    %v1206 = vld [vmem:[#allocation8 + $0x164] sm:$0xf]
    %v1207 = vld [vmem:[#allocation8 + $0x168] sm:$0xff]
    %v1208 = vld [vmem:[#allocation8 + $0x170] sm:$0xff]
    %v1209 = vld [vmem:[#allocation8 + $0x178] sm:$0xf]
    %v1210 = vld [vmem:[#allocation8 + $0x17c] sm:$0xff]
    %v1211 = vld [vmem:[#allocation8 + $0x184] sm:$0xff]
    %v1212 = vld [vmem:[#allocation8 + $0x18c] sm:$0xf]
    %v1213 = vld [vmem:[#allocation8 + $0x190] sm:$0xff]
    %v1214 = vld [vmem:[#allocation8 + $0x198] sm:$0xff]
    %v1215 = vld [vmem:[#allocation8 + $0x1a0] sm:$0xf]
    %v1216 = vld [vmem:[#allocation8 + $0x1a4] sm:$0xff]
    %v1217 = vld [vmem:[#allocation8 + $0x1ac] sm:$0xff]
    %v1218 = vld [vmem:[#allocation8 + $0x1b4] sm:$0xf]
    %v1219 = vld [vmem:[#allocation8 + $0x1b8] sm:$0xff]
    %v1220 = vld [vmem:[#allocation8 + $0x1c0] sm:$0xff]
    %v1221 = vld [vmem:[#allocation8 + $0x1c8] sm:$0xf]
    %v1222 = vld [vmem:[#allocation8 + $0x1cc] sm:$0xff]
    %v1223 = vld [vmem:[#allocation8 + $0x1d4] sm:$0xff]
    %v1224 = vld [vmem:[#allocation8 + $0x1dc] sm:$0xf]
    %v1225 = vld [vmem:[#allocation8 + $0x1e0] sm:$0xff]
    %v1226 = vld [vmem:[#allocation8 + $0x1e8] sm:$0xff]
    %v1227 = vld [vmem:[#allocation8 + $0x1f0] sm:$0xf]
    %v1228 = vld [vmem:[#allocation8 + $0x1f4] sm:$0xff]
    %v1229 = vld [vmem:[#allocation8 + $0x1fc] sm:$0xff]
    %v1230 = vld [vmem:[#allocation8 + $0x204] sm:$0xf]
    %v1231 = vld [vmem:[#allocation8 + $0x208] sm:$0xff]
    %v1232 = vld [vmem:[#allocation8 + $0x210] sm:$0xff]
    %v1233 = vld [vmem:[#allocation8 + $0x218] sm:$0xf]
    %v1234 = vld [vmem:[#allocation8 + $0x21c] sm:$0xff]
    %v1235 = vld [vmem:[#allocation8 + $0x224] sm:$0xff]
    %v1236 = vld [vmem:[#allocation8 + $0x22c] sm:$0xf]
    %v1237 = vld [vmem:[#allocation8 + $0x230] sm:$0xff]
    %v1238 = vld [vmem:[#allocation8 + $0x238] sm:$0xff]
    %v1239 = vld [vmem:[#allocation8 + $0x240] sm:$0xf]
    %v1240 = vld [vmem:[#allocation8 + $0x244] sm:$0xff]
    %v1241 = vld [vmem:[#allocation8 + $0x24c] sm:$0xff]
    %v1242 = vld [vmem:[#allocation8 + $0x254] sm:$0xf]
    %v1243 = vld [vmem:[#allocation8 + $0x258] sm:$0xff]
    %v1244 = vld [vmem:[#allocation8 + $0x260] sm:$0xff]
    %v1245 = vld [vmem:[#allocation8 + $0x268] sm:$0xf]
    %v1246 = vld [vmem:[#allocation8 + $0x26c] sm:$0xff]
    %v1247 = vld [vmem:[#allocation8 + $0x274] sm:$0xff]
    %v1248 = vld [vmem:[#allocation8 + $0x27c] sm:$0xf]
    %v1249 = vld [vmem:[#allocation8 + $0x280] sm:$0xff]
    %v1250 = vld [vmem:[#allocation8 + $0x288] sm:$0xff]
    %v1251 = vld [vmem:[#allocation8 + $0x290] sm:$0xf]
    %v1252 = vld [vmem:[#allocation8 + $0x294] sm:$0xff]
    %v1253 = vld [vmem:[#allocation8 + $0x29c] sm:$0xff]
    %v1254 = vld [vmem:[#allocation8 + $0x2a4] sm:$0xf]
    %v1255 = vld [vmem:[#allocation8 + $0x2a8] sm:$0xff]
    %v1256 = vld [vmem:[#allocation8 + $0x2b0] sm:$0xff]
    %v1257 = vld [vmem:[#allocation8 + $0x2b8] sm:$0xf]
    %v1258 = vld [vmem:[#allocation8 + $0x2bc] sm:$0xff]
    %v1259 = vld [vmem:[#allocation8 + $0x2c4] sm:$0xff]
    %v1260 = vld [vmem:[#allocation8 + $0x2cc] sm:$0xf]
    %v1261 = vld [vmem:[#allocation8 + $0x2d0] sm:$0xff]
    %v1262 = vld [vmem:[#allocation8 + $0x2d8] sm:$0xff]
    %v1263 = vld [vmem:[#allocation8 + $0x2e0] sm:$0xf]
    %v1264 = vld [vmem:[#allocation8 + $0x2e4] sm:$0xff]
    %v1265 = vld [vmem:[#allocation8 + $0x2ec] sm:$0xff]
    %v1266 = vld [vmem:[#allocation8 + $0x2f4] sm:$0xf]
    %v1267 = vld [vmem:[#allocation8 + $0x2f8] sm:$0xff]
    %v1268 = vld [vmem:[#allocation8 + $0x300] sm:$0xff]
    %v1269 = vld [vmem:[#allocation8 + $0x308] sm:$0xf]
    %v1270 = vld [vmem:[#allocation8 + $0x30c] sm:$0xff]
    %v1271 = vld [vmem:[#allocation8 + $0x314] sm:$0xff]
    %v1272 = vld [vmem:[#allocation8 + $0x31c] sm:$0xf]
    %v1273 = vld [vmem:[#allocation8 + $0x320] sm:$0xff]
    %v1274 = vld [vmem:[#allocation8 + $0x328] sm:$0xff]
    %v1275 = vld [vmem:[#allocation8 + $0x330] sm:$0xf]
    %v1276 = vld [vmem:[#allocation8 + $0x334] sm:$0xff]
    %v1277 = vld [vmem:[#allocation8 + $0x33c] sm:$0xff]
    %v1278 = vld [vmem:[#allocation8 + $0x344] sm:$0xf]
    %v1279 = vld [vmem:[#allocation8 + $0x348] sm:$0xff]
    %v1280 = vld [vmem:[#allocation8 + $0x350] sm:$0xff]
    %v1281 = vld [vmem:[#allocation8 + $0x358] sm:$0xf]
    %v1282 = vld [vmem:[#allocation8 + $0x35c] sm:$0xff]
    %v1283 = vld [vmem:[#allocation8 + $0x364] sm:$0xff]
    %v1284 = vld [vmem:[#allocation8 + $0x36c] sm:$0xf]
    %v1285 = vld [vmem:[#allocation8 + $0x370] sm:$0xff]
    %v1286 = vld [vmem:[#allocation8 + $0x378] sm:$0xff]
    %v1287 = vld [vmem:[#allocation8 + $0x380] sm:$0xf]
    %v1288 = vld [vmem:[#allocation8 + $0x384] sm:$0xff]
    %v1289 = vld [vmem:[#allocation8 + $0x38c] sm:$0xff]
    %v1290 = vld [vmem:[#allocation8 + $0x394] sm:$0xf]
    %v1291 = vld [vmem:[#allocation8 + $0x398] sm:$0xff]
    %v1292 = vld [vmem:[#allocation8 + $0x3a0] sm:$0xff]
    %v1293 = vld [vmem:[#allocation8 + $0x3a8] sm:$0xf]
    %v1294 = vld [vmem:[#allocation8 + $0x3ac] sm:$0xff]
    %v1295 = vld [vmem:[#allocation8 + $0x3b4] sm:$0xff]
    %v1296 = vld [vmem:[#allocation8 + $0x3bc] sm:$0xf]
    %v1297 = vld [vmem:[#allocation8 + $0x3c0] sm:$0xff]
    %v1298 = vld [vmem:[#allocation8 + $0x3c8] sm:$0xff]
    %v1299 = vld [vmem:[#allocation8 + $0x3d0] sm:$0xf]
    %v1300 = vld [vmem:[#allocation8 + $0x3d4] sm:$0xff]
    %v1301 = vld [vmem:[#allocation8 + $0x3dc] sm:$0xff]
    %v1302 = vld [vmem:[#allocation8 + $0x3e4] sm:$0xf]
    %v1303 = vld [vmem:[#allocation8 + $0x3e8] sm:$0xff]
    %v1304 = vld [vmem:[#allocation8 + $0x3f0] sm:$0xff]
    %v1305 = vld [vmem:[#allocation8 + $0x3f8] sm:$0xf]
    %v1306 = vld [vmem:[#allocation8 + $0x3fc] sm:$0xff]
    %v1307 = vld [vmem:[#allocation8 + $0x404] sm:$0xff]
    %v1308 = vld [vmem:[#allocation8 + $0x40c] sm:$0xf]
    %v1309 = vld [vmem:[#allocation8 + $0x410] sm:$0xff]
    %v1310 = vld [vmem:[#allocation8 + $0x418] sm:$0xff]
    %v1311 = vld [vmem:[#allocation8 + $0x420] sm:$0xf]
    %v1312 = vld [vmem:[#allocation8 + $0x424] sm:$0xff]
    %v1313 = vld [vmem:[#allocation8 + $0x42c] sm:$0xff]
    %v1314 = vld [vmem:[#allocation8 + $0x434] sm:$0xf]
    %v1315 = vld [vmem:[#allocation8 + $0x438] sm:$0xff]
    %v1316 = vld [vmem:[#allocation8 + $0x440] sm:$0xff]
    %v1317 = vld [vmem:[#allocation8 + $0x448] sm:$0xf]
    %v1318 = vld [vmem:[#allocation8 + $0x44c] sm:$0xff]
    %v1319 = vld [vmem:[#allocation8 + $0x454] sm:$0xff]
    %v1320 = vld [vmem:[#allocation8 + $0x45c] sm:$0xf]
    %v1321 = vld [vmem:[#allocation8 + $0x460] sm:$0xff]
    %v1322 = vld [vmem:[#allocation8 + $0x468] sm:$0xff]
    %v1323 = vld [vmem:[#allocation8 + $0x470] sm:$0xf]
    %v1324 = vld [vmem:[#allocation8 + $0x474] sm:$0xff]
    %v1325 = vld [vmem:[#allocation8 + $0x47c] sm:$0xff]
    %v1326 = vld [vmem:[#allocation8 + $0x484] sm:$0xf]
    %v1327 = vld [vmem:[#allocation8 + $0x488] sm:$0xff]
    %v1328 = vld [vmem:[#allocation8 + $0x490] sm:$0xff]
    %v1329 = vld [vmem:[#allocation8 + $0x498] sm:$0xf]
    %v1330 = vld [vmem:[#allocation8 + $0x49c] sm:$0xff]
    %v1331 = vld [vmem:[#allocation8 + $0x4a4] sm:$0xff]
    %v1332 = vld [vmem:[#allocation8 + $0x4ac] sm:$0xf]
    %v1333 = vld [vmem:[#allocation8 + $0x4b0] sm:$0xff]
    %v1334 = vld [vmem:[#allocation8 + $0x4b8] sm:$0xff]
    %v1335 = vld [vmem:[#allocation8 + $0x4c0] sm:$0xf]
    %v1336 = vld [vmem:[#allocation8 + $0x4c4] sm:$0xff]
    %v1337 = vld [vmem:[#allocation8 + $0x4cc] sm:$0xff]
    %v1338 = vld [vmem:[#allocation8 + $0x4d4] sm:$0xf]
    %v1339 = vld [vmem:[#allocation8 + $0x4d8] sm:$0xff]
    %v1340 = vld [vmem:[#allocation8 + $0x4e0] sm:$0xff]
    %v1341 = vld [vmem:[#allocation8 + $0x4e8] sm:$0xf]
    %v1342 = vld [vmem:[#allocation8 + $0x4ec] sm:$0xff]
    %v1343 = vld [vmem:[#allocation8 + $0x4f4] sm:$0xff]
    %v1344 = vld [vmem:[#allocation8 + $0x4fc] sm:$0xf]
    %v1345 = vld [vmem:[#allocation8 + $0x500] sm:$0xff]
    %v1346 = vld [vmem:[#allocation8 + $0x508] sm:$0xff]
    %v1347 = vld [vmem:[#allocation8 + $0x510] sm:$0xf]
    %v1348 = vld [vmem:[#allocation8 + $0x514] sm:$0xff]
    %v1349 = vld [vmem:[#allocation8 + $0x51c] sm:$0xff]
    %v1350 = vld [vmem:[#allocation8 + $0x524] sm:$0xf]
    %v1351 = vld [vmem:[#allocation8 + $0x528] sm:$0xff]
    %v1352 = vld [vmem:[#allocation8 + $0x530] sm:$0xff]
    %v1353 = vld [vmem:[#allocation8 + $0x538] sm:$0xf]
    %v1354 = vld [vmem:[#allocation8 + $0x53c] sm:$0xff]
    %v1355 = vld [vmem:[#allocation8 + $0x544] sm:$0xff]
    %v1356 = vld [vmem:[#allocation8 + $0x54c] sm:$0xf]
    %v1357 = vld [vmem:[#allocation8 + $0x550] sm:$0xff]
    %v1358 = vld [vmem:[#allocation8 + $0x558] sm:$0xff]
    %v1359 = vld [vmem:[#allocation8 + $0x560] sm:$0xf]
    %v1360 = vld [vmem:[#allocation8 + $0x564] sm:$0xff]
    %v1361 = vld [vmem:[#allocation8 + $0x56c] sm:$0xff]
    %v1362 = vld [vmem:[#allocation8 + $0x574] sm:$0xf]
    %v1363 = vld [vmem:[#allocation8 + $0x578] sm:$0xff]
    %v1364 = vld [vmem:[#allocation8 + $0x580] sm:$0xff]
    %v1365 = vld [vmem:[#allocation8 + $0x588] sm:$0xf]
    %v1366 = vld [vmem:[#allocation8 + $0x58c] sm:$0xff]
    %v1367 = vld [vmem:[#allocation8 + $0x594] sm:$0xff]
    %v1368 = vld [vmem:[#allocation8 + $0x59c] sm:$0xf]
    %v1369 = vld [vmem:[#allocation8 + $0x5a0] sm:$0xff]
    %v1370 = vld [vmem:[#allocation8 + $0x5a8] sm:$0xff]
    %v1371 = vld [vmem:[#allocation8 + $0x5b0] sm:$0xf]
    %v1372 = vld [vmem:[#allocation8 + $0x5b4] sm:$0xff]
    %v1373 = vld [vmem:[#allocation8 + $0x5bc] sm:$0xff]
    %v1374 = vld [vmem:[#allocation8 + $0x5c4] sm:$0xf]
    %v1375 = vld [vmem:[#allocation8 + $0x5c8] sm:$0xff]
    %v1376 = vld [vmem:[#allocation8 + $0x5d0] sm:$0xff]
    %v1377 = vld [vmem:[#allocation8 + $0x5d8] sm:$0xf]
    %v1378 = vld [vmem:[#allocation8 + $0x5dc] sm:$0xff]
    %v1379 = vld [vmem:[#allocation8 + $0x5e4] sm:$0xff]
    %v1380 = vld [vmem:[#allocation8 + $0x5ec] sm:$0xf]
    %v1381 = vld [vmem:[#allocation8 + $0x5f0] sm:$0xff]
    %v1382 = vld [vmem:[#allocation8 + $0x5f8] sm:$0xff]
    %v1383 = vld [vmem:[#allocation8 + $0x600] sm:$0xf]
    %v1384 = vld [vmem:[#allocation8 + $0x604] sm:$0xff]
    %v1385 = vld [vmem:[#allocation8 + $0x60c] sm:$0xff]
    %v1386 = vld [vmem:[#allocation8 + $0x614] sm:$0xf]
    %v1387 = vld [vmem:[#allocation8 + $0x618] sm:$0xff]
    %v1388 = vld [vmem:[#allocation8 + $0x620] sm:$0xff]
    %v1389 = vld [vmem:[#allocation8 + $0x628] sm:$0xf]
    %v1390 = vld [vmem:[#allocation8 + $0x62c] sm:$0xff]
    %v1391 = vld [vmem:[#allocation8 + $0x634] sm:$0xff]
    %v1392 = vld [vmem:[#allocation8 + $0x63c] sm:$0xf]
    %v1393 = vld [vmem:[#allocation8 + $0x640] sm:$0xff]
    %v1394 = vld [vmem:[#allocation8 + $0x648] sm:$0xff]
    %v1395 = vld [vmem:[#allocation8 + $0x650] sm:$0xf]
    %v1396 = vld [vmem:[#allocation8 + $0x654] sm:$0xff]
    %v1397 = vld [vmem:[#allocation8 + $0x65c] sm:$0xff]
    %v1398 = vld [vmem:[#allocation8 + $0x664] sm:$0xf]
    %v1399 = vld [vmem:[#allocation8 + $0x668] sm:$0xff]
    %v1400 = vld [vmem:[#allocation8 + $0x670] sm:$0xff]
    %v1401 = vld [vmem:[#allocation8 + $0x678] sm:$0xf]
    %v1402 = vld [vmem:[#allocation8 + $0x67c] sm:$0xff]
    %v1403 = vld [vmem:[#allocation8 + $0x684] sm:$0xff]
    %v1404 = vld [vmem:[#allocation8 + $0x68c] sm:$0xf]
    %v1405 = vld [vmem:[#allocation8 + $0x690] sm:$0xff]
    %v1406 = vld [vmem:[#allocation8 + $0x698] sm:$0xff]
    %v1407 = vld [vmem:[#allocation8 + $0x6a0] sm:$0xf]
    %v1408 = vld [vmem:[#allocation8 + $0x6a4] sm:$0xff]
    %v1409 = vld [vmem:[#allocation8 + $0x6ac] sm:$0xff]
    %v1410 = vld [vmem:[#allocation8 + $0x6b4] sm:$0xf]
    %v1411 = vld [vmem:[#allocation8 + $0x6b8] sm:$0xff]
    %v1412 = vld [vmem:[#allocation8 + $0x6c0] sm:$0xff]
    %v1413 = vld [vmem:[#allocation8 + $0x6c8] sm:$0xf]
    %v1414 = vld [vmem:[#allocation8 + $0x6cc] sm:$0xff]
    %v1415 = vld [vmem:[#allocation8 + $0x6d4] sm:$0xff]
    %v1416 = vld [vmem:[#allocation8 + $0x6dc] sm:$0xf]
    %v1417 = vld [vmem:[#allocation8 + $0x6e0] sm:$0xff]
    %v1418 = vld [vmem:[#allocation8 + $0x6e8] sm:$0xff]
    %v1419 = vld [vmem:[#allocation8 + $0x6f0] sm:$0xf]
    %v1420 = vld [vmem:[#allocation8 + $0x6f4] sm:$0xff]
    %v1421 = vld [vmem:[#allocation8 + $0x6fc] sm:$0xff]
    %v1422 = vld [vmem:[#allocation8 + $0x704] sm:$0xf]
    %v1423 = vld [vmem:[#allocation8 + $0x708] sm:$0xff]
    %v1424 = vld [vmem:[#allocation8 + $0x710] sm:$0xff]
    %v1425 = vld [vmem:[#allocation8 + $0x718] sm:$0xf]
    %v1426 = vld [vmem:[#allocation8 + $0x71c] sm:$0xff]
    %v1427 = vld [vmem:[#allocation8 + $0x724] sm:$0xff]
    %v1428 = vld [vmem:[#allocation8 + $0x72c] sm:$0xf]
    %v1429 = vld [vmem:[#allocation8 + $0x730] sm:$0xff]
    %v1430 = vld [vmem:[#allocation8 + $0x738] sm:$0xff]
    %v1431 = vld [vmem:[#allocation8 + $0x740] sm:$0xf]
    %v1432 = vld [vmem:[#allocation8 + $0x744] sm:$0xff]
    %v1433 = vld [vmem:[#allocation8 + $0x74c] sm:$0xff]
    %v1434 = vld [vmem:[#allocation8 + $0x754] sm:$0xf]
    %v1435 = vld [vmem:[#allocation8 + $0x758] sm:$0xff]
    %v1436 = vld [vmem:[#allocation8 + $0x760] sm:$0xff]
    %v1437 = vld [vmem:[#allocation8 + $0x768] sm:$0xf]
    %v1438 = vld [vmem:[#allocation8 + $0x76c] sm:$0xff]
    %v1439 = vld [vmem:[#allocation8 + $0x774] sm:$0xff]
    %v1440 = vld [vmem:[#allocation8 + $0x77c] sm:$0xf]
    %v1441 = vld [vmem:[#allocation8 + $0x780] sm:$0xff]
    %v1442 = vld [vmem:[#allocation8 + $0x788] sm:$0xff]
    %v1443 = vld [vmem:[#allocation8 + $0x790] sm:$0xf]
    %v1444 = vld [vmem:[#allocation8 + $0x794] sm:$0xff]
    %v1445 = vld [vmem:[#allocation8 + $0x79c] sm:$0xff]
    %v1446 = vld [vmem:[#allocation8 + $0x7a4] sm:$0xf]
    %v1447 = vld [vmem:[#allocation8 + $0x7a8] sm:$0xff]
    %v1448 = vld [vmem:[#allocation8 + $0x7b0] sm:$0xff]
    %v1449 = vld [vmem:[#allocation8 + $0x7b8] sm:$0xf]
    %v1450 = vld [vmem:[#allocation8 + $0x7bc] sm:$0xff]
    %v1451 = vld [vmem:[#allocation8 + $0x7c4] sm:$0xff]
    %v1452 = vld [vmem:[#allocation8 + $0x7cc] sm:$0xf]
    %v1453 = vld [vmem:[#allocation8 + $0x7d0] sm:$0xff]
    %v1454 = vld [vmem:[#allocation8 + $0x7d8] sm:$0xff]
    %v1455 = vld [vmem:[#allocation8 + $0x7e0] sm:$0xf]
    %v1456 = vld [vmem:[#allocation8 + $0x7e4] sm:$0xff]
    %v1457 = vld [vmem:[#allocation8 + $0x7ec] sm:$0xff]
    %v1458 = vld [vmem:[#allocation8 + $0x7f4] sm:$0xf]
    %v1459 = vld [vmem:[#allocation8 + $0x7f8] sm:$0xff]
    %v1460 = vld [vmem:[#allocation8 + $0x800] sm:$0xff]
    %v1461 = vld [vmem:[#allocation8 + $0x808] sm:$0xf]
    %v1462 = vld [vmem:[#allocation8 + $0x80c] sm:$0xff]
    %v1463 = vld [vmem:[#allocation8 + $0x814] sm:$0xff]
    %v1464 = vld [vmem:[#allocation8 + $0x81c] sm:$0xf]
    %v1465 = vld [vmem:[#allocation8 + $0x820] sm:$0xff]
    %v1466 = vld [vmem:[#allocation8 + $0x828] sm:$0xff]
    %v1467 = vld [vmem:[#allocation8 + $0x830] sm:$0xf]
    %v1468 = vld [vmem:[#allocation8 + $0x834] sm:$0xff]
    %v1469 = vld [vmem:[#allocation8 + $0x83c] sm:$0xff]
    %v1470 = vld [vmem:[#allocation8 + $0x844] sm:$0xf]
    %v1471 = vld [vmem:[#allocation8 + $0x848] sm:$0xff]
    %v1472 = vld [vmem:[#allocation8 + $0x850] sm:$0xff]
    %v1473 = vld [vmem:[#allocation8 + $0x858] sm:$0xf]
    %v1474 = vld [vmem:[#allocation8 + $0x85c] sm:$0xff]
    %v1475 = vld [vmem:[#allocation8 + $0x864] sm:$0xff]
    %v1476 = vld [vmem:[#allocation8 + $0x86c] sm:$0xf]
    %v1477 = vld [vmem:[#allocation8 + $0x870] sm:$0xff]
    %v1478 = vld [vmem:[#allocation8 + $0x878] sm:$0xff]
    %v1479 = vld [vmem:[#allocation8 + $0x880] sm:$0xf]
    %v1480 = vld [vmem:[#allocation8 + $0x884] sm:$0xff]
    %v1481 = vld [vmem:[#allocation8 + $0x88c] sm:$0xff]
    %v1482 = vld [vmem:[#allocation8 + $0x894] sm:$0xf]
    %v1483 = vld [vmem:[#allocation8 + $0x898] sm:$0xff]
    %v1484 = vld [vmem:[#allocation8 + $0x8a0] sm:$0xff]
    %v1485 = vld [vmem:[#allocation8 + $0x8a8] sm:$0xf]
    %v1486 = vld [vmem:[#allocation8 + $0x8ac] sm:$0xff]
    %v1487 = vld [vmem:[#allocation8 + $0x8b4] sm:$0xff]
    %v1488 = vld [vmem:[#allocation8 + $0x8bc] sm:$0xf]
    %v1489 = vld [vmem:[#allocation10] sm:$0x1f]
    %v1491 = vperm.slane %v1489, 0
    %v1492 = vperm.slane %v1489, 1
    %v1493 = vperm.slane %v1489, 2
    %v1494 = vperm.slane %v1489, 3
    %v1495 = vperm.slane %v1489, 4
    %v1837 = vunpack.c.l.b16 %v1153
    %v1838 = vunpack.c.h.b16 %v1153
    %v1839 = vunpack.c.l.b16 %v1154
    %v1840 = vunpack.c.h.b16 %v1154
    %v1841 = vunpack.c.l.b16 %v1155
    %v1842 = vunpack.c.l.b16 %v1156
    %v1843 = vunpack.c.h.b16 %v1156
    %v1844 = vunpack.c.l.b16 %v1157
    %v1845 = vunpack.c.h.b16 %v1157
    %v1846 = vunpack.c.l.b16 %v1158
    %v1847 = vunpack.c.l.b16 %v1159
    %v1848 = vunpack.c.h.b16 %v1159
    %v1849 = vunpack.c.l.b16 %v1160
    %v1850 = vunpack.c.h.b16 %v1160
    %v1851 = vunpack.c.l.b16 %v1161
    %v1852 = vunpack.c.l.b16 %v1162
    %v1853 = vunpack.c.h.b16 %v1162
    %v1854 = vunpack.c.l.b16 %v1163
    %v1855 = vunpack.c.h.b16 %v1163
    %v1856 = vunpack.c.l.b16 %v1164
    %v1857 = vunpack.c.l.b16 %v1165
    %v1858 = vunpack.c.h.b16 %v1165
    %v1859 = vunpack.c.l.b16 %v1166
    %v1860 = vunpack.c.h.b16 %v1166
    %v1861 = vunpack.c.l.b16 %v1167
    %v1862 = vunpack.c.l.b16 %v1168
    %v1863 = vunpack.c.h.b16 %v1168
    %v1864 = vunpack.c.l.b16 %v1169
    %v1865 = vunpack.c.h.b16 %v1169
    %v1866 = vunpack.c.l.b16 %v1170
    %v1867 = vunpack.c.l.b16 %v1171
    %v1868 = vunpack.c.h.b16 %v1171
    %v1869 = vunpack.c.l.b16 %v1172
    %v1870 = vunpack.c.h.b16 %v1172
    %v1871 = vunpack.c.l.b16 %v1173
    %v1872 = vunpack.c.l.b16 %v1174
    %v1873 = vunpack.c.h.b16 %v1174
    %v1874 = vunpack.c.l.b16 %v1175
    %v1875 = vunpack.c.h.b16 %v1175
    %v1876 = vunpack.c.l.b16 %v1176
    %v1877 = vunpack.c.l.b16 %v1177
    %v1878 = vunpack.c.h.b16 %v1177
    %v1879 = vunpack.c.l.b16 %v1178
    %v1880 = vunpack.c.h.b16 %v1178
    %v1881 = vunpack.c.l.b16 %v1179
    %v1882 = vunpack.c.l.b16 %v1180
    %v1883 = vunpack.c.h.b16 %v1180
    %v1884 = vunpack.c.l.b16 %v1181
    %v1885 = vunpack.c.h.b16 %v1181
    %v1886 = vunpack.c.l.b16 %v1182
    %v1887 = vunpack.c.l.b16 %v1183
    %v1888 = vunpack.c.h.b16 %v1183
    %v1889 = vunpack.c.l.b16 %v1184
    %v1890 = vunpack.c.h.b16 %v1184
    %v1891 = vunpack.c.l.b16 %v1185
    %v1892 = vunpack.c.l.b16 %v1186
    %v1893 = vunpack.c.h.b16 %v1186
    %v1894 = vunpack.c.l.b16 %v1187
    %v1895 = vunpack.c.h.b16 %v1187
    %v1896 = vunpack.c.l.b16 %v1188
    %v1897 = vunpack.c.l.b16 %v1189
    %v1898 = vunpack.c.h.b16 %v1189
    %v1899 = vunpack.c.l.b16 %v1190
    %v1900 = vunpack.c.h.b16 %v1190
    %v1901 = vunpack.c.l.b16 %v1191
    %v1902 = vunpack.c.l.b16 %v1192
    %v1903 = vunpack.c.h.b16 %v1192
    %v1904 = vunpack.c.l.b16 %v1193
    %v1905 = vunpack.c.h.b16 %v1193
    %v1906 = vunpack.c.l.b16 %v1194
    %v1907 = vunpack.c.l.b16 %v1195
    %v1908 = vunpack.c.h.b16 %v1195
    %v1909 = vunpack.c.l.b16 %v1196
    %v1910 = vunpack.c.h.b16 %v1196
    %v1911 = vunpack.c.l.b16 %v1197
    %v1912 = vunpack.c.l.b16 %v1198
    %v1913 = vunpack.c.h.b16 %v1198
    %v1914 = vunpack.c.l.b16 %v1199
    %v1915 = vunpack.c.h.b16 %v1199
    %v1916 = vunpack.c.l.b16 %v1200
    %v1917 = vunpack.c.l.b16 %v1201
    %v1918 = vunpack.c.h.b16 %v1201
    %v1919 = vunpack.c.l.b16 %v1202
    %v1920 = vunpack.c.h.b16 %v1202
    %v1921 = vunpack.c.l.b16 %v1203
    %v1922 = vunpack.c.l.b16 %v1204
    %v1923 = vunpack.c.h.b16 %v1204
    %v1924 = vunpack.c.l.b16 %v1205
    %v1925 = vunpack.c.h.b16 %v1205
    %v1926 = vunpack.c.l.b16 %v1206
    %v1927 = vunpack.c.l.b16 %v1207
    %v1928 = vunpack.c.h.b16 %v1207
    %v1929 = vunpack.c.l.b16 %v1208
    %v1930 = vunpack.c.h.b16 %v1208
    %v1931 = vunpack.c.l.b16 %v1209
    %v1932 = vunpack.c.l.b16 %v1210
    %v1933 = vunpack.c.h.b16 %v1210
    %v1934 = vunpack.c.l.b16 %v1211
    %v1935 = vunpack.c.h.b16 %v1211
    %v1936 = vunpack.c.l.b16 %v1212
    %v1937 = vunpack.c.l.b16 %v1213
    %v1938 = vunpack.c.h.b16 %v1213
    %v1939 = vunpack.c.l.b16 %v1214
    %v1940 = vunpack.c.h.b16 %v1214
    %v1941 = vunpack.c.l.b16 %v1215
    %v1942 = vunpack.c.l.b16 %v1216
    %v1943 = vunpack.c.h.b16 %v1216
    %v1944 = vunpack.c.l.b16 %v1217
    %v1945 = vunpack.c.h.b16 %v1217
    %v1946 = vunpack.c.l.b16 %v1218
    %v1947 = vunpack.c.l.b16 %v1219
    %v1948 = vunpack.c.h.b16 %v1219
    %v1949 = vunpack.c.l.b16 %v1220
    %v1950 = vunpack.c.h.b16 %v1220
    %v1951 = vunpack.c.l.b16 %v1221
    %v1952 = vunpack.c.l.b16 %v1222
    %v1953 = vunpack.c.h.b16 %v1222
    %v1954 = vunpack.c.l.b16 %v1223
    %v1955 = vunpack.c.h.b16 %v1223
    %v1956 = vunpack.c.l.b16 %v1224
    %v1957 = vunpack.c.l.b16 %v1225
    %v1958 = vunpack.c.h.b16 %v1225
    %v1959 = vunpack.c.l.b16 %v1226
    %v1960 = vunpack.c.h.b16 %v1226
    %v1961 = vunpack.c.l.b16 %v1227
    %v1962 = vunpack.c.l.b16 %v1228
    %v1963 = vunpack.c.h.b16 %v1228
    %v1964 = vunpack.c.l.b16 %v1229
    %v1965 = vunpack.c.h.b16 %v1229
    %v1966 = vunpack.c.l.b16 %v1230
    %v1967 = vunpack.c.l.b16 %v1231
    %v1968 = vunpack.c.h.b16 %v1231
    %v1969 = vunpack.c.l.b16 %v1232
    %v1970 = vunpack.c.h.b16 %v1232
    %v1971 = vunpack.c.l.b16 %v1233
    %v1972 = vunpack.c.l.b16 %v1234
    %v1973 = vunpack.c.h.b16 %v1234
    %v1974 = vunpack.c.l.b16 %v1235
    %v1975 = vunpack.c.h.b16 %v1235
    %v1976 = vunpack.c.l.b16 %v1236
    %v1977 = vunpack.c.l.b16 %v1237
    %v1978 = vunpack.c.h.b16 %v1237
    %v1979 = vunpack.c.l.b16 %v1238
    %v1980 = vunpack.c.h.b16 %v1238
    %v1981 = vunpack.c.l.b16 %v1239
    %v1982 = vunpack.c.l.b16 %v1240
    %v1983 = vunpack.c.h.b16 %v1240
    %v1984 = vunpack.c.l.b16 %v1241
    %v1985 = vunpack.c.h.b16 %v1241
    %v1986 = vunpack.c.l.b16 %v1242
    %v1987 = vunpack.c.l.b16 %v1243
    %v1988 = vunpack.c.h.b16 %v1243
    %v1989 = vunpack.c.l.b16 %v1244
    %v1990 = vunpack.c.h.b16 %v1244
    %v1991 = vunpack.c.l.b16 %v1245
    %v1992 = vunpack.c.l.b16 %v1246
    %v1993 = vunpack.c.h.b16 %v1246
    %v1994 = vunpack.c.l.b16 %v1247
    %v1995 = vunpack.c.h.b16 %v1247
    %v1996 = vunpack.c.l.b16 %v1248
    %v1997 = vunpack.c.l.b16 %v1249
    %v1998 = vunpack.c.h.b16 %v1249
    %v1999 = vunpack.c.l.b16 %v1250
    %v2000 = vunpack.c.h.b16 %v1250
    %v2001 = vunpack.c.l.b16 %v1251
    %v2002 = vunpack.c.l.b16 %v1252
    %v2003 = vunpack.c.h.b16 %v1252
    %v2004 = vunpack.c.l.b16 %v1253
    %v2005 = vunpack.c.h.b16 %v1253
    %v2006 = vunpack.c.l.b16 %v1254
    %v2007 = vunpack.c.l.b16 %v1255
    %v2008 = vunpack.c.h.b16 %v1255
    %v2009 = vunpack.c.l.b16 %v1256
    %v2010 = vunpack.c.h.b16 %v1256
    %v2011 = vunpack.c.l.b16 %v1257
    %v2012 = vunpack.c.l.b16 %v1258
    %v2013 = vunpack.c.h.b16 %v1258
    %v2014 = vunpack.c.l.b16 %v1259
    %v2015 = vunpack.c.h.b16 %v1259
    %v2016 = vunpack.c.l.b16 %v1260
    %v2017 = vunpack.c.l.b16 %v1261
    %v2018 = vunpack.c.h.b16 %v1261
    %v2019 = vunpack.c.l.b16 %v1262
    %v2020 = vunpack.c.h.b16 %v1262
    %v2021 = vunpack.c.l.b16 %v1263
    %v2022 = vunpack.c.l.b16 %v1264
    %v2023 = vunpack.c.h.b16 %v1264
    %v2024 = vunpack.c.l.b16 %v1265
    %v2025 = vunpack.c.h.b16 %v1265
    %v2026 = vunpack.c.l.b16 %v1266
    %v2027 = vunpack.c.l.b16 %v1267
    %v2028 = vunpack.c.h.b16 %v1267
    %v2029 = vunpack.c.l.b16 %v1268
    %v2030 = vunpack.c.h.b16 %v1268
    %v2031 = vunpack.c.l.b16 %v1269
    %v2032 = vunpack.c.l.b16 %v1270
    %v2033 = vunpack.c.h.b16 %v1270
    %v2034 = vunpack.c.l.b16 %v1271
    %v2035 = vunpack.c.h.b16 %v1271
    %v2036 = vunpack.c.l.b16 %v1272
    %v2037 = vunpack.c.l.b16 %v1273
    %v2038 = vunpack.c.h.b16 %v1273
    %v2039 = vunpack.c.l.b16 %v1274
    %v2040 = vunpack.c.h.b16 %v1274
    %v2041 = vunpack.c.l.b16 %v1275
    %v2042 = vunpack.c.l.b16 %v1276
    %v2043 = vunpack.c.h.b16 %v1276
    %v2044 = vunpack.c.l.b16 %v1277
    %v2045 = vunpack.c.h.b16 %v1277
    %v2046 = vunpack.c.l.b16 %v1278
    %v2047 = vunpack.c.l.b16 %v1279
    %v2048 = vunpack.c.h.b16 %v1279
    %v2049 = vunpack.c.l.b16 %v1280
    %v2050 = vunpack.c.h.b16 %v1280
    %v2051 = vunpack.c.l.b16 %v1281
    %v2052 = vunpack.c.l.b16 %v1282
    %v2053 = vunpack.c.h.b16 %v1282
    %v2054 = vunpack.c.l.b16 %v1283
    %v2055 = vunpack.c.h.b16 %v1283
    %v2056 = vunpack.c.l.b16 %v1284
    %v2057 = vunpack.c.l.b16 %v1285
    %v2058 = vunpack.c.h.b16 %v1285
    %v2059 = vunpack.c.l.b16 %v1286
    %v2060 = vunpack.c.h.b16 %v1286
    %v2061 = vunpack.c.l.b16 %v1287
    %v2062 = vunpack.c.l.b16 %v1288
    %v2063 = vunpack.c.h.b16 %v1288
    %v2064 = vunpack.c.l.b16 %v1289
    %v2065 = vunpack.c.h.b16 %v1289
    %v2066 = vunpack.c.l.b16 %v1290
    %v2067 = vunpack.c.l.b16 %v1291
    %v2068 = vunpack.c.h.b16 %v1291
    %v2069 = vunpack.c.l.b16 %v1292
    %v2070 = vunpack.c.h.b16 %v1292
    %v2071 = vunpack.c.l.b16 %v1293
    %v2072 = vunpack.c.l.b16 %v1294
    %v2073 = vunpack.c.h.b16 %v1294
    %v2074 = vunpack.c.l.b16 %v1295
    %v2075 = vunpack.c.h.b16 %v1295
    %v2076 = vunpack.c.l.b16 %v1296
    %v2077 = vunpack.c.l.b16 %v1297
    %v2078 = vunpack.c.h.b16 %v1297
    %v2079 = vunpack.c.l.b16 %v1298
    %v2080 = vunpack.c.h.b16 %v1298
    %v2081 = vunpack.c.l.b16 %v1299
    %v2082 = vunpack.c.l.b16 %v1300
    %v2083 = vunpack.c.h.b16 %v1300
    %v2084 = vunpack.c.l.b16 %v1301
    %v2085 = vunpack.c.h.b16 %v1301
    %v2086 = vunpack.c.l.b16 %v1302
    %v2087 = vunpack.c.l.b16 %v1303
    %v2088 = vunpack.c.h.b16 %v1303
    %v2089 = vunpack.c.l.b16 %v1304
    %v2090 = vunpack.c.h.b16 %v1304
    %v2091 = vunpack.c.l.b16 %v1305
    %v2092 = vunpack.c.l.b16 %v1306
    %v2093 = vunpack.c.h.b16 %v1306
    %v2094 = vunpack.c.l.b16 %v1307
    %v2095 = vunpack.c.h.b16 %v1307
    %v2096 = vunpack.c.l.b16 %v1308
    %v2097 = vunpack.c.l.b16 %v1309
    %v2098 = vunpack.c.h.b16 %v1309
    %v2099 = vunpack.c.l.b16 %v1310
    %v2100 = vunpack.c.h.b16 %v1310
    %v2101 = vunpack.c.l.b16 %v1311
    %v2102 = vunpack.c.l.b16 %v1312
    %v2103 = vunpack.c.h.b16 %v1312
    %v2104 = vunpack.c.l.b16 %v1313
    %v2105 = vunpack.c.h.b16 %v1313
    %v2106 = vunpack.c.l.b16 %v1314
    %v2107 = vunpack.c.l.b16 %v1315
    %v2108 = vunpack.c.h.b16 %v1315
    %v2109 = vunpack.c.l.b16 %v1316
    %v2110 = vunpack.c.h.b16 %v1316
    %v2111 = vunpack.c.l.b16 %v1317
    %v2112 = vunpack.c.l.b16 %v1318
    %v2113 = vunpack.c.h.b16 %v1318
    %v2114 = vunpack.c.l.b16 %v1319
    %v2115 = vunpack.c.h.b16 %v1319
    %v2116 = vunpack.c.l.b16 %v1320
    %v2117 = vunpack.c.l.b16 %v1321
    %v2118 = vunpack.c.h.b16 %v1321
    %v2119 = vunpack.c.l.b16 %v1322
    %v2120 = vunpack.c.h.b16 %v1322
    %v2121 = vunpack.c.l.b16 %v1323
    %v2122 = vunpack.c.l.b16 %v1324
    %v2123 = vunpack.c.h.b16 %v1324
    %v2124 = vunpack.c.l.b16 %v1325
    %v2125 = vunpack.c.h.b16 %v1325
    %v2126 = vunpack.c.l.b16 %v1326
    %v2127 = vunpack.c.l.b16 %v1327
    %v2128 = vunpack.c.h.b16 %v1327
    %v2129 = vunpack.c.l.b16 %v1328
    %v2130 = vunpack.c.h.b16 %v1328
    %v2131 = vunpack.c.l.b16 %v1329
    %v2132 = vunpack.c.l.b16 %v1330
    %v2133 = vunpack.c.h.b16 %v1330
    %v2134 = vunpack.c.l.b16 %v1331
    %v2135 = vunpack.c.h.b16 %v1331
    %v2136 = vunpack.c.l.b16 %v1332
    %v2137 = vunpack.c.l.b16 %v1333
    %v2138 = vunpack.c.h.b16 %v1333
    %v2139 = vunpack.c.l.b16 %v1334
    %v2140 = vunpack.c.h.b16 %v1334
    %v2141 = vunpack.c.l.b16 %v1335
    %v2142 = vunpack.c.l.b16 %v1336
    %v2143 = vunpack.c.h.b16 %v1336
    %v2144 = vunpack.c.l.b16 %v1337
    %v2145 = vunpack.c.h.b16 %v1337
    %v2146 = vunpack.c.l.b16 %v1338
    %v2147 = vunpack.c.l.b16 %v1339
    %v2148 = vunpack.c.h.b16 %v1339
    %v2149 = vunpack.c.l.b16 %v1340
    %v2150 = vunpack.c.h.b16 %v1340
    %v2151 = vunpack.c.l.b16 %v1341
    %v2152 = vunpack.c.l.b16 %v1342
    %v2153 = vunpack.c.h.b16 %v1342
    %v2154 = vunpack.c.l.b16 %v1343
    %v2155 = vunpack.c.h.b16 %v1343
    %v2156 = vunpack.c.l.b16 %v1344
    %v2157 = vunpack.c.l.b16 %v1345
    %v2158 = vunpack.c.h.b16 %v1345
    %v2159 = vunpack.c.l.b16 %v1346
    %v2160 = vunpack.c.h.b16 %v1346
    %v2161 = vunpack.c.l.b16 %v1347
    %v2162 = vunpack.c.l.b16 %v1348
    %v2163 = vunpack.c.h.b16 %v1348
    %v2164 = vunpack.c.l.b16 %v1349
    %v2165 = vunpack.c.h.b16 %v1349
    %v2166 = vunpack.c.l.b16 %v1350
    %v2167 = vunpack.c.l.b16 %v1351
    %v2168 = vunpack.c.h.b16 %v1351
    %v2169 = vunpack.c.l.b16 %v1352
    %v2170 = vunpack.c.h.b16 %v1352
    %v2171 = vunpack.c.l.b16 %v1353
    %v2172 = vunpack.c.l.b16 %v1354
    %v2173 = vunpack.c.h.b16 %v1354
    %v2174 = vunpack.c.l.b16 %v1355
    %v2175 = vunpack.c.h.b16 %v1355
    %v2176 = vunpack.c.l.b16 %v1356
    %v2177 = vunpack.c.l.b16 %v1357
    %v2178 = vunpack.c.h.b16 %v1357
    %v2179 = vunpack.c.l.b16 %v1358
    %v2180 = vunpack.c.h.b16 %v1358
    %v2181 = vunpack.c.l.b16 %v1359
    %v2182 = vunpack.c.l.b16 %v1360
    %v2183 = vunpack.c.h.b16 %v1360
    %v2184 = vunpack.c.l.b16 %v1361
    %v2185 = vunpack.c.h.b16 %v1361
    %v2186 = vunpack.c.l.b16 %v1362
    %v2187 = vunpack.c.l.b16 %v1363
    %v2188 = vunpack.c.h.b16 %v1363
    %v2189 = vunpack.c.l.b16 %v1364
    %v2190 = vunpack.c.h.b16 %v1364
    %v2191 = vunpack.c.l.b16 %v1365
    %v2192 = vunpack.c.l.b16 %v1366
    %v2193 = vunpack.c.h.b16 %v1366
    %v2194 = vunpack.c.l.b16 %v1367
    %v2195 = vunpack.c.h.b16 %v1367
    %v2196 = vunpack.c.l.b16 %v1368
    %v2197 = vunpack.c.l.b16 %v1369
    %v2198 = vunpack.c.h.b16 %v1369
    %v2199 = vunpack.c.l.b16 %v1370
    %v2200 = vunpack.c.h.b16 %v1370
    %v2201 = vunpack.c.l.b16 %v1371
    %v2202 = vunpack.c.l.b16 %v1372
    %v2203 = vunpack.c.h.b16 %v1372
    %v2204 = vunpack.c.l.b16 %v1373
    %v2205 = vunpack.c.h.b16 %v1373
    %v2206 = vunpack.c.l.b16 %v1374
    %v2207 = vunpack.c.l.b16 %v1375
    %v2208 = vunpack.c.h.b16 %v1375
    %v2209 = vunpack.c.l.b16 %v1376
    %v2210 = vunpack.c.h.b16 %v1376
    %v2211 = vunpack.c.l.b16 %v1377
    %v2212 = vunpack.c.l.b16 %v1378
    %v2213 = vunpack.c.h.b16 %v1378
    %v2214 = vunpack.c.l.b16 %v1379
    %v2215 = vunpack.c.h.b16 %v1379
    %v2216 = vunpack.c.l.b16 %v1380
    %v2217 = vunpack.c.l.b16 %v1381
    %v2218 = vunpack.c.h.b16 %v1381
    %v2219 = vunpack.c.l.b16 %v1382
    %v2220 = vunpack.c.h.b16 %v1382
    %v2221 = vunpack.c.l.b16 %v1383
    %v2222 = vunpack.c.l.b16 %v1384
    %v2223 = vunpack.c.h.b16 %v1384
    %v2224 = vunpack.c.l.b16 %v1385
    %v2225 = vunpack.c.h.b16 %v1385
    %v2226 = vunpack.c.l.b16 %v1386
    %v2227 = vunpack.c.l.b16 %v1387
    %v2228 = vunpack.c.h.b16 %v1387
    %v2229 = vunpack.c.l.b16 %v1388
    %v2230 = vunpack.c.h.b16 %v1388
    %v2231 = vunpack.c.l.b16 %v1389
    %v2232 = vunpack.c.l.b16 %v1390
    %v2233 = vunpack.c.h.b16 %v1390
    %v2234 = vunpack.c.l.b16 %v1391
    %v2235 = vunpack.c.h.b16 %v1391
    %v2236 = vunpack.c.l.b16 %v1392
    %v2237 = vunpack.c.l.b16 %v1393
    %v2238 = vunpack.c.h.b16 %v1393
    %v2239 = vunpack.c.l.b16 %v1394
    %v2240 = vunpack.c.h.b16 %v1394
    %v2241 = vunpack.c.l.b16 %v1395
    %v2242 = vunpack.c.l.b16 %v1396
    %v2243 = vunpack.c.h.b16 %v1396
    %v2244 = vunpack.c.l.b16 %v1397
    %v2245 = vunpack.c.h.b16 %v1397
    %v2246 = vunpack.c.l.b16 %v1398
    %v2247 = vunpack.c.l.b16 %v1399
    %v2248 = vunpack.c.h.b16 %v1399
    %v2249 = vunpack.c.l.b16 %v1400
    %v2250 = vunpack.c.h.b16 %v1400
    %v2251 = vunpack.c.l.b16 %v1401
    %v2252 = vunpack.c.l.b16 %v1402
    %v2253 = vunpack.c.h.b16 %v1402
    %v2254 = vunpack.c.l.b16 %v1403
    %v2255 = vunpack.c.h.b16 %v1403
    %v2256 = vunpack.c.l.b16 %v1404
    %v2257 = vunpack.c.l.b16 %v1405
    %v2258 = vunpack.c.h.b16 %v1405
    %v2259 = vunpack.c.l.b16 %v1406
    %v2260 = vunpack.c.h.b16 %v1406
    %v2261 = vunpack.c.l.b16 %v1407
    %v2262 = vunpack.c.l.b16 %v1408
    %v2263 = vunpack.c.h.b16 %v1408
    %v2264 = vunpack.c.l.b16 %v1409
    %v2265 = vunpack.c.h.b16 %v1409
    %v2266 = vunpack.c.l.b16 %v1410
    %v2267 = vunpack.c.l.b16 %v1411
    %v2268 = vunpack.c.h.b16 %v1411
    %v2269 = vunpack.c.l.b16 %v1412
    %v2270 = vunpack.c.h.b16 %v1412
    %v2271 = vunpack.c.l.b16 %v1413
    %v2272 = vunpack.c.l.b16 %v1414
    %v2273 = vunpack.c.h.b16 %v1414
    %v2274 = vunpack.c.l.b16 %v1415
    %v2275 = vunpack.c.h.b16 %v1415
    %v2276 = vunpack.c.l.b16 %v1416
    %v2277 = vunpack.c.l.b16 %v1417
    %v2278 = vunpack.c.h.b16 %v1417
    %v2279 = vunpack.c.l.b16 %v1418
    %v2280 = vunpack.c.h.b16 %v1418
    %v2281 = vunpack.c.l.b16 %v1419
    %v2282 = vunpack.c.l.b16 %v1420
    %v2283 = vunpack.c.h.b16 %v1420
    %v2284 = vunpack.c.l.b16 %v1421
    %v2285 = vunpack.c.h.b16 %v1421
    %v2286 = vunpack.c.l.b16 %v1422
    %v2287 = vunpack.c.l.b16 %v1423
    %v2288 = vunpack.c.h.b16 %v1423
    %v2289 = vunpack.c.l.b16 %v1424
    %v2290 = vunpack.c.h.b16 %v1424
    %v2291 = vunpack.c.l.b16 %v1425
    %v2292 = vunpack.c.l.b16 %v1426
    %v2293 = vunpack.c.h.b16 %v1426
    %v2294 = vunpack.c.l.b16 %v1427
    %v2295 = vunpack.c.h.b16 %v1427
    %v2296 = vunpack.c.l.b16 %v1428
    %v2297 = vunpack.c.l.b16 %v1429
    %v2298 = vunpack.c.h.b16 %v1429
    %v2299 = vunpack.c.l.b16 %v1430
    %v2300 = vunpack.c.h.b16 %v1430
    %v2301 = vunpack.c.l.b16 %v1431
    %v2302 = vunpack.c.l.b16 %v1432
    %v2303 = vunpack.c.h.b16 %v1432
    %v2304 = vunpack.c.l.b16 %v1433
    %v2305 = vunpack.c.h.b16 %v1433
    %v2306 = vunpack.c.l.b16 %v1434
    %v2307 = vunpack.c.l.b16 %v1435
    %v2308 = vunpack.c.h.b16 %v1435
    %v2309 = vunpack.c.l.b16 %v1436
    %v2310 = vunpack.c.h.b16 %v1436
    %v2311 = vunpack.c.l.b16 %v1437
    %v2312 = vunpack.c.l.b16 %v1438
    %v2313 = vunpack.c.h.b16 %v1438
    %v2314 = vunpack.c.l.b16 %v1439
    %v2315 = vunpack.c.h.b16 %v1439
    %v2316 = vunpack.c.l.b16 %v1440
    %v2317 = vunpack.c.l.b16 %v1441
    %v2318 = vunpack.c.h.b16 %v1441
    %v2319 = vunpack.c.l.b16 %v1442
    %v2320 = vunpack.c.h.b16 %v1442
    %v2321 = vunpack.c.l.b16 %v1443
    %v2322 = vunpack.c.l.b16 %v1444
    %v2323 = vunpack.c.h.b16 %v1444
    %v2324 = vunpack.c.l.b16 %v1445
    %v2325 = vunpack.c.h.b16 %v1445
    %v2326 = vunpack.c.l.b16 %v1446
    %v2327 = vunpack.c.l.b16 %v1447
    %v2328 = vunpack.c.h.b16 %v1447
    %v2329 = vunpack.c.l.b16 %v1448
    %v2330 = vunpack.c.h.b16 %v1448
    %v2331 = vunpack.c.l.b16 %v1449
    %v2332 = vunpack.c.l.b16 %v1450
    %v2333 = vunpack.c.h.b16 %v1450
    %v2334 = vunpack.c.l.b16 %v1451
    %v2335 = vunpack.c.h.b16 %v1451
    %v2336 = vunpack.c.l.b16 %v1452
    %v2337 = vunpack.c.l.b16 %v1453
    %v2338 = vunpack.c.h.b16 %v1453
    %v2339 = vunpack.c.l.b16 %v1454
    %v2340 = vunpack.c.h.b16 %v1454
    %v2341 = vunpack.c.l.b16 %v1455
    %v2342 = vunpack.c.l.b16 %v1456
    %v2343 = vunpack.c.h.b16 %v1456
    %v2344 = vunpack.c.l.b16 %v1457
    %v2345 = vunpack.c.h.b16 %v1457
    %v2346 = vunpack.c.l.b16 %v1458
    %v2347 = vunpack.c.l.b16 %v1459
    %v2348 = vunpack.c.h.b16 %v1459
    %v2349 = vunpack.c.l.b16 %v1460
    %v2350 = vunpack.c.h.b16 %v1460
    %v2351 = vunpack.c.l.b16 %v1461
    %v2352 = vunpack.c.l.b16 %v1462
    %v2353 = vunpack.c.h.b16 %v1462
    %v2354 = vunpack.c.l.b16 %v1463
    %v2355 = vunpack.c.h.b16 %v1463
    %v2356 = vunpack.c.l.b16 %v1464
    %v2357 = vunpack.c.l.b16 %v1465
    %v2358 = vunpack.c.h.b16 %v1465
    %v2359 = vunpack.c.l.b16 %v1466
    %v2360 = vunpack.c.h.b16 %v1466
    %v2361 = vunpack.c.l.b16 %v1467
    %v2362 = vunpack.c.l.b16 %v1468
    %v2363 = vunpack.c.h.b16 %v1468
    %v2364 = vunpack.c.l.b16 %v1469
    %v2365 = vunpack.c.h.b16 %v1469
    %v2366 = vunpack.c.l.b16 %v1470
    %v2367 = vunpack.c.l.b16 %v1471
    %v2368 = vunpack.c.h.b16 %v1471
    %v2369 = vunpack.c.l.b16 %v1472
    %v2370 = vunpack.c.h.b16 %v1472
    %v2371 = vunpack.c.l.b16 %v1473
    %v2372 = vunpack.c.l.b16 %v1474
    %v2373 = vunpack.c.h.b16 %v1474
    %v2374 = vunpack.c.l.b16 %v1475
    %v2375 = vunpack.c.h.b16 %v1475
    %v2376 = vunpack.c.l.b16 %v1476
    %v2377 = vunpack.c.l.b16 %v1477
    %v2378 = vunpack.c.h.b16 %v1477
    %v2379 = vunpack.c.l.b16 %v1478
    %v2380 = vunpack.c.h.b16 %v1478
    %v2381 = vunpack.c.l.b16 %v1479
    %v2382 = vunpack.c.l.b16 %v1480
    %v2383 = vunpack.c.h.b16 %v1480
    %v2384 = vunpack.c.l.b16 %v1481
    %v2385 = vunpack.c.h.b16 %v1481
    %v2386 = vunpack.c.l.b16 %v1482
    %v2387 = vunpack.c.l.b16 %v1483
    %v2388 = vunpack.c.h.b16 %v1483
    %v2389 = vunpack.c.l.b16 %v1484
    %v2390 = vunpack.c.h.b16 %v1484
    %v2391 = vunpack.c.l.b16 %v1485
    %v2392 = vunpack.c.l.b16 %v1486
    %v2393 = vunpack.c.h.b16 %v1486
    %v2394 = vunpack.c.l.b16 %v1487
    %v2395 = vunpack.c.h.b16 %v1487
    %v2396 = vunpack.c.l.b16 %v1488
    %v2397 = vpack.c.b16 %v1842, %v1837
    %v2398 = vpack.c.b16 %v1843, %v1838
    %v2399 = vpack.c.b16 %v1844, %v1839
    %v2400 = vpack.c.b16 %v1845, %v1840
    %v2401 = vpack.c.b16 %v1846, %v1841
    %v2402 = vpack.c.b16 %v1852, %v1847
    %v2403 = vpack.c.b16 %v1853, %v1848
    %v2404 = vpack.c.b16 %v1854, %v1849
    %v2405 = vpack.c.b16 %v1855, %v1850
    %v2406 = vpack.c.b16 %v1856, %v1851
    %v2407 = vpack.c.b16 %v1862, %v1857
    %v2408 = vpack.c.b16 %v1863, %v1858
    %v2409 = vpack.c.b16 %v1864, %v1859
    %v2410 = vpack.c.b16 %v1865, %v1860
    %v2411 = vpack.c.b16 %v1866, %v1861
    %v2412 = vpack.c.b16 %v1872, %v1867
    %v2413 = vpack.c.b16 %v1873, %v1868
    %v2414 = vpack.c.b16 %v1874, %v1869
    %v2415 = vpack.c.b16 %v1875, %v1870
    %v2416 = vpack.c.b16 %v1876, %v1871
    %v2417 = vpack.c.b16 %v1882, %v1877
    %v2418 = vpack.c.b16 %v1883, %v1878
    %v2419 = vpack.c.b16 %v1884, %v1879
    %v2420 = vpack.c.b16 %v1885, %v1880
    %v2421 = vpack.c.b16 %v1886, %v1881
    %v2422 = vpack.c.b16 %v1892, %v1887
    %v2423 = vpack.c.b16 %v1893, %v1888
    %v2424 = vpack.c.b16 %v1894, %v1889
    %v2425 = vpack.c.b16 %v1895, %v1890
    %v2426 = vpack.c.b16 %v1896, %v1891
    %v2427 = vpack.c.b16 %v1902, %v1897
    %v2428 = vpack.c.b16 %v1903, %v1898
    %v2429 = vpack.c.b16 %v1904, %v1899
    %v2430 = vpack.c.b16 %v1905, %v1900
    %v2431 = vpack.c.b16 %v1906, %v1901
    %v2432 = vpack.c.b16 %v1912, %v1907
    %v2433 = vpack.c.b16 %v1913, %v1908
    %v2434 = vpack.c.b16 %v1914, %v1909
    %v2435 = vpack.c.b16 %v1915, %v1910
    %v2436 = vpack.c.b16 %v1916, %v1911
    %v2437 = vpack.c.b16 %v1922, %v1917
    %v2438 = vpack.c.b16 %v1923, %v1918
    %v2439 = vpack.c.b16 %v1924, %v1919
    %v2440 = vpack.c.b16 %v1925, %v1920
    %v2441 = vpack.c.b16 %v1926, %v1921
    %v2442 = vpack.c.b16 %v1932, %v1927
    %v2443 = vpack.c.b16 %v1933, %v1928
    %v2444 = vpack.c.b16 %v1934, %v1929
    %v2445 = vpack.c.b16 %v1935, %v1930
    %v2446 = vpack.c.b16 %v1936, %v1931
    %v2447 = vpack.c.b16 %v1942, %v1937
    %v2448 = vpack.c.b16 %v1943, %v1938
    %v2449 = vpack.c.b16 %v1944, %v1939
    %v2450 = vpack.c.b16 %v1945, %v1940
    %v2451 = vpack.c.b16 %v1946, %v1941
    %v2452 = vpack.c.b16 %v1952, %v1947
    %v2453 = vpack.c.b16 %v1953, %v1948
    %v2454 = vpack.c.b16 %v1954, %v1949
    %v2455 = vpack.c.b16 %v1955, %v1950
    %v2456 = vpack.c.b16 %v1956, %v1951
    %v2457 = vpack.c.b16 %v1962, %v1957
    %v2458 = vpack.c.b16 %v1963, %v1958
    %v2459 = vpack.c.b16 %v1964, %v1959
    %v2460 = vpack.c.b16 %v1965, %v1960
    %v2461 = vpack.c.b16 %v1966, %v1961
    %v2462 = vpack.c.b16 %v1972, %v1967
    %v2463 = vpack.c.b16 %v1973, %v1968
    %v2464 = vpack.c.b16 %v1974, %v1969
    %v2465 = vpack.c.b16 %v1975, %v1970
    %v2466 = vpack.c.b16 %v1976, %v1971
    %v2467 = vpack.c.b16 %v1982, %v1977
    %v2468 = vpack.c.b16 %v1983, %v1978
    %v2469 = vpack.c.b16 %v1984, %v1979
    %v2470 = vpack.c.b16 %v1985, %v1980
    %v2471 = vpack.c.b16 %v1986, %v1981
    %v2472 = vpack.c.b16 %v1992, %v1987
    %v2473 = vpack.c.b16 %v1993, %v1988
    %v2474 = vpack.c.b16 %v1994, %v1989
    %v2475 = vpack.c.b16 %v1995, %v1990
    %v2476 = vpack.c.b16 %v1996, %v1991
    %v2477 = vpack.c.b16 %v2002, %v1997
    %v2478 = vpack.c.b16 %v2003, %v1998
    %v2479 = vpack.c.b16 %v2004, %v1999
    %v2480 = vpack.c.b16 %v2005, %v2000
    %v2481 = vpack.c.b16 %v2006, %v2001
    %v2482 = vpack.c.b16 %v2012, %v2007
    %v2483 = vpack.c.b16 %v2013, %v2008
    %v2484 = vpack.c.b16 %v2014, %v2009
    %v2485 = vpack.c.b16 %v2015, %v2010
    %v2486 = vpack.c.b16 %v2016, %v2011
    %v2487 = vpack.c.b16 %v2022, %v2017
    %v2488 = vpack.c.b16 %v2023, %v2018
    %v2489 = vpack.c.b16 %v2024, %v2019
    %v2490 = vpack.c.b16 %v2025, %v2020
    %v2491 = vpack.c.b16 %v2026, %v2021
    %v2492 = vpack.c.b16 %v2032, %v2027
    %v2493 = vpack.c.b16 %v2033, %v2028
    %v2494 = vpack.c.b16 %v2034, %v2029
    %v2495 = vpack.c.b16 %v2035, %v2030
    %v2496 = vpack.c.b16 %v2036, %v2031
    %v2497 = vpack.c.b16 %v2042, %v2037
    %v2498 = vpack.c.b16 %v2043, %v2038
    %v2499 = vpack.c.b16 %v2044, %v2039
    %v2500 = vpack.c.b16 %v2045, %v2040
    %v2501 = vpack.c.b16 %v2046, %v2041
    %v2502 = vpack.c.b16 %v2052, %v2047
    %v2503 = vpack.c.b16 %v2053, %v2048
    %v2504 = vpack.c.b16 %v2054, %v2049
    %v2505 = vpack.c.b16 %v2055, %v2050
    %v2506 = vpack.c.b16 %v2056, %v2051
    %v2507 = vpack.c.b16 %v2062, %v2057
    %v2508 = vpack.c.b16 %v2063, %v2058
    %v2509 = vpack.c.b16 %v2064, %v2059
    %v2510 = vpack.c.b16 %v2065, %v2060
    %v2511 = vpack.c.b16 %v2066, %v2061
    %v2512 = vpack.c.b16 %v2072, %v2067
    %v2513 = vpack.c.b16 %v2073, %v2068
    %v2514 = vpack.c.b16 %v2074, %v2069
    %v2515 = vpack.c.b16 %v2075, %v2070
    %v2516 = vpack.c.b16 %v2076, %v2071
    %v2517 = vpack.c.b16 %v2082, %v2077
    %v2518 = vpack.c.b16 %v2083, %v2078
    %v2519 = vpack.c.b16 %v2084, %v2079
    %v2520 = vpack.c.b16 %v2085, %v2080
    %v2521 = vpack.c.b16 %v2086, %v2081
    %v2522 = vpack.c.b16 %v2092, %v2087
    %v2523 = vpack.c.b16 %v2093, %v2088
    %v2524 = vpack.c.b16 %v2094, %v2089
    %v2525 = vpack.c.b16 %v2095, %v2090
    %v2526 = vpack.c.b16 %v2096, %v2091
    %v2527 = vpack.c.b16 %v2102, %v2097
    %v2528 = vpack.c.b16 %v2103, %v2098
    %v2529 = vpack.c.b16 %v2104, %v2099
    %v2530 = vpack.c.b16 %v2105, %v2100
    %v2531 = vpack.c.b16 %v2106, %v2101
    %v2532 = vpack.c.b16 %v2112, %v2107
    %v2533 = vpack.c.b16 %v2113, %v2108
    %v2534 = vpack.c.b16 %v2114, %v2109
    %v2535 = vpack.c.b16 %v2115, %v2110
    %v2536 = vpack.c.b16 %v2116, %v2111
    %v2537 = vpack.c.b16 %v2122, %v2117
    %v2538 = vpack.c.b16 %v2123, %v2118
    %v2539 = vpack.c.b16 %v2124, %v2119
    %v2540 = vpack.c.b16 %v2125, %v2120
    %v2541 = vpack.c.b16 %v2126, %v2121
    %v2542 = vpack.c.b16 %v2132, %v2127
    %v2543 = vpack.c.b16 %v2133, %v2128
    %v2544 = vpack.c.b16 %v2134, %v2129
    %v2545 = vpack.c.b16 %v2135, %v2130
    %v2546 = vpack.c.b16 %v2136, %v2131
    %v2547 = vpack.c.b16 %v2142, %v2137
    %v2548 = vpack.c.b16 %v2143, %v2138
    %v2549 = vpack.c.b16 %v2144, %v2139
    %v2550 = vpack.c.b16 %v2145, %v2140
    %v2551 = vpack.c.b16 %v2146, %v2141
    %v2552 = vpack.c.b16 %v2152, %v2147
    %v2553 = vpack.c.b16 %v2153, %v2148
    %v2554 = vpack.c.b16 %v2154, %v2149
    %v2555 = vpack.c.b16 %v2155, %v2150
    %v2556 = vpack.c.b16 %v2156, %v2151
    %v2557 = vpack.c.b16 %v2162, %v2157
    %v2558 = vpack.c.b16 %v2163, %v2158
    %v2559 = vpack.c.b16 %v2164, %v2159
    %v2560 = vpack.c.b16 %v2165, %v2160
    %v2561 = vpack.c.b16 %v2166, %v2161
    %v2562 = vpack.c.b16 %v2172, %v2167
    %v2563 = vpack.c.b16 %v2173, %v2168
    %v2564 = vpack.c.b16 %v2174, %v2169
    %v2565 = vpack.c.b16 %v2175, %v2170
    %v2566 = vpack.c.b16 %v2176, %v2171
    %v2567 = vpack.c.b16 %v2182, %v2177
    %v2568 = vpack.c.b16 %v2183, %v2178
    %v2569 = vpack.c.b16 %v2184, %v2179
    %v2570 = vpack.c.b16 %v2185, %v2180
    %v2571 = vpack.c.b16 %v2186, %v2181
    %v2572 = vpack.c.b16 %v2192, %v2187
    %v2573 = vpack.c.b16 %v2193, %v2188
    %v2574 = vpack.c.b16 %v2194, %v2189
    %v2575 = vpack.c.b16 %v2195, %v2190
    %v2576 = vpack.c.b16 %v2196, %v2191
    %v2577 = vpack.c.b16 %v2202, %v2197
    %v2578 = vpack.c.b16 %v2203, %v2198
    %v2579 = vpack.c.b16 %v2204, %v2199
    %v2580 = vpack.c.b16 %v2205, %v2200
    %v2581 = vpack.c.b16 %v2206, %v2201
    %v2582 = vpack.c.b16 %v2212, %v2207
    %v2583 = vpack.c.b16 %v2213, %v2208
    %v2584 = vpack.c.b16 %v2214, %v2209
    %v2585 = vpack.c.b16 %v2215, %v2210
    %v2586 = vpack.c.b16 %v2216, %v2211
    %v2587 = vpack.c.b16 %v2222, %v2217
    %v2588 = vpack.c.b16 %v2223, %v2218
    %v2589 = vpack.c.b16 %v2224, %v2219
    %v2590 = vpack.c.b16 %v2225, %v2220
    %v2591 = vpack.c.b16 %v2226, %v2221
    %v2592 = vpack.c.b16 %v2232, %v2227
    %v2593 = vpack.c.b16 %v2233, %v2228
    %v2594 = vpack.c.b16 %v2234, %v2229
    %v2595 = vpack.c.b16 %v2235, %v2230
    %v2596 = vpack.c.b16 %v2236, %v2231
    %v2597 = vpack.c.b16 %v2242, %v2237
    %v2598 = vpack.c.b16 %v2243, %v2238
    %v2599 = vpack.c.b16 %v2244, %v2239
    %v2600 = vpack.c.b16 %v2245, %v2240
    %v2601 = vpack.c.b16 %v2246, %v2241
    %v2602 = vpack.c.b16 %v2252, %v2247
    %v2603 = vpack.c.b16 %v2253, %v2248
    %v2604 = vpack.c.b16 %v2254, %v2249
    %v2605 = vpack.c.b16 %v2255, %v2250
    %v2606 = vpack.c.b16 %v2256, %v2251
    %v2607 = vpack.c.b16 %v2262, %v2257
    %v2608 = vpack.c.b16 %v2263, %v2258
    %v2609 = vpack.c.b16 %v2264, %v2259
    %v2610 = vpack.c.b16 %v2265, %v2260
    %v2611 = vpack.c.b16 %v2266, %v2261
    %v2612 = vpack.c.b16 %v2272, %v2267
    %v2613 = vpack.c.b16 %v2273, %v2268
    %v2614 = vpack.c.b16 %v2274, %v2269
    %v2615 = vpack.c.b16 %v2275, %v2270
    %v2616 = vpack.c.b16 %v2276, %v2271
    %v2617 = vpack.c.b16 %v2282, %v2277
    %v2618 = vpack.c.b16 %v2283, %v2278
    %v2619 = vpack.c.b16 %v2284, %v2279
    %v2620 = vpack.c.b16 %v2285, %v2280
    %v2621 = vpack.c.b16 %v2286, %v2281
    %v2622 = vpack.c.b16 %v2292, %v2287
    %v2623 = vpack.c.b16 %v2293, %v2288
    %v2624 = vpack.c.b16 %v2294, %v2289
    %v2625 = vpack.c.b16 %v2295, %v2290
    %v2626 = vpack.c.b16 %v2296, %v2291
    %v2627 = vpack.c.b16 %v2302, %v2297
    %v2628 = vpack.c.b16 %v2303, %v2298
    %v2629 = vpack.c.b16 %v2304, %v2299
    %v2630 = vpack.c.b16 %v2305, %v2300
    %v2631 = vpack.c.b16 %v2306, %v2301
    %v2632 = vpack.c.b16 %v2312, %v2307
    %v2633 = vpack.c.b16 %v2313, %v2308
    %v2634 = vpack.c.b16 %v2314, %v2309
    %v2635 = vpack.c.b16 %v2315, %v2310
    %v2636 = vpack.c.b16 %v2316, %v2311
    %v2637 = vpack.c.b16 %v2322, %v2317
    %v2638 = vpack.c.b16 %v2323, %v2318
    %v2639 = vpack.c.b16 %v2324, %v2319
    %v2640 = vpack.c.b16 %v2325, %v2320
    %v2641 = vpack.c.b16 %v2326, %v2321
    %v2642 = vpack.c.b16 %v2332, %v2327
    %v2643 = vpack.c.b16 %v2333, %v2328
    %v2644 = vpack.c.b16 %v2334, %v2329
    %v2645 = vpack.c.b16 %v2335, %v2330
    %v2646 = vpack.c.b16 %v2336, %v2331
    %v2647 = vpack.c.b16 %v2342, %v2337
    %v2648 = vpack.c.b16 %v2343, %v2338
    %v2649 = vpack.c.b16 %v2344, %v2339
    %v2650 = vpack.c.b16 %v2345, %v2340
    %v2651 = vpack.c.b16 %v2346, %v2341
    %v2652 = vpack.c.b16 %v2352, %v2347
    %v2653 = vpack.c.b16 %v2353, %v2348
    %v2654 = vpack.c.b16 %v2354, %v2349
    %v2655 = vpack.c.b16 %v2355, %v2350
    %v2656 = vpack.c.b16 %v2356, %v2351
    %v2657 = vpack.c.b16 %v2362, %v2357
    %v2658 = vpack.c.b16 %v2363, %v2358
    %v2659 = vpack.c.b16 %v2364, %v2359
    %v2660 = vpack.c.b16 %v2365, %v2360
    %v2661 = vpack.c.b16 %v2366, %v2361
    %v2662 = vpack.c.b16 %v2372, %v2367
    %v2663 = vpack.c.b16 %v2373, %v2368
    %v2664 = vpack.c.b16 %v2374, %v2369
    %v2665 = vpack.c.b16 %v2375, %v2370
    %v2666 = vpack.c.b16 %v2376, %v2371
    %v2667 = vpack.c.b16 %v2382, %v2377
    %v2668 = vpack.c.b16 %v2383, %v2378
    %v2669 = vpack.c.b16 %v2384, %v2379
    %v2670 = vpack.c.b16 %v2385, %v2380
    %v2671 = vpack.c.b16 %v2386, %v2381
    %v2672 = vpack.c.b16 %v2392, %v2387
    %v2673 = vpack.c.b16 %v2393, %v2388
    %v2674 = vpack.c.b16 %v2394, %v2389
    %v2675 = vpack.c.b16 %v2395, %v2390
    %v2676 = vpack.c.b16 %v2396, %v2391
    %2957 = vmatpush.bf16.msra.mxu0 %v2432
    %2958 = vmatpush.bf16.msra.mxu0 %v2427
    %2959 = vmatpush.bf16.msra.mxu0 %v2422
    %2960 = vmatpush.bf16.msra.mxu0 %v2417
    %2961 = vmatpush.bf16.msra.mxu0 %v2412
    %2962 = vmatpush.bf16.msra.mxu0 %v2407
    %2963 = vmatpush.bf16.msra.mxu0 %v2402
    %2964 = vmatpush.bf16.msra.mxu0 %v2397
    %2965 = vmatmul.bf16.gmra.mxu0 %v1146
    %v2966 = vpop.f32.mrf.mxu0
    %v2967 = vadd.f32 %v1491, %v2966
    %v2968 = vpop.f32.mrf.mxu0
    %2969 = vdwg.mxu0
    %2970 = vmatpush.bf16.msra.mxu0 %v2472
    %2971 = vmatpush.bf16.msra.mxu0 %v2467
    %2972 = vmatpush.bf16.msra.mxu0 %v2462
    %2973 = vmatpush.bf16.msra.mxu0 %v2457
    %2974 = vmatpush.bf16.msra.mxu0 %v2452
    %2975 = vmatpush.bf16.msra.mxu0 %v2447
    %2976 = vmatpush.bf16.msra.mxu0 %v2442
    %2977 = vmatpush.bf16.msra.mxu0 %v2437
    %2978 = vmatmul.bf16.gmra.mxu0 %v1147
    %v2979 = vpop.f32.mrf.mxu0
    %v2980 = vadd.f32 %v2967, %v2979
    %v2981 = vpop.f32.mrf.mxu0
    %2982 = vdwg.mxu0
    %2983 = vmatpush.bf16.msra.mxu0 %v2512
    %2984 = vmatpush.bf16.msra.mxu0 %v2507
    %2985 = vmatpush.bf16.msra.mxu0 %v2502
    %2986 = vmatpush.bf16.msra.mxu0 %v2497
    %2987 = vmatpush.bf16.msra.mxu0 %v2492
    %2988 = vmatpush.bf16.msra.mxu0 %v2487
    %2989 = vmatpush.bf16.msra.mxu0 %v2482
    %2990 = vmatpush.bf16.msra.mxu0 %v2477
    %2991 = vmatmul.bf16.gmra.mxu0 %v1148
    %v2992 = vpop.f32.mrf.mxu0
    %v2993 = vadd.f32 %v2980, %v2992
    %v2994 = vpop.f32.mrf.mxu0
    %2995 = vdwg.mxu0
    %2996 = vmatpush.bf16.msra.mxu0 %v2552
    %2997 = vmatpush.bf16.msra.mxu0 %v2547
    %2998 = vmatpush.bf16.msra.mxu0 %v2542
    %2999 = vmatpush.bf16.msra.mxu0 %v2537
    %3000 = vmatpush.bf16.msra.mxu0 %v2532
    %3001 = vmatpush.bf16.msra.mxu0 %v2527
    %3002 = vmatpush.bf16.msra.mxu0 %v2522
    %3003 = vmatpush.bf16.msra.mxu0 %v2517
    %3004 = vmatmul.bf16.gmra.mxu0 %v1149
    %v3005 = vpop.f32.mrf.mxu0
    %v3006 = vadd.f32 %v2993, %v3005
    %v3007 = vpop.f32.mrf.mxu0
    %3008 = vdwg.mxu0
    %3009 = vmatpush.bf16.msra.mxu0 %v2592
    %3010 = vmatpush.bf16.msra.mxu0 %v2587
    %3011 = vmatpush.bf16.msra.mxu0 %v2582
    %3012 = vmatpush.bf16.msra.mxu0 %v2577
    %3013 = vmatpush.bf16.msra.mxu0 %v2572
    %3014 = vmatpush.bf16.msra.mxu0 %v2567
    %3015 = vmatpush.bf16.msra.mxu0 %v2562
    %3016 = vmatpush.bf16.msra.mxu0 %v2557
    %3017 = vmatmul.bf16.gmra.mxu0 %v1150
    %v3018 = vpop.f32.mrf.mxu0
    %v3019 = vadd.f32 %v3006, %v3018
    %v3020 = vpop.f32.mrf.mxu0
    %3021 = vdwg.mxu0
    %3022 = vmatpush.bf16.msra.mxu0 %v2632
    %3023 = vmatpush.bf16.msra.mxu0 %v2627
    %3024 = vmatpush.bf16.msra.mxu0 %v2622
    %3025 = vmatpush.bf16.msra.mxu0 %v2617
    %3026 = vmatpush.bf16.msra.mxu0 %v2612
    %3027 = vmatpush.bf16.msra.mxu0 %v2607
    %3028 = vmatpush.bf16.msra.mxu0 %v2602
    %3029 = vmatpush.bf16.msra.mxu0 %v2597
    %3030 = vmatmul.bf16.gmra.mxu0 %v1151
    %v3031 = vpop.f32.mrf.mxu0
    %v3032 = vadd.f32 %v3019, %v3031
    %v3033 = vpop.f32.mrf.mxu0
    %3034 = vdwg.mxu0
    %3035 = vmatpush.bf16.msra.mxu0 %v2672
    %3036 = vmatpush.bf16.msra.mxu0 %v2667
    %3037 = vmatpush.bf16.msra.mxu0 %v2662
    %3038 = vmatpush.bf16.msra.mxu0 %v2657
    %3039 = vmatpush.bf16.msra.mxu0 %v2652
    %3040 = vmatpush.bf16.msra.mxu0 %v2647
    %3041 = vmatpush.bf16.msra.mxu0 %v2642
    %3042 = vmatpush.bf16.msra.mxu0 %v2637
    %3043 = vmatmul.bf16.gmra.mxu0 %v1152
    %v3044 = vpop.f32.mrf.mxu0
    %v3045 = vadd.f32 %v3032, %v3044
    %v3046 = vpop.f32.mrf.mxu0
    %3047 = vdwg.mxu0
    %3048 = vmatpush.bf16.msra.mxu0 %v2433
    %3049 = vmatpush.bf16.msra.mxu0 %v2428
    %3050 = vmatpush.bf16.msra.mxu0 %v2423
    %3051 = vmatpush.bf16.msra.mxu0 %v2418
    %3052 = vmatpush.bf16.msra.mxu0 %v2413
    %3053 = vmatpush.bf16.msra.mxu0 %v2408
    %3054 = vmatpush.bf16.msra.mxu0 %v2403
    %3055 = vmatpush.bf16.msra.mxu0 %v2398
    %3056 = vmatmul.bf16.gmra.mxu0 %v1146
    %v3057 = vpop.f32.mrf.mxu0
    %v3058 = vadd.f32 %v1492, %v3057
    %v3059 = vpop.f32.mrf.mxu0
    %3060 = vdwg.mxu0
    %3061 = vmatpush.bf16.msra.mxu0 %v2473
    %3062 = vmatpush.bf16.msra.mxu0 %v2468
    %3063 = vmatpush.bf16.msra.mxu0 %v2463
    %3064 = vmatpush.bf16.msra.mxu0 %v2458
    %3065 = vmatpush.bf16.msra.mxu0 %v2453
    %3066 = vmatpush.bf16.msra.mxu0 %v2448
    %3067 = vmatpush.bf16.msra.mxu0 %v2443
    %3068 = vmatpush.bf16.msra.mxu0 %v2438
    %3069 = vmatmul.bf16.gmra.mxu0 %v1147
    %v3070 = vpop.f32.mrf.mxu0
    %v3071 = vadd.f32 %v3058, %v3070
    %v3072 = vpop.f32.mrf.mxu0
    %3073 = vdwg.mxu0
    %3074 = vmatpush.bf16.msra.mxu0 %v2513
    %3075 = vmatpush.bf16.msra.mxu0 %v2508
    %3076 = vmatpush.bf16.msra.mxu0 %v2503
    %3077 = vmatpush.bf16.msra.mxu0 %v2498
    %3078 = vmatpush.bf16.msra.mxu0 %v2493
    %3079 = vmatpush.bf16.msra.mxu0 %v2488
    %3080 = vmatpush.bf16.msra.mxu0 %v2483
    %3081 = vmatpush.bf16.msra.mxu0 %v2478
    %3082 = vmatmul.bf16.gmra.mxu0 %v1148
    %v3083 = vpop.f32.mrf.mxu0
    %v3084 = vadd.f32 %v3071, %v3083
    %v3085 = vpop.f32.mrf.mxu0
    %3086 = vdwg.mxu0
    %3087 = vmatpush.bf16.msra.mxu0 %v2553
    %3088 = vmatpush.bf16.msra.mxu0 %v2548
    %3089 = vmatpush.bf16.msra.mxu0 %v2543
    %3090 = vmatpush.bf16.msra.mxu0 %v2538
    %3091 = vmatpush.bf16.msra.mxu0 %v2533
    %3092 = vmatpush.bf16.msra.mxu0 %v2528
    %3093 = vmatpush.bf16.msra.mxu0 %v2523
    %3094 = vmatpush.bf16.msra.mxu0 %v2518
    %3095 = vmatmul.bf16.gmra.mxu0 %v1149
    %v3096 = vpop.f32.mrf.mxu0
    %v3097 = vadd.f32 %v3084, %v3096
    %v3098 = vpop.f32.mrf.mxu0
    %3099 = vdwg.mxu0
    %3100 = vmatpush.bf16.msra.mxu0 %v2593
    %3101 = vmatpush.bf16.msra.mxu0 %v2588
    %3102 = vmatpush.bf16.msra.mxu0 %v2583
    %3103 = vmatpush.bf16.msra.mxu0 %v2578
    %3104 = vmatpush.bf16.msra.mxu0 %v2573
    %3105 = vmatpush.bf16.msra.mxu0 %v2568
    %3106 = vmatpush.bf16.msra.mxu0 %v2563
    %3107 = vmatpush.bf16.msra.mxu0 %v2558
    %3108 = vmatmul.bf16.gmra.mxu0 %v1150
    %v3109 = vpop.f32.mrf.mxu0
    %v3110 = vadd.f32 %v3097, %v3109
    %v3111 = vpop.f32.mrf.mxu0
    %3112 = vdwg.mxu0
    %3113 = vmatpush.bf16.msra.mxu0 %v2633
    %3114 = vmatpush.bf16.msra.mxu0 %v2628
    %3115 = vmatpush.bf16.msra.mxu0 %v2623
    %3116 = vmatpush.bf16.msra.mxu0 %v2618
    %3117 = vmatpush.bf16.msra.mxu0 %v2613
    %3118 = vmatpush.bf16.msra.mxu0 %v2608
    %3119 = vmatpush.bf16.msra.mxu0 %v2603
    %3120 = vmatpush.bf16.msra.mxu0 %v2598
    %3121 = vmatmul.bf16.gmra.mxu0 %v1151
    %v3122 = vpop.f32.mrf.mxu0
    %v3123 = vadd.f32 %v3110, %v3122
    %v3124 = vpop.f32.mrf.mxu0
    %3125 = vdwg.mxu0
    %3126 = vmatpush.bf16.msra.mxu0 %v2673
    %3127 = vmatpush.bf16.msra.mxu0 %v2668
    %3128 = vmatpush.bf16.msra.mxu0 %v2663
    %3129 = vmatpush.bf16.msra.mxu0 %v2658
    %3130 = vmatpush.bf16.msra.mxu0 %v2653
    %3131 = vmatpush.bf16.msra.mxu0 %v2648
    %3132 = vmatpush.bf16.msra.mxu0 %v2643
    %3133 = vmatpush.bf16.msra.mxu0 %v2638
    %3134 = vmatmul.bf16.gmra.mxu0 %v1152
    %v3135 = vpop.f32.mrf.mxu0
    %v3136 = vadd.f32 %v3123, %v3135
    %v3137 = vpop.f32.mrf.mxu0
    %3138 = vdwg.mxu0
    %3139 = vmatpush.bf16.msra.mxu0 %v2434
    %3140 = vmatpush.bf16.msra.mxu0 %v2429
    %3141 = vmatpush.bf16.msra.mxu0 %v2424
    %3142 = vmatpush.bf16.msra.mxu0 %v2419
    %3143 = vmatpush.bf16.msra.mxu0 %v2414
    %3144 = vmatpush.bf16.msra.mxu0 %v2409
    %3145 = vmatpush.bf16.msra.mxu0 %v2404
    %3146 = vmatpush.bf16.msra.mxu0 %v2399
    %3147 = vmatmul.bf16.gmra.mxu0 %v1146
    %v3148 = vpop.f32.mrf.mxu0
    %v3149 = vadd.f32 %v1493, %v3148
    %v3150 = vpop.f32.mrf.mxu0
    %3151 = vdwg.mxu0
    %3152 = vmatpush.bf16.msra.mxu0 %v2474
    %3153 = vmatpush.bf16.msra.mxu0 %v2469
    %3154 = vmatpush.bf16.msra.mxu0 %v2464
    %3155 = vmatpush.bf16.msra.mxu0 %v2459
    %3156 = vmatpush.bf16.msra.mxu0 %v2454
    %3157 = vmatpush.bf16.msra.mxu0 %v2449
    %3158 = vmatpush.bf16.msra.mxu0 %v2444
    %3159 = vmatpush.bf16.msra.mxu0 %v2439
    %3160 = vmatmul.bf16.gmra.mxu0 %v1147
    %v3161 = vpop.f32.mrf.mxu0
    %v3162 = vadd.f32 %v3149, %v3161
    %v3163 = vpop.f32.mrf.mxu0
    %3164 = vdwg.mxu0
    %3165 = vmatpush.bf16.msra.mxu0 %v2514
    %3166 = vmatpush.bf16.msra.mxu0 %v2509
    %3167 = vmatpush.bf16.msra.mxu0 %v2504
    %3168 = vmatpush.bf16.msra.mxu0 %v2499
    %3169 = vmatpush.bf16.msra.mxu0 %v2494
    %3170 = vmatpush.bf16.msra.mxu0 %v2489
    %3171 = vmatpush.bf16.msra.mxu0 %v2484
    %3172 = vmatpush.bf16.msra.mxu0 %v2479
    %3173 = vmatmul.bf16.gmra.mxu0 %v1148
    %v3174 = vpop.f32.mrf.mxu0
    %v3175 = vadd.f32 %v3162, %v3174
    %v3176 = vpop.f32.mrf.mxu0
    %3177 = vdwg.mxu0
    %3178 = vmatpush.bf16.msra.mxu0 %v2554
    %3179 = vmatpush.bf16.msra.mxu0 %v2549
    %3180 = vmatpush.bf16.msra.mxu0 %v2544
    %3181 = vmatpush.bf16.msra.mxu0 %v2539
    %3182 = vmatpush.bf16.msra.mxu0 %v2534
    %3183 = vmatpush.bf16.msra.mxu0 %v2529
    %3184 = vmatpush.bf16.msra.mxu0 %v2524
    %3185 = vmatpush.bf16.msra.mxu0 %v2519
    %3186 = vmatmul.bf16.gmra.mxu0 %v1149
    %v3187 = vpop.f32.mrf.mxu0
    %v3188 = vadd.f32 %v3175, %v3187
    %v3189 = vpop.f32.mrf.mxu0
    %3190 = vdwg.mxu0
    %3191 = vmatpush.bf16.msra.mxu0 %v2594
    %3192 = vmatpush.bf16.msra.mxu0 %v2589
    %3193 = vmatpush.bf16.msra.mxu0 %v2584
    %3194 = vmatpush.bf16.msra.mxu0 %v2579
    %3195 = vmatpush.bf16.msra.mxu0 %v2574
    %3196 = vmatpush.bf16.msra.mxu0 %v2569
    %3197 = vmatpush.bf16.msra.mxu0 %v2564
    %3198 = vmatpush.bf16.msra.mxu0 %v2559
    %3199 = vmatmul.bf16.gmra.mxu0 %v1150
    %v3200 = vpop.f32.mrf.mxu0
    %v3201 = vadd.f32 %v3188, %v3200
    %v3202 = vpop.f32.mrf.mxu0
    %3203 = vdwg.mxu0
    %3204 = vmatpush.bf16.msra.mxu0 %v2634
    %3205 = vmatpush.bf16.msra.mxu0 %v2629
    %3206 = vmatpush.bf16.msra.mxu0 %v2624
    %3207 = vmatpush.bf16.msra.mxu0 %v2619
    %3208 = vmatpush.bf16.msra.mxu0 %v2614
    %3209 = vmatpush.bf16.msra.mxu0 %v2609
    %3210 = vmatpush.bf16.msra.mxu0 %v2604
    %3211 = vmatpush.bf16.msra.mxu0 %v2599
    %3212 = vmatmul.bf16.gmra.mxu0 %v1151
    %v3213 = vpop.f32.mrf.mxu0
    %v3214 = vadd.f32 %v3201, %v3213
    %v3215 = vpop.f32.mrf.mxu0
    %3216 = vdwg.mxu0
    %3217 = vmatpush.bf16.msra.mxu0 %v2674
    %3218 = vmatpush.bf16.msra.mxu0 %v2669
    %3219 = vmatpush.bf16.msra.mxu0 %v2664
    %3220 = vmatpush.bf16.msra.mxu0 %v2659
    %3221 = vmatpush.bf16.msra.mxu0 %v2654
    %3222 = vmatpush.bf16.msra.mxu0 %v2649
    %3223 = vmatpush.bf16.msra.mxu0 %v2644
    %3224 = vmatpush.bf16.msra.mxu0 %v2639
    %3225 = vmatmul.bf16.gmra.mxu0 %v1152
    %v3226 = vpop.f32.mrf.mxu0
    %v3227 = vadd.f32 %v3214, %v3226
    %v3228 = vpop.f32.mrf.mxu0
    %3229 = vdwg.mxu0
    %3230 = vmatpush.bf16.msra.mxu0 %v2435
    %3231 = vmatpush.bf16.msra.mxu0 %v2430
    %3232 = vmatpush.bf16.msra.mxu0 %v2425
    %3233 = vmatpush.bf16.msra.mxu0 %v2420
    %3234 = vmatpush.bf16.msra.mxu0 %v2415
    %3235 = vmatpush.bf16.msra.mxu0 %v2410
    %3236 = vmatpush.bf16.msra.mxu0 %v2405
    %3237 = vmatpush.bf16.msra.mxu0 %v2400
    %3238 = vmatmul.bf16.gmra.mxu0 %v1146
    %v3239 = vpop.f32.mrf.mxu0
    %v3240 = vadd.f32 %v1494, %v3239
    %v3241 = vpop.f32.mrf.mxu0
    %3242 = vdwg.mxu0
    %3243 = vmatpush.bf16.msra.mxu0 %v2475
    %3244 = vmatpush.bf16.msra.mxu0 %v2470
    %3245 = vmatpush.bf16.msra.mxu0 %v2465
    %3246 = vmatpush.bf16.msra.mxu0 %v2460
    %3247 = vmatpush.bf16.msra.mxu0 %v2455
    %3248 = vmatpush.bf16.msra.mxu0 %v2450
    %3249 = vmatpush.bf16.msra.mxu0 %v2445
    %3250 = vmatpush.bf16.msra.mxu0 %v2440
    %3251 = vmatmul.bf16.gmra.mxu0 %v1147
    %v3252 = vpop.f32.mrf.mxu0
    %v3253 = vadd.f32 %v3240, %v3252
    %v3254 = vpop.f32.mrf.mxu0
    %3255 = vdwg.mxu0
    %3256 = vmatpush.bf16.msra.mxu0 %v2515
    %3257 = vmatpush.bf16.msra.mxu0 %v2510
    %3258 = vmatpush.bf16.msra.mxu0 %v2505
    %3259 = vmatpush.bf16.msra.mxu0 %v2500
    %3260 = vmatpush.bf16.msra.mxu0 %v2495
    %3261 = vmatpush.bf16.msra.mxu0 %v2490
    %3262 = vmatpush.bf16.msra.mxu0 %v2485
    %3263 = vmatpush.bf16.msra.mxu0 %v2480
    %3264 = vmatmul.bf16.gmra.mxu0 %v1148
    %v3265 = vpop.f32.mrf.mxu0
    %v3266 = vadd.f32 %v3253, %v3265
    %v3267 = vpop.f32.mrf.mxu0
    %3268 = vdwg.mxu0
    %3269 = vmatpush.bf16.msra.mxu0 %v2555
    %3270 = vmatpush.bf16.msra.mxu0 %v2550
    %3271 = vmatpush.bf16.msra.mxu0 %v2545
    %3272 = vmatpush.bf16.msra.mxu0 %v2540
    %3273 = vmatpush.bf16.msra.mxu0 %v2535
    %3274 = vmatpush.bf16.msra.mxu0 %v2530
    %3275 = vmatpush.bf16.msra.mxu0 %v2525
    %3276 = vmatpush.bf16.msra.mxu0 %v2520
    %3277 = vmatmul.bf16.gmra.mxu0 %v1149
    %v3278 = vpop.f32.mrf.mxu0
    %v3279 = vadd.f32 %v3266, %v3278
    %v3280 = vpop.f32.mrf.mxu0
    %3281 = vdwg.mxu0
    %3282 = vmatpush.bf16.msra.mxu0 %v2595
    %3283 = vmatpush.bf16.msra.mxu0 %v2590
    %3284 = vmatpush.bf16.msra.mxu0 %v2585
    %3285 = vmatpush.bf16.msra.mxu0 %v2580
    %3286 = vmatpush.bf16.msra.mxu0 %v2575
    %3287 = vmatpush.bf16.msra.mxu0 %v2570
    %3288 = vmatpush.bf16.msra.mxu0 %v2565
    %3289 = vmatpush.bf16.msra.mxu0 %v2560
    %3290 = vmatmul.bf16.gmra.mxu0 %v1150
    %v3291 = vpop.f32.mrf.mxu0
    %v3292 = vadd.f32 %v3279, %v3291
    %v3293 = vpop.f32.mrf.mxu0
    %3294 = vdwg.mxu0
    %3295 = vmatpush.bf16.msra.mxu0 %v2635
    %3296 = vmatpush.bf16.msra.mxu0 %v2630
    %3297 = vmatpush.bf16.msra.mxu0 %v2625
    %3298 = vmatpush.bf16.msra.mxu0 %v2620
    %3299 = vmatpush.bf16.msra.mxu0 %v2615
    %3300 = vmatpush.bf16.msra.mxu0 %v2610
    %3301 = vmatpush.bf16.msra.mxu0 %v2605
    %3302 = vmatpush.bf16.msra.mxu0 %v2600
    %3303 = vmatmul.bf16.gmra.mxu0 %v1151
    %v3304 = vpop.f32.mrf.mxu0
    %v3305 = vadd.f32 %v3292, %v3304
    %v3306 = vpop.f32.mrf.mxu0
    %3307 = vdwg.mxu0
    %3308 = vmatpush.bf16.msra.mxu0 %v2675
    %3309 = vmatpush.bf16.msra.mxu0 %v2670
    %3310 = vmatpush.bf16.msra.mxu0 %v2665
    %3311 = vmatpush.bf16.msra.mxu0 %v2660
    %3312 = vmatpush.bf16.msra.mxu0 %v2655
    %3313 = vmatpush.bf16.msra.mxu0 %v2650
    %3314 = vmatpush.bf16.msra.mxu0 %v2645
    %3315 = vmatpush.bf16.msra.mxu0 %v2640
    %3316 = vmatmul.bf16.gmra.mxu0 %v1152
    %v3317 = vpop.f32.mrf.mxu0
    %v3318 = vadd.f32 %v3305, %v3317
    %v3319 = vpop.f32.mrf.mxu0
    %3320 = vdwg.mxu0
    %3321 = vmatpush.bf16.msra.mxu0 %v2436
    %3322 = vmatpush.bf16.msra.mxu0 %v2431
    %3323 = vmatpush.bf16.msra.mxu0 %v2426
    %3324 = vmatpush.bf16.msra.mxu0 %v2421
    %3325 = vmatpush.bf16.msra.mxu0 %v2416
    %3326 = vmatpush.bf16.msra.mxu0 %v2411
    %3327 = vmatpush.bf16.msra.mxu0 %v2406
    %3328 = vmatpush.bf16.msra.mxu0 %v2401
    %3329 = vmatmul.bf16.gmra.mxu0 %v1146
    %v3330 = vpop.f32.mrf.mxu0
    %v3331 = vadd.f32 %v1495, %v3330
    %v3332 = vpop.f32.mrf.mxu0
    %3333 = vdwg.mxu0
    %3334 = vmatpush.bf16.msra.mxu0 %v2476
    %3335 = vmatpush.bf16.msra.mxu0 %v2471
    %3336 = vmatpush.bf16.msra.mxu0 %v2466
    %3337 = vmatpush.bf16.msra.mxu0 %v2461
    %3338 = vmatpush.bf16.msra.mxu0 %v2456
    %3339 = vmatpush.bf16.msra.mxu0 %v2451
    %3340 = vmatpush.bf16.msra.mxu0 %v2446
    %3341 = vmatpush.bf16.msra.mxu0 %v2441
    %3342 = vmatmul.bf16.gmra.mxu0 %v1147
    %v3343 = vpop.f32.mrf.mxu0
    %v3344 = vadd.f32 %v3331, %v3343
    %v3345 = vpop.f32.mrf.mxu0
    %3346 = vdwg.mxu0
    %3347 = vmatpush.bf16.msra.mxu0 %v2516
    %3348 = vmatpush.bf16.msra.mxu0 %v2511
    %3349 = vmatpush.bf16.msra.mxu0 %v2506
    %3350 = vmatpush.bf16.msra.mxu0 %v2501
    %3351 = vmatpush.bf16.msra.mxu0 %v2496
    %3352 = vmatpush.bf16.msra.mxu0 %v2491
    %3353 = vmatpush.bf16.msra.mxu0 %v2486
    %3354 = vmatpush.bf16.msra.mxu0 %v2481
    %3355 = vmatmul.bf16.gmra.mxu0 %v1148
    %v3356 = vpop.f32.mrf.mxu0
    %v3357 = vadd.f32 %v3344, %v3356
    %v3358 = vpop.f32.mrf.mxu0
    %3359 = vdwg.mxu0
    %3360 = vmatpush.bf16.msra.mxu0 %v2556
    %3361 = vmatpush.bf16.msra.mxu0 %v2551
    %3362 = vmatpush.bf16.msra.mxu0 %v2546
    %3363 = vmatpush.bf16.msra.mxu0 %v2541
    %3364 = vmatpush.bf16.msra.mxu0 %v2536
    %3365 = vmatpush.bf16.msra.mxu0 %v2531
    %3366 = vmatpush.bf16.msra.mxu0 %v2526
    %3367 = vmatpush.bf16.msra.mxu0 %v2521
    %3368 = vmatmul.bf16.gmra.mxu0 %v1149
    %v3369 = vpop.f32.mrf.mxu0
    %v3370 = vadd.f32 %v3357, %v3369
    %v3371 = vpop.f32.mrf.mxu0
    %3372 = vdwg.mxu0
    %3373 = vmatpush.bf16.msra.mxu0 %v2596
    %3374 = vmatpush.bf16.msra.mxu0 %v2591
    %3375 = vmatpush.bf16.msra.mxu0 %v2586
    %3376 = vmatpush.bf16.msra.mxu0 %v2581
    %3377 = vmatpush.bf16.msra.mxu0 %v2576
    %3378 = vmatpush.bf16.msra.mxu0 %v2571
    %3379 = vmatpush.bf16.msra.mxu0 %v2566
    %3380 = vmatpush.bf16.msra.mxu0 %v2561
    %3381 = vmatmul.bf16.gmra.mxu0 %v1150
    %v3382 = vpop.f32.mrf.mxu0
    %v3383 = vadd.f32 %v3370, %v3382
    %v3384 = vpop.f32.mrf.mxu0
    %3385 = vdwg.mxu0
    %3386 = vmatpush.bf16.msra.mxu0 %v2636
    %3387 = vmatpush.bf16.msra.mxu0 %v2631
    %3388 = vmatpush.bf16.msra.mxu0 %v2626
    %3389 = vmatpush.bf16.msra.mxu0 %v2621
    %3390 = vmatpush.bf16.msra.mxu0 %v2616
    %3391 = vmatpush.bf16.msra.mxu0 %v2611
    %3392 = vmatpush.bf16.msra.mxu0 %v2606
    %3393 = vmatpush.bf16.msra.mxu0 %v2601
    %3394 = vmatmul.bf16.gmra.mxu0 %v1151
    %v3395 = vpop.f32.mrf.mxu0
    %v3396 = vadd.f32 %v3383, %v3395
    %v3397 = vpop.f32.mrf.mxu0
    %3398 = vdwg.mxu0
    %3399 = vmatpush.bf16.msra.mxu0 %v2676
    %3400 = vmatpush.bf16.msra.mxu0 %v2671
    %3401 = vmatpush.bf16.msra.mxu0 %v2666
    %3402 = vmatpush.bf16.msra.mxu0 %v2661
    %3403 = vmatpush.bf16.msra.mxu0 %v2656
    %3404 = vmatpush.bf16.msra.mxu0 %v2651
    %3405 = vmatpush.bf16.msra.mxu0 %v2646
    %3406 = vmatpush.bf16.msra.mxu0 %v2641
    %3407 = vmatmul.bf16.gmra.mxu0 %v1152
    %v3408 = vpop.f32.mrf.mxu0
    %v3409 = vadd.f32 %v3396, %v3408
    %v3410 = vpop.f32.mrf.mxu0
    %3411 = vdwg.mxu0
    %v3412 = vmax.f32 %v3045, 0.0
    %v3413 = vmax.f32 %v3136, 0.0
    %v3414 = vmax.f32 %v3227, 0.0
    %v3415 = vmax.f32 %v3318, 0.0
    %v3416 = vmax.f32 %v3409, 0.0
    %v3417 = vpack.c.bf16 %v3412, %v3412
    %v3418 = vpack.c.bf16 %v3413, %v3413
    %v3419 = vpack.c.bf16 %v3414, %v3414
    %v3420 = vpack.c.bf16 %v3415, %v3415
    %v3421 = vpack.c.bf16 %v3416, %v3416
    %v3422 = vld [vmem:[#allocation11] sm:$0xff]
    %v3423 = vld [vmem:[#allocation11 + $0x8] sm:$0xf]
    %v3424 = vld [vmem:[#allocation11 + $0xc] sm:$0xff]
    %v3425 = vld [vmem:[#allocation11 + $0x14] sm:$0xf]
    %v3426 = vld [vmem:[#allocation11 + $0x18] sm:$0xff]
    %v3427 = vld [vmem:[#allocation11 + $0x20] sm:$0xf]
    %v3428 = vld [vmem:[#allocation11 + $0x24] sm:$0xff]
    %v3429 = vld [vmem:[#allocation11 + $0x2c] sm:$0xf]
    %v3430 = vld [vmem:[#allocation11 + $0x30] sm:$0xff]
    %v3431 = vld [vmem:[#allocation11 + $0x38] sm:$0xf]
    %v3432 = vld [vmem:[#allocation11 + $0x3c] sm:$0xff]
    %v3433 = vld [vmem:[#allocation11 + $0x44] sm:$0xf]
    %v3434 = vld [vmem:[#allocation11 + $0x48] sm:$0xff]
    %v3435 = vld [vmem:[#allocation11 + $0x50] sm:$0xf]
    %v3436 = vld [vmem:[#allocation11 + $0x54] sm:$0xff]
    %v3437 = vld [vmem:[#allocation11 + $0x5c] sm:$0xf]
    %v3438 = vld [vmem:[#allocation11 + $0x60] sm:$0xff]
    %v3439 = vld [vmem:[#allocation11 + $0x68] sm:$0xf]
    %v3440 = vld [vmem:[#allocation11 + $0x6c] sm:$0xff]
    %v3441 = vld [vmem:[#allocation11 + $0x74] sm:$0xf]
    %v3442 = vld [vmem:[#allocation11 + $0x78] sm:$0xff]
    %v3443 = vld [vmem:[#allocation11 + $0x80] sm:$0xf]
    %v3444 = vld [vmem:[#allocation11 + $0x84] sm:$0xff]
    %v3445 = vld [vmem:[#allocation11 + $0x8c] sm:$0xf]
    %v3446 = vld [vmem:[#allocation11 + $0x90] sm:$0xff]
    %v3447 = vld [vmem:[#allocation11 + $0x98] sm:$0xf]
    %v3448 = vld [vmem:[#allocation11 + $0x9c] sm:$0xff]
    %v3449 = vld [vmem:[#allocation11 + $0xa4] sm:$0xf]
    %v3450 = vld [vmem:[#allocation11 + $0xa8] sm:$0xff]
    %v3451 = vld [vmem:[#allocation11 + $0xb0] sm:$0xf]
    %v3452 = vld [vmem:[#allocation11 + $0xb4] sm:$0xff]
    %v3453 = vld [vmem:[#allocation11 + $0xbc] sm:$0xf]
    %v3454 = vld [vmem:[#allocation11 + $0xc0] sm:$0xff]
    %v3455 = vld [vmem:[#allocation11 + $0xc8] sm:$0xf]
    %v3456 = vld [vmem:[#allocation11 + $0xcc] sm:$0xff]
    %v3457 = vld [vmem:[#allocation11 + $0xd4] sm:$0xf]
    %v3458 = vld [vmem:[#allocation11 + $0xd8] sm:$0xff]
    %v3459 = vld [vmem:[#allocation11 + $0xe0] sm:$0xf]
    %v3460 = vld [vmem:[#allocation11 + $0xe4] sm:$0xff]
    %v3461 = vld [vmem:[#allocation11 + $0xec] sm:$0xf]
    %v3462 = vld [vmem:[#allocation11 + $0xf0] sm:$0xff]
    %v3463 = vld [vmem:[#allocation11 + $0xf8] sm:$0xf]
    %v3464 = vld [vmem:[#allocation11 + $0xfc] sm:$0xff]
    %v3465 = vld [vmem:[#allocation11 + $0x104] sm:$0xf]
    %v3466 = vld [vmem:[#allocation11 + $0x108] sm:$0xff]
    %v3467 = vld [vmem:[#allocation11 + $0x110] sm:$0xf]
    %v3468 = vld [vmem:[#allocation11 + $0x114] sm:$0xff]
    %v3469 = vld [vmem:[#allocation11 + $0x11c] sm:$0xf]
    %v3470 = vld [vmem:[#allocation11 + $0x120] sm:$0xff]
    %v3471 = vld [vmem:[#allocation11 + $0x128] sm:$0xf]
    %v3472 = vld [vmem:[#allocation11 + $0x12c] sm:$0xff]
    %v3473 = vld [vmem:[#allocation11 + $0x134] sm:$0xf]
    %v3474 = vld [vmem:[#allocation11 + $0x138] sm:$0xff]
    %v3475 = vld [vmem:[#allocation11 + $0x140] sm:$0xf]
    %v3476 = vld [vmem:[#allocation11 + $0x144] sm:$0xff]
    %v3477 = vld [vmem:[#allocation11 + $0x14c] sm:$0xf]
    %v3478 = vld [vmem:[#allocation11 + $0x150] sm:$0xff]
    %v3479 = vld [vmem:[#allocation11 + $0x158] sm:$0xf]
    %v3480 = vld [vmem:[#allocation11 + $0x15c] sm:$0xff]
    %v3481 = vld [vmem:[#allocation11 + $0x164] sm:$0xf]
    %v3482 = vld [vmem:[#allocation11 + $0x168] sm:$0xff]
    %v3483 = vld [vmem:[#allocation11 + $0x170] sm:$0xf]
    %v3484 = vld [vmem:[#allocation11 + $0x174] sm:$0xff]
    %v3485 = vld [vmem:[#allocation11 + $0x17c] sm:$0xf]
    %v3486 = vld [vmem:[#allocation11 + $0x180] sm:$0xff]
    %v3487 = vld [vmem:[#allocation11 + $0x188] sm:$0xf]
    %v3488 = vld [vmem:[#allocation11 + $0x18c] sm:$0xff]
    %v3489 = vld [vmem:[#allocation11 + $0x194] sm:$0xf]
    %v3490 = vld [vmem:[#allocation11 + $0x198] sm:$0xff]
    %v3491 = vld [vmem:[#allocation11 + $0x1a0] sm:$0xf]
    %v3492 = vld [vmem:[#allocation11 + $0x1a4] sm:$0xff]
    %v3493 = vld [vmem:[#allocation11 + $0x1ac] sm:$0xf]
    %v3494 = vld [vmem:[#allocation11 + $0x1b0] sm:$0xff]
    %v3495 = vld [vmem:[#allocation11 + $0x1b8] sm:$0xf]
    %v3496 = vld [vmem:[#allocation11 + $0x1bc] sm:$0xff]
    %v3497 = vld [vmem:[#allocation11 + $0x1c4] sm:$0xf]
    %v3498 = vld [vmem:[#allocation11 + $0x1c8] sm:$0xff]
    %v3499 = vld [vmem:[#allocation11 + $0x1d0] sm:$0xf]
    %v3500 = vld [vmem:[#allocation11 + $0x1d4] sm:$0xff]
    %v3501 = vld [vmem:[#allocation11 + $0x1dc] sm:$0xf]
    %v3502 = vld [vmem:[#allocation11 + $0x1e0] sm:$0xff]
    %v3503 = vld [vmem:[#allocation11 + $0x1e8] sm:$0xf]
    %v3504 = vld [vmem:[#allocation11 + $0x1ec] sm:$0xff]
    %v3505 = vld [vmem:[#allocation11 + $0x1f4] sm:$0xf]
    %v3506 = vld [vmem:[#allocation11 + $0x1f8] sm:$0xff]
    %v3507 = vld [vmem:[#allocation11 + $0x200] sm:$0xf]
    %v3508 = vld [vmem:[#allocation11 + $0x204] sm:$0xff]
    %v3509 = vld [vmem:[#allocation11 + $0x20c] sm:$0xf]
    %v3510 = vld [vmem:[#allocation11 + $0x210] sm:$0xff]
    %v3511 = vld [vmem:[#allocation11 + $0x218] sm:$0xf]
    %v3512 = vld [vmem:[#allocation11 + $0x21c] sm:$0xff]
    %v3513 = vld [vmem:[#allocation11 + $0x224] sm:$0xf]
    %v3514 = vld [vmem:[#allocation11 + $0x228] sm:$0xff]
    %v3515 = vld [vmem:[#allocation11 + $0x230] sm:$0xf]
    %v3516 = vld [vmem:[#allocation11 + $0x234] sm:$0xff]
    %v3517 = vld [vmem:[#allocation11 + $0x23c] sm:$0xf]
    %v3518 = vld [vmem:[#allocation11 + $0x240] sm:$0xff]
    %v3519 = vld [vmem:[#allocation11 + $0x248] sm:$0xf]
    %v3520 = vld [vmem:[#allocation11 + $0x24c] sm:$0xff]
    %v3521 = vld [vmem:[#allocation11 + $0x254] sm:$0xf]
    %v3522 = vld [vmem:[#allocation11 + $0x258] sm:$0xff]
    %v3523 = vld [vmem:[#allocation11 + $0x260] sm:$0xf]
    %v3524 = vld [vmem:[#allocation11 + $0x264] sm:$0xff]
    %v3525 = vld [vmem:[#allocation11 + $0x26c] sm:$0xf]
    %v3526 = vld [vmem:[#allocation11 + $0x270] sm:$0xff]
    %v3527 = vld [vmem:[#allocation11 + $0x278] sm:$0xf]
    %v3528 = vld [vmem:[#allocation11 + $0x27c] sm:$0xff]
    %v3529 = vld [vmem:[#allocation11 + $0x284] sm:$0xf]
    %v3530 = vld [vmem:[#allocation11 + $0x288] sm:$0xff]
    %v3531 = vld [vmem:[#allocation11 + $0x290] sm:$0xf]
    %v3532 = vld [vmem:[#allocation11 + $0x294] sm:$0xff]
    %v3533 = vld [vmem:[#allocation11 + $0x29c] sm:$0xf]
    %v3534 = vld [vmem:[#allocation11 + $0x2a0] sm:$0xff]
    %v3535 = vld [vmem:[#allocation11 + $0x2a8] sm:$0xf]
    %v3536 = vld [vmem:[#allocation11 + $0x2ac] sm:$0xff]
    %v3537 = vld [vmem:[#allocation11 + $0x2b4] sm:$0xf]
    %v3538 = vld [vmem:[#allocation11 + $0x2b8] sm:$0xff]
    %v3539 = vld [vmem:[#allocation11 + $0x2c0] sm:$0xf]
    %v3540 = vld [vmem:[#allocation11 + $0x2c4] sm:$0xff]
    %v3541 = vld [vmem:[#allocation11 + $0x2cc] sm:$0xf]
    %v3542 = vld [vmem:[#allocation11 + $0x2d0] sm:$0xff]
    %v3543 = vld [vmem:[#allocation11 + $0x2d8] sm:$0xf]
    %v3544 = vld [vmem:[#allocation11 + $0x2dc] sm:$0xff]
    %v3545 = vld [vmem:[#allocation11 + $0x2e4] sm:$0xf]
    %v3546 = vld [vmem:[#allocation11 + $0x2e8] sm:$0xff]
    %v3547 = vld [vmem:[#allocation11 + $0x2f0] sm:$0xf]
    %v3548 = vld [vmem:[#allocation11 + $0x2f4] sm:$0xff]
    %v3549 = vld [vmem:[#allocation11 + $0x2fc] sm:$0xf]
    %v3550 = vld [vmem:[#allocation11 + $0x300] sm:$0xff]
    %v3551 = vld [vmem:[#allocation11 + $0x308] sm:$0xf]
    %v3552 = vld [vmem:[#allocation11 + $0x30c] sm:$0xff]
    %v3553 = vld [vmem:[#allocation11 + $0x314] sm:$0xf]
    %v3554 = vld [vmem:[#allocation11 + $0x318] sm:$0xff]
    %v3555 = vld [vmem:[#allocation11 + $0x320] sm:$0xf]
    %v3556 = vld [vmem:[#allocation11 + $0x324] sm:$0xff]
    %v3557 = vld [vmem:[#allocation11 + $0x32c] sm:$0xf]
    %v3558 = vld [vmem:[#allocation11 + $0x330] sm:$0xff]
    %v3559 = vld [vmem:[#allocation11 + $0x338] sm:$0xf]
    %v3560 = vld [vmem:[#allocation11 + $0x33c] sm:$0xff]
    %v3561 = vld [vmem:[#allocation11 + $0x344] sm:$0xf]
    %v3562 = vld [vmem:[#allocation11 + $0x348] sm:$0xff]
    %v3563 = vld [vmem:[#allocation11 + $0x350] sm:$0xf]
    %v3564 = vld [vmem:[#allocation11 + $0x354] sm:$0xff]
    %v3565 = vld [vmem:[#allocation11 + $0x35c] sm:$0xf]
    %v3566 = vld [vmem:[#allocation11 + $0x360] sm:$0xff]
    %v3567 = vld [vmem:[#allocation11 + $0x368] sm:$0xf]
    %v3568 = vld [vmem:[#allocation11 + $0x36c] sm:$0xff]
    %v3569 = vld [vmem:[#allocation11 + $0x374] sm:$0xf]
    %v3570 = vld [vmem:[#allocation11 + $0x378] sm:$0xff]
    %v3571 = vld [vmem:[#allocation11 + $0x380] sm:$0xf]
    %v3572 = vld [vmem:[#allocation11 + $0x384] sm:$0xff]
    %v3573 = vld [vmem:[#allocation11 + $0x38c] sm:$0xf]
    %v3574 = vld [vmem:[#allocation11 + $0x390] sm:$0xff]
    %v3575 = vld [vmem:[#allocation11 + $0x398] sm:$0xf]
    %v3576 = vld [vmem:[#allocation11 + $0x39c] sm:$0xff]
    %v3577 = vld [vmem:[#allocation11 + $0x3a4] sm:$0xf]
    %v3578 = vld [vmem:[#allocation11 + $0x3a8] sm:$0xff]
    %v3579 = vld [vmem:[#allocation11 + $0x3b0] sm:$0xf]
    %v3580 = vld [vmem:[#allocation11 + $0x3b4] sm:$0xff]
    %v3581 = vld [vmem:[#allocation11 + $0x3bc] sm:$0xf]
    %v3582 = vld [vmem:[#allocation13] sm:$0x7]
    %v3584 = vperm.slane %v3582, 0
    %v3585 = vperm.slane %v3582, 1
    %v3586 = vperm.slane %v3582, 2
    %v3750 = vunpack.c.l.b16 %v3422
    %v3751 = vunpack.c.h.b16 %v3422
    %v3752 = vunpack.c.l.b16 %v3423
    %v3753 = vunpack.c.l.b16 %v3424
    %v3754 = vunpack.c.h.b16 %v3424
    %v3755 = vunpack.c.l.b16 %v3425
    %v3756 = vunpack.c.l.b16 %v3426
    %v3757 = vunpack.c.h.b16 %v3426
    %v3758 = vunpack.c.l.b16 %v3427
    %v3759 = vunpack.c.l.b16 %v3428
    %v3760 = vunpack.c.h.b16 %v3428
    %v3761 = vunpack.c.l.b16 %v3429
    %v3762 = vunpack.c.l.b16 %v3430
    %v3763 = vunpack.c.h.b16 %v3430
    %v3764 = vunpack.c.l.b16 %v3431
    %v3765 = vunpack.c.l.b16 %v3432
    %v3766 = vunpack.c.h.b16 %v3432
    %v3767 = vunpack.c.l.b16 %v3433
    %v3768 = vunpack.c.l.b16 %v3434
    %v3769 = vunpack.c.h.b16 %v3434
    %v3770 = vunpack.c.l.b16 %v3435
    %v3771 = vunpack.c.l.b16 %v3436
    %v3772 = vunpack.c.h.b16 %v3436
    %v3773 = vunpack.c.l.b16 %v3437
    %v3774 = vunpack.c.l.b16 %v3438
    %v3775 = vunpack.c.h.b16 %v3438
    %v3776 = vunpack.c.l.b16 %v3439
    %v3777 = vunpack.c.l.b16 %v3440
    %v3778 = vunpack.c.h.b16 %v3440
    %v3779 = vunpack.c.l.b16 %v3441
    %v3780 = vunpack.c.l.b16 %v3442
    %v3781 = vunpack.c.h.b16 %v3442
    %v3782 = vunpack.c.l.b16 %v3443
    %v3783 = vunpack.c.l.b16 %v3444
    %v3784 = vunpack.c.h.b16 %v3444
    %v3785 = vunpack.c.l.b16 %v3445
    %v3786 = vunpack.c.l.b16 %v3446
    %v3787 = vunpack.c.h.b16 %v3446
    %v3788 = vunpack.c.l.b16 %v3447
    %v3789 = vunpack.c.l.b16 %v3448
    %v3790 = vunpack.c.h.b16 %v3448
    %v3791 = vunpack.c.l.b16 %v3449
    %v3792 = vunpack.c.l.b16 %v3450
    %v3793 = vunpack.c.h.b16 %v3450
    %v3794 = vunpack.c.l.b16 %v3451
    %v3795 = vunpack.c.l.b16 %v3452
    %v3796 = vunpack.c.h.b16 %v3452
    %v3797 = vunpack.c.l.b16 %v3453
    %v3798 = vunpack.c.l.b16 %v3454
    %v3799 = vunpack.c.h.b16 %v3454
    %v3800 = vunpack.c.l.b16 %v3455
    %v3801 = vunpack.c.l.b16 %v3456
    %v3802 = vunpack.c.h.b16 %v3456
    %v3803 = vunpack.c.l.b16 %v3457
    %v3804 = vunpack.c.l.b16 %v3458
    %v3805 = vunpack.c.h.b16 %v3458
    %v3806 = vunpack.c.l.b16 %v3459
    %v3807 = vunpack.c.l.b16 %v3460
    %v3808 = vunpack.c.h.b16 %v3460
    %v3809 = vunpack.c.l.b16 %v3461
    %v3810 = vunpack.c.l.b16 %v3462
    %v3811 = vunpack.c.h.b16 %v3462
    %v3812 = vunpack.c.l.b16 %v3463
    %v3813 = vunpack.c.l.b16 %v3464
    %v3814 = vunpack.c.h.b16 %v3464
    %v3815 = vunpack.c.l.b16 %v3465
    %v3816 = vunpack.c.l.b16 %v3466
    %v3817 = vunpack.c.h.b16 %v3466
    %v3818 = vunpack.c.l.b16 %v3467
    %v3819 = vunpack.c.l.b16 %v3468
    %v3820 = vunpack.c.h.b16 %v3468
    %v3821 = vunpack.c.l.b16 %v3469
    %v3822 = vunpack.c.l.b16 %v3470
    %v3823 = vunpack.c.h.b16 %v3470
    %v3824 = vunpack.c.l.b16 %v3471
    %v3825 = vunpack.c.l.b16 %v3472
    %v3826 = vunpack.c.h.b16 %v3472
    %v3827 = vunpack.c.l.b16 %v3473
    %v3828 = vunpack.c.l.b16 %v3474
    %v3829 = vunpack.c.h.b16 %v3474
    %v3830 = vunpack.c.l.b16 %v3475
    %v3831 = vunpack.c.l.b16 %v3476
    %v3832 = vunpack.c.h.b16 %v3476
    %v3833 = vunpack.c.l.b16 %v3477
    %v3834 = vunpack.c.l.b16 %v3478
    %v3835 = vunpack.c.h.b16 %v3478
    %v3836 = vunpack.c.l.b16 %v3479
    %v3837 = vunpack.c.l.b16 %v3480
    %v3838 = vunpack.c.h.b16 %v3480
    %v3839 = vunpack.c.l.b16 %v3481
    %v3840 = vunpack.c.l.b16 %v3482
    %v3841 = vunpack.c.h.b16 %v3482
    %v3842 = vunpack.c.l.b16 %v3483
    %v3843 = vunpack.c.l.b16 %v3484
    %v3844 = vunpack.c.h.b16 %v3484
    %v3845 = vunpack.c.l.b16 %v3485
    %v3846 = vunpack.c.l.b16 %v3486
    %v3847 = vunpack.c.h.b16 %v3486
    %v3848 = vunpack.c.l.b16 %v3487
    %v3849 = vunpack.c.l.b16 %v3488
    %v3850 = vunpack.c.h.b16 %v3488
    %v3851 = vunpack.c.l.b16 %v3489
    %v3852 = vunpack.c.l.b16 %v3490
    %v3853 = vunpack.c.h.b16 %v3490
    %v3854 = vunpack.c.l.b16 %v3491
    %v3855 = vunpack.c.l.b16 %v3492
    %v3856 = vunpack.c.h.b16 %v3492
    %v3857 = vunpack.c.l.b16 %v3493
    %v3858 = vunpack.c.l.b16 %v3494
    %v3859 = vunpack.c.h.b16 %v3494
    %v3860 = vunpack.c.l.b16 %v3495
    %v3861 = vunpack.c.l.b16 %v3496
    %v3862 = vunpack.c.h.b16 %v3496
    %v3863 = vunpack.c.l.b16 %v3497
    %v3864 = vunpack.c.l.b16 %v3498
    %v3865 = vunpack.c.h.b16 %v3498
    %v3866 = vunpack.c.l.b16 %v3499
    %v3867 = vunpack.c.l.b16 %v3500
    %v3868 = vunpack.c.h.b16 %v3500
    %v3869 = vunpack.c.l.b16 %v3501
    %v3870 = vunpack.c.l.b16 %v3502
    %v3871 = vunpack.c.h.b16 %v3502
    %v3872 = vunpack.c.l.b16 %v3503
    %v3873 = vunpack.c.l.b16 %v3504
    %v3874 = vunpack.c.h.b16 %v3504
    %v3875 = vunpack.c.l.b16 %v3505
    %v3876 = vunpack.c.l.b16 %v3506
    %v3877 = vunpack.c.h.b16 %v3506
    %v3878 = vunpack.c.l.b16 %v3507
    %v3879 = vunpack.c.l.b16 %v3508
    %v3880 = vunpack.c.h.b16 %v3508
    %v3881 = vunpack.c.l.b16 %v3509
    %v3882 = vunpack.c.l.b16 %v3510
    %v3883 = vunpack.c.h.b16 %v3510
    %v3884 = vunpack.c.l.b16 %v3511
    %v3885 = vunpack.c.l.b16 %v3512
    %v3886 = vunpack.c.h.b16 %v3512
    %v3887 = vunpack.c.l.b16 %v3513
    %v3888 = vunpack.c.l.b16 %v3514
    %v3889 = vunpack.c.h.b16 %v3514
    %v3890 = vunpack.c.l.b16 %v3515
    %v3891 = vunpack.c.l.b16 %v3516
    %v3892 = vunpack.c.h.b16 %v3516
    %v3893 = vunpack.c.l.b16 %v3517
    %v3894 = vunpack.c.l.b16 %v3518
    %v3895 = vunpack.c.h.b16 %v3518
    %v3896 = vunpack.c.l.b16 %v3519
    %v3897 = vunpack.c.l.b16 %v3520
    %v3898 = vunpack.c.h.b16 %v3520
    %v3899 = vunpack.c.l.b16 %v3521
    %v3900 = vunpack.c.l.b16 %v3522
    %v3901 = vunpack.c.h.b16 %v3522
    %v3902 = vunpack.c.l.b16 %v3523
    %v3903 = vunpack.c.l.b16 %v3524
    %v3904 = vunpack.c.h.b16 %v3524
    %v3905 = vunpack.c.l.b16 %v3525
    %v3906 = vunpack.c.l.b16 %v3526
    %v3907 = vunpack.c.h.b16 %v3526
    %v3908 = vunpack.c.l.b16 %v3527
    %v3909 = vunpack.c.l.b16 %v3528
    %v3910 = vunpack.c.h.b16 %v3528
    %v3911 = vunpack.c.l.b16 %v3529
    %v3912 = vunpack.c.l.b16 %v3530
    %v3913 = vunpack.c.h.b16 %v3530
    %v3914 = vunpack.c.l.b16 %v3531
    %v3915 = vunpack.c.l.b16 %v3532
    %v3916 = vunpack.c.h.b16 %v3532
    %v3917 = vunpack.c.l.b16 %v3533
    %v3918 = vunpack.c.l.b16 %v3534
    %v3919 = vunpack.c.h.b16 %v3534
    %v3920 = vunpack.c.l.b16 %v3535
    %v3921 = vunpack.c.l.b16 %v3536
    %v3922 = vunpack.c.h.b16 %v3536
    %v3923 = vunpack.c.l.b16 %v3537
    %v3924 = vunpack.c.l.b16 %v3538
    %v3925 = vunpack.c.h.b16 %v3538
    %v3926 = vunpack.c.l.b16 %v3539
    %v3927 = vunpack.c.l.b16 %v3540
    %v3928 = vunpack.c.h.b16 %v3540
    %v3929 = vunpack.c.l.b16 %v3541
    %v3930 = vunpack.c.l.b16 %v3542
    %v3931 = vunpack.c.h.b16 %v3542
    %v3932 = vunpack.c.l.b16 %v3543
    %v3933 = vunpack.c.l.b16 %v3544
    %v3934 = vunpack.c.h.b16 %v3544
    %v3935 = vunpack.c.l.b16 %v3545
    %v3936 = vunpack.c.l.b16 %v3546
    %v3937 = vunpack.c.h.b16 %v3546
    %v3938 = vunpack.c.l.b16 %v3547
    %v3939 = vunpack.c.l.b16 %v3548
    %v3940 = vunpack.c.h.b16 %v3548
    %v3941 = vunpack.c.l.b16 %v3549
    %v3942 = vunpack.c.l.b16 %v3550
    %v3943 = vunpack.c.h.b16 %v3550
    %v3944 = vunpack.c.l.b16 %v3551
    %v3945 = vunpack.c.l.b16 %v3552
    %v3946 = vunpack.c.h.b16 %v3552
    %v3947 = vunpack.c.l.b16 %v3553
    %v3948 = vunpack.c.l.b16 %v3554
    %v3949 = vunpack.c.h.b16 %v3554
    %v3950 = vunpack.c.l.b16 %v3555
    %v3951 = vunpack.c.l.b16 %v3556
    %v3952 = vunpack.c.h.b16 %v3556
    %v3953 = vunpack.c.l.b16 %v3557
    %v3954 = vunpack.c.l.b16 %v3558
    %v3955 = vunpack.c.h.b16 %v3558
    %v3956 = vunpack.c.l.b16 %v3559
    %v3957 = vunpack.c.l.b16 %v3560
    %v3958 = vunpack.c.h.b16 %v3560
    %v3959 = vunpack.c.l.b16 %v3561
    %v3960 = vunpack.c.l.b16 %v3562
    %v3961 = vunpack.c.h.b16 %v3562
    %v3962 = vunpack.c.l.b16 %v3563
    %v3963 = vunpack.c.l.b16 %v3564
    %v3964 = vunpack.c.h.b16 %v3564
    %v3965 = vunpack.c.l.b16 %v3565
    %v3966 = vunpack.c.l.b16 %v3566
    %v3967 = vunpack.c.h.b16 %v3566
    %v3968 = vunpack.c.l.b16 %v3567
    %v3969 = vunpack.c.l.b16 %v3568
    %v3970 = vunpack.c.h.b16 %v3568
    %v3971 = vunpack.c.l.b16 %v3569
    %v3972 = vunpack.c.l.b16 %v3570
    %v3973 = vunpack.c.h.b16 %v3570
    %v3974 = vunpack.c.l.b16 %v3571
    %v3975 = vunpack.c.l.b16 %v3572
    %v3976 = vunpack.c.h.b16 %v3572
    %v3977 = vunpack.c.l.b16 %v3573
    %v3978 = vunpack.c.l.b16 %v3574
    %v3979 = vunpack.c.h.b16 %v3574
    %v3980 = vunpack.c.l.b16 %v3575
    %v3981 = vunpack.c.l.b16 %v3576
    %v3982 = vunpack.c.h.b16 %v3576
    %v3983 = vunpack.c.l.b16 %v3577
    %v3984 = vunpack.c.l.b16 %v3578
    %v3985 = vunpack.c.h.b16 %v3578
    %v3986 = vunpack.c.l.b16 %v3579
    %v3987 = vunpack.c.l.b16 %v3580
    %v3988 = vunpack.c.h.b16 %v3580
    %v3989 = vunpack.c.l.b16 %v3581
    %v3990 = vpack.c.b16 %v3753, %v3750
    %v3991 = vpack.c.b16 %v3754, %v3751
    %v3992 = vpack.c.b16 %v3755, %v3752
    %v3993 = vpack.c.b16 %v3759, %v3756
    %v3994 = vpack.c.b16 %v3760, %v3757
    %v3995 = vpack.c.b16 %v3761, %v3758
    %v3996 = vpack.c.b16 %v3765, %v3762
    %v3997 = vpack.c.b16 %v3766, %v3763
    %v3998 = vpack.c.b16 %v3767, %v3764
    %v3999 = vpack.c.b16 %v3771, %v3768
    %v4000 = vpack.c.b16 %v3772, %v3769
    %v4001 = vpack.c.b16 %v3773, %v3770
    %v4002 = vpack.c.b16 %v3777, %v3774
    %v4003 = vpack.c.b16 %v3778, %v3775
    %v4004 = vpack.c.b16 %v3779, %v3776
    %v4005 = vpack.c.b16 %v3783, %v3780
    %v4006 = vpack.c.b16 %v3784, %v3781
    %v4007 = vpack.c.b16 %v3785, %v3782
    %v4008 = vpack.c.b16 %v3789, %v3786
    %v4009 = vpack.c.b16 %v3790, %v3787
    %v4010 = vpack.c.b16 %v3791, %v3788
    %v4011 = vpack.c.b16 %v3795, %v3792
    %v4012 = vpack.c.b16 %v3796, %v3793
    %v4013 = vpack.c.b16 %v3797, %v3794
    %v4014 = vpack.c.b16 %v3801, %v3798
    %v4015 = vpack.c.b16 %v3802, %v3799
    %v4016 = vpack.c.b16 %v3803, %v3800
    %v4017 = vpack.c.b16 %v3807, %v3804
    %v4018 = vpack.c.b16 %v3808, %v3805
    %v4019 = vpack.c.b16 %v3809, %v3806
    %v4020 = vpack.c.b16 %v3813, %v3810
    %v4021 = vpack.c.b16 %v3814, %v3811
    %v4022 = vpack.c.b16 %v3815, %v3812
    %v4023 = vpack.c.b16 %v3819, %v3816
    %v4024 = vpack.c.b16 %v3820, %v3817
    %v4025 = vpack.c.b16 %v3821, %v3818
    %v4026 = vpack.c.b16 %v3825, %v3822
    %v4027 = vpack.c.b16 %v3826, %v3823
    %v4028 = vpack.c.b16 %v3827, %v3824
    %v4029 = vpack.c.b16 %v3831, %v3828
    %v4030 = vpack.c.b16 %v3832, %v3829
    %v4031 = vpack.c.b16 %v3833, %v3830
    %v4032 = vpack.c.b16 %v3837, %v3834
    %v4033 = vpack.c.b16 %v3838, %v3835
    %v4034 = vpack.c.b16 %v3839, %v3836
    %v4035 = vpack.c.b16 %v3843, %v3840
    %v4036 = vpack.c.b16 %v3844, %v3841
    %v4037 = vpack.c.b16 %v3845, %v3842
    %v4038 = vpack.c.b16 %v3849, %v3846
    %v4039 = vpack.c.b16 %v3850, %v3847
    %v4040 = vpack.c.b16 %v3851, %v3848
    %v4041 = vpack.c.b16 %v3855, %v3852
    %v4042 = vpack.c.b16 %v3856, %v3853
    %v4043 = vpack.c.b16 %v3857, %v3854
    %v4044 = vpack.c.b16 %v3861, %v3858
    %v4045 = vpack.c.b16 %v3862, %v3859
    %v4046 = vpack.c.b16 %v3863, %v3860
    %v4047 = vpack.c.b16 %v3867, %v3864
    %v4048 = vpack.c.b16 %v3868, %v3865
    %v4049 = vpack.c.b16 %v3869, %v3866
    %v4050 = vpack.c.b16 %v3873, %v3870
    %v4051 = vpack.c.b16 %v3874, %v3871
    %v4052 = vpack.c.b16 %v3875, %v3872
    %v4053 = vpack.c.b16 %v3879, %v3876
    %v4054 = vpack.c.b16 %v3880, %v3877
    %v4055 = vpack.c.b16 %v3881, %v3878
    %v4056 = vpack.c.b16 %v3885, %v3882
    %v4057 = vpack.c.b16 %v3886, %v3883
    %v4058 = vpack.c.b16 %v3887, %v3884
    %v4059 = vpack.c.b16 %v3891, %v3888
    %v4060 = vpack.c.b16 %v3892, %v3889
    %v4061 = vpack.c.b16 %v3893, %v3890
    %v4062 = vpack.c.b16 %v3897, %v3894
    %v4063 = vpack.c.b16 %v3898, %v3895
    %v4064 = vpack.c.b16 %v3899, %v3896
    %v4065 = vpack.c.b16 %v3903, %v3900
    %v4066 = vpack.c.b16 %v3904, %v3901
    %v4067 = vpack.c.b16 %v3905, %v3902
    %v4068 = vpack.c.b16 %v3909, %v3906
    %v4069 = vpack.c.b16 %v3910, %v3907
    %v4070 = vpack.c.b16 %v3911, %v3908
    %v4071 = vpack.c.b16 %v3915, %v3912
    %v4072 = vpack.c.b16 %v3916, %v3913
    %v4073 = vpack.c.b16 %v3917, %v3914
    %v4074 = vpack.c.b16 %v3921, %v3918
    %v4075 = vpack.c.b16 %v3922, %v3919
    %v4076 = vpack.c.b16 %v3923, %v3920
    %v4077 = vpack.c.b16 %v3927, %v3924
    %v4078 = vpack.c.b16 %v3928, %v3925
    %v4079 = vpack.c.b16 %v3929, %v3926
    %v4080 = vpack.c.b16 %v3933, %v3930
    %v4081 = vpack.c.b16 %v3934, %v3931
    %v4082 = vpack.c.b16 %v3935, %v3932
    %v4083 = vpack.c.b16 %v3939, %v3936
    %v4084 = vpack.c.b16 %v3940, %v3937
    %v4085 = vpack.c.b16 %v3941, %v3938
    %v4086 = vpack.c.b16 %v3945, %v3942
    %v4087 = vpack.c.b16 %v3946, %v3943
    %v4088 = vpack.c.b16 %v3947, %v3944
    %v4089 = vpack.c.b16 %v3951, %v3948
    %v4090 = vpack.c.b16 %v3952, %v3949
    %v4091 = vpack.c.b16 %v3953, %v3950
    %v4092 = vpack.c.b16 %v3957, %v3954
    %v4093 = vpack.c.b16 %v3958, %v3955
    %v4094 = vpack.c.b16 %v3959, %v3956
    %v4095 = vpack.c.b16 %v3963, %v3960
    %v4096 = vpack.c.b16 %v3964, %v3961
    %v4097 = vpack.c.b16 %v3965, %v3962
    %v4098 = vpack.c.b16 %v3969, %v3966
    %v4099 = vpack.c.b16 %v3970, %v3967
    %v4100 = vpack.c.b16 %v3971, %v3968
    %v4101 = vpack.c.b16 %v3975, %v3972
    %v4102 = vpack.c.b16 %v3976, %v3973
    %v4103 = vpack.c.b16 %v3977, %v3974
    %v4104 = vpack.c.b16 %v3981, %v3978
    %v4105 = vpack.c.b16 %v3982, %v3979
    %v4106 = vpack.c.b16 %v3983, %v3980
    %v4107 = vpack.c.b16 %v3987, %v3984
    %v4108 = vpack.c.b16 %v3988, %v3985
    %v4109 = vpack.c.b16 %v3989, %v3986
    %4230 = vmatpush.bf16.msra.mxu0 %v4011
    %4231 = vmatpush.bf16.msra.mxu0 %v4008
    %4232 = vmatpush.bf16.msra.mxu0 %v4005
    %4233 = vmatpush.bf16.msra.mxu0 %v4002
    %4234 = vmatpush.bf16.msra.mxu0 %v3999
    %4235 = vmatpush.bf16.msra.mxu0 %v3996
    %4236 = vmatpush.bf16.msra.mxu0 %v3993
    %4237 = vmatpush.bf16.msra.mxu0 %v3990
    %4238 = vmatmul.bf16.gmra.mxu0 %v3417
    %v4239 = vpop.f32.mrf.mxu0
    %v4240 = vadd.f32 %v3584, %v4239
    %v4241 = vpop.f32.mrf.mxu0
    %4242 = vdwg.mxu0
    %4243 = vmatpush.bf16.msra.mxu0 %v4035
    %4244 = vmatpush.bf16.msra.mxu0 %v4032
    %4245 = vmatpush.bf16.msra.mxu0 %v4029
    %4246 = vmatpush.bf16.msra.mxu0 %v4026
    %4247 = vmatpush.bf16.msra.mxu0 %v4023
    %4248 = vmatpush.bf16.msra.mxu0 %v4020
    %4249 = vmatpush.bf16.msra.mxu0 %v4017
    %4250 = vmatpush.bf16.msra.mxu0 %v4014
    %4251 = vmatmul.bf16.gmra.mxu0 %v3418
    %v4252 = vpop.f32.mrf.mxu0
    %v4253 = vadd.f32 %v4240, %v4252
    %v4254 = vpop.f32.mrf.mxu0
    %4255 = vdwg.mxu0
    %4256 = vmatpush.bf16.msra.mxu0 %v4059
    %4257 = vmatpush.bf16.msra.mxu0 %v4056
    %4258 = vmatpush.bf16.msra.mxu0 %v4053
    %4259 = vmatpush.bf16.msra.mxu0 %v4050
    %4260 = vmatpush.bf16.msra.mxu0 %v4047
    %4261 = vmatpush.bf16.msra.mxu0 %v4044
    %4262 = vmatpush.bf16.msra.mxu0 %v4041
    %4263 = vmatpush.bf16.msra.mxu0 %v4038
    %4264 = vmatmul.bf16.gmra.mxu0 %v3419
    %v4265 = vpop.f32.mrf.mxu0
    %v4266 = vadd.f32 %v4253, %v4265
    %v4267 = vpop.f32.mrf.mxu0
    %4268 = vdwg.mxu0
    %4269 = vmatpush.bf16.msra.mxu0 %v4083
    %4270 = vmatpush.bf16.msra.mxu0 %v4080
    %4271 = vmatpush.bf16.msra.mxu0 %v4077
    %4272 = vmatpush.bf16.msra.mxu0 %v4074
    %4273 = vmatpush.bf16.msra.mxu0 %v4071
    %4274 = vmatpush.bf16.msra.mxu0 %v4068
    %4275 = vmatpush.bf16.msra.mxu0 %v4065
    %4276 = vmatpush.bf16.msra.mxu0 %v4062
    %4277 = vmatmul.bf16.gmra.mxu0 %v3420
    %v4278 = vpop.f32.mrf.mxu0
    %v4279 = vadd.f32 %v4266, %v4278
    %v4280 = vpop.f32.mrf.mxu0
    %4281 = vdwg.mxu0
    %4282 = vmatpush.bf16.msra.mxu0 %v4107
    %4283 = vmatpush.bf16.msra.mxu0 %v4104
    %4284 = vmatpush.bf16.msra.mxu0 %v4101
    %4285 = vmatpush.bf16.msra.mxu0 %v4098
    %4286 = vmatpush.bf16.msra.mxu0 %v4095
    %4287 = vmatpush.bf16.msra.mxu0 %v4092
    %4288 = vmatpush.bf16.msra.mxu0 %v4089
    %4289 = vmatpush.bf16.msra.mxu0 %v4086
    %4290 = vmatmul.bf16.gmra.mxu0 %v3421
    %v4291 = vpop.f32.mrf.mxu0
    %v4292 = vadd.f32 %v4279, %v4291
    %v4293 = vpop.f32.mrf.mxu0
    %4294 = vdwg.mxu0
    %4295 = vmatpush.bf16.msra.mxu0 %v4012
    %4296 = vmatpush.bf16.msra.mxu0 %v4009
    %4297 = vmatpush.bf16.msra.mxu0 %v4006
    %4298 = vmatpush.bf16.msra.mxu0 %v4003
    %4299 = vmatpush.bf16.msra.mxu0 %v4000
    %4300 = vmatpush.bf16.msra.mxu0 %v3997
    %4301 = vmatpush.bf16.msra.mxu0 %v3994
    %4302 = vmatpush.bf16.msra.mxu0 %v3991
    %4303 = vmatmul.bf16.gmra.mxu0 %v3417
    %v4304 = vpop.f32.mrf.mxu0
    %v4305 = vadd.f32 %v3585, %v4304
    %v4306 = vpop.f32.mrf.mxu0
    %4307 = vdwg.mxu0
    %4308 = vmatpush.bf16.msra.mxu0 %v4036
    %4309 = vmatpush.bf16.msra.mxu0 %v4033
    %4310 = vmatpush.bf16.msra.mxu0 %v4030
    %4311 = vmatpush.bf16.msra.mxu0 %v4027
    %4312 = vmatpush.bf16.msra.mxu0 %v4024
    %4313 = vmatpush.bf16.msra.mxu0 %v4021
    %4314 = vmatpush.bf16.msra.mxu0 %v4018
    %4315 = vmatpush.bf16.msra.mxu0 %v4015
    %4316 = vmatmul.bf16.gmra.mxu0 %v3418
    %v4317 = vpop.f32.mrf.mxu0
    %v4318 = vadd.f32 %v4305, %v4317
    %v4319 = vpop.f32.mrf.mxu0
    %4320 = vdwg.mxu0
    %4321 = vmatpush.bf16.msra.mxu0 %v4060
    %4322 = vmatpush.bf16.msra.mxu0 %v4057
    %4323 = vmatpush.bf16.msra.mxu0 %v4054
    %4324 = vmatpush.bf16.msra.mxu0 %v4051
    %4325 = vmatpush.bf16.msra.mxu0 %v4048
    %4326 = vmatpush.bf16.msra.mxu0 %v4045
    %4327 = vmatpush.bf16.msra.mxu0 %v4042
    %4328 = vmatpush.bf16.msra.mxu0 %v4039
    %4329 = vmatmul.bf16.gmra.mxu0 %v3419
    %v4330 = vpop.f32.mrf.mxu0
    %v4331 = vadd.f32 %v4318, %v4330
    %v4332 = vpop.f32.mrf.mxu0
    %4333 = vdwg.mxu0
    %4334 = vmatpush.bf16.msra.mxu0 %v4084
    %4335 = vmatpush.bf16.msra.mxu0 %v4081
    %4336 = vmatpush.bf16.msra.mxu0 %v4078
    %4337 = vmatpush.bf16.msra.mxu0 %v4075
    %4338 = vmatpush.bf16.msra.mxu0 %v4072
    %4339 = vmatpush.bf16.msra.mxu0 %v4069
    %4340 = vmatpush.bf16.msra.mxu0 %v4066
    %4341 = vmatpush.bf16.msra.mxu0 %v4063
    %4342 = vmatmul.bf16.gmra.mxu0 %v3420
    %v4343 = vpop.f32.mrf.mxu0
    %v4344 = vadd.f32 %v4331, %v4343
    %v4345 = vpop.f32.mrf.mxu0
    %4346 = vdwg.mxu0
    %4347 = vmatpush.bf16.msra.mxu0 %v4108
    %4348 = vmatpush.bf16.msra.mxu0 %v4105
    %4349 = vmatpush.bf16.msra.mxu0 %v4102
    %4350 = vmatpush.bf16.msra.mxu0 %v4099
    %4351 = vmatpush.bf16.msra.mxu0 %v4096
    %4352 = vmatpush.bf16.msra.mxu0 %v4093
    %4353 = vmatpush.bf16.msra.mxu0 %v4090
    %4354 = vmatpush.bf16.msra.mxu0 %v4087
    %4355 = vmatmul.bf16.gmra.mxu0 %v3421
    %v4356 = vpop.f32.mrf.mxu0
    %v4357 = vadd.f32 %v4344, %v4356
    %v4358 = vpop.f32.mrf.mxu0
    %4359 = vdwg.mxu0
    %4360 = vmatpush.bf16.msra.mxu0 %v4013
    %4361 = vmatpush.bf16.msra.mxu0 %v4010
    %4362 = vmatpush.bf16.msra.mxu0 %v4007
    %4363 = vmatpush.bf16.msra.mxu0 %v4004
    %4364 = vmatpush.bf16.msra.mxu0 %v4001
    %4365 = vmatpush.bf16.msra.mxu0 %v3998
    %4366 = vmatpush.bf16.msra.mxu0 %v3995
    %4367 = vmatpush.bf16.msra.mxu0 %v3992
    %4368 = vmatmul.bf16.gmra.mxu0 %v3417
    %v4369 = vpop.f32.mrf.mxu0
    %v4370 = vadd.f32 %v3586, %v4369
    %v4371 = vpop.f32.mrf.mxu0
    %4372 = vdwg.mxu0
    %4373 = vmatpush.bf16.msra.mxu0 %v4037
    %4374 = vmatpush.bf16.msra.mxu0 %v4034
    %4375 = vmatpush.bf16.msra.mxu0 %v4031
    %4376 = vmatpush.bf16.msra.mxu0 %v4028
    %4377 = vmatpush.bf16.msra.mxu0 %v4025
    %4378 = vmatpush.bf16.msra.mxu0 %v4022
    %4379 = vmatpush.bf16.msra.mxu0 %v4019
    %4380 = vmatpush.bf16.msra.mxu0 %v4016
    %4381 = vmatmul.bf16.gmra.mxu0 %v3418
    %v4382 = vpop.f32.mrf.mxu0
    %v4383 = vadd.f32 %v4370, %v4382
    %v4384 = vpop.f32.mrf.mxu0
    %4385 = vdwg.mxu0
    %4386 = vmatpush.bf16.msra.mxu0 %v4061
    %4387 = vmatpush.bf16.msra.mxu0 %v4058
    %4388 = vmatpush.bf16.msra.mxu0 %v4055
    %4389 = vmatpush.bf16.msra.mxu0 %v4052
    %4390 = vmatpush.bf16.msra.mxu0 %v4049
    %4391 = vmatpush.bf16.msra.mxu0 %v4046
    %4392 = vmatpush.bf16.msra.mxu0 %v4043
    %4393 = vmatpush.bf16.msra.mxu0 %v4040
    %4394 = vmatmul.bf16.gmra.mxu0 %v3419
    %v4395 = vpop.f32.mrf.mxu0
    %v4396 = vadd.f32 %v4383, %v4395
    %v4397 = vpop.f32.mrf.mxu0
    %4398 = vdwg.mxu0
    %4399 = vmatpush.bf16.msra.mxu0 %v4085
    %4400 = vmatpush.bf16.msra.mxu0 %v4082
    %4401 = vmatpush.bf16.msra.mxu0 %v4079
    %4402 = vmatpush.bf16.msra.mxu0 %v4076
    %4403 = vmatpush.bf16.msra.mxu0 %v4073
    %4404 = vmatpush.bf16.msra.mxu0 %v4070
    %4405 = vmatpush.bf16.msra.mxu0 %v4067
    %4406 = vmatpush.bf16.msra.mxu0 %v4064
    %4407 = vmatmul.bf16.gmra.mxu0 %v3420
    %v4408 = vpop.f32.mrf.mxu0
    %v4409 = vadd.f32 %v4396, %v4408
    %v4410 = vpop.f32.mrf.mxu0
    %4411 = vdwg.mxu0
    %4412 = vmatpush.bf16.msra.mxu0 %v4109
    %4413 = vmatpush.bf16.msra.mxu0 %v4106
    %4414 = vmatpush.bf16.msra.mxu0 %v4103
    %4415 = vmatpush.bf16.msra.mxu0 %v4100
    %4416 = vmatpush.bf16.msra.mxu0 %v4097
    %4417 = vmatpush.bf16.msra.mxu0 %v4094
    %4418 = vmatpush.bf16.msra.mxu0 %v4091
    %4419 = vmatpush.bf16.msra.mxu0 %v4088
    %4420 = vmatmul.bf16.gmra.mxu0 %v3421
    %v4421 = vpop.f32.mrf.mxu0
    %v4422 = vadd.f32 %v4409, %v4421
    %v4423 = vpop.f32.mrf.mxu0
    %4424 = vdwg.mxu0
    %v4425 = vmax.f32 %v4292, 0.0
    %v4426 = vmax.f32 %v4357, 0.0
    %v4427 = vmax.f32 %v4422, 0.0
    %v4428 = vpack.c.bf16 %v4425, %v4425
    %v4429 = vpack.c.bf16 %v4426, %v4426
    %v4430 = vpack.c.bf16 %v4427, %v4427
    %v4431 = vld [vmem:[#allocation14] sm:$0xff]
    %v4432 = vld [vmem:[#allocation14 + $0x8] sm:$0xff]
    %v4433 = vld [vmem:[#allocation14 + $0x10] sm:$0xff]
    %v4434 = vld [vmem:[#allocation14 + $0x18] sm:$0xff]
    %v4435 = vld [vmem:[#allocation14 + $0x20] sm:$0xff]
    %v4436 = vld [vmem:[#allocation14 + $0x28] sm:$0xff]
    %v4437 = vld [vmem:[#allocation14 + $0x30] sm:$0xff]
    %v4438 = vld [vmem:[#allocation14 + $0x38] sm:$0xff]
    %v4439 = vld [vmem:[#allocation14 + $0x40] sm:$0xff]
    %v4440 = vld [vmem:[#allocation14 + $0x48] sm:$0xff]
    %v4441 = vld [vmem:[#allocation14 + $0x50] sm:$0xff]
    %v4442 = vld [vmem:[#allocation14 + $0x58] sm:$0xff]
    %v4443 = vld [vmem:[#allocation14 + $0x60] sm:$0xff]
    %v4444 = vld [vmem:[#allocation14 + $0x68] sm:$0xff]
    %v4445 = vld [vmem:[#allocation14 + $0x70] sm:$0xff]
    %v4446 = vld [vmem:[#allocation14 + $0x78] sm:$0xff]
    %v4447 = vld [vmem:[#allocation14 + $0x80] sm:$0xff]
    %v4448 = vld [vmem:[#allocation14 + $0x88] sm:$0xff]
    %v4449 = vld [vmem:[#allocation14 + $0x90] sm:$0xff]
    %v4450 = vld [vmem:[#allocation14 + $0x98] sm:$0xff]
    %v4451 = vld [vmem:[#allocation14 + $0xa0] sm:$0xff]
    %v4452 = vld [vmem:[#allocation14 + $0xa8] sm:$0xff]
    %v4453 = vld [vmem:[#allocation14 + $0xb0] sm:$0xff]
    %v4454 = vld [vmem:[#allocation14 + $0xb8] sm:$0xff]
    %v4455 = vld [vmem:[#allocation14 + $0xc0] sm:$0xff]
    %v4456 = vld [vmem:[#allocation14 + $0xc8] sm:$0xff]
    %v4457 = vld [vmem:[#allocation14 + $0xd0] sm:$0xff]
    %v4458 = vld [vmem:[#allocation14 + $0xd8] sm:$0xff]
    %v4459 = vld [vmem:[#allocation14 + $0xe0] sm:$0xff]
    %v4460 = vld [vmem:[#allocation14 + $0xe8] sm:$0xff]
    %v4461 = vld [vmem:[#allocation14 + $0xf0] sm:$0xff]
    %v4462 = vld [vmem:[#allocation14 + $0xf8] sm:$0xff]
    %v4463 = vld [vmem:[#allocation14 + $0x100] sm:$0xff]
    %v4464 = vld [vmem:[#allocation14 + $0x108] sm:$0xff]
    %v4465 = vld [vmem:[#allocation14 + $0x110] sm:$0xff]
    %v4466 = vld [vmem:[#allocation14 + $0x118] sm:$0xff]
    %v4467 = vld [vmem:[#allocation14 + $0x120] sm:$0xff]
    %v4468 = vld [vmem:[#allocation14 + $0x128] sm:$0xff]
    %v4469 = vld [vmem:[#allocation14 + $0x130] sm:$0xff]
    %v4470 = vld [vmem:[#allocation14 + $0x138] sm:$0xff]
    %v4471 = vld [vmem:[#allocation14 + $0x140] sm:$0xff]
    %v4472 = vld [vmem:[#allocation14 + $0x148] sm:$0xff]
    %v4473 = vld [vmem:[#allocation14 + $0x150] sm:$0xff]
    %v4474 = vld [vmem:[#allocation14 + $0x158] sm:$0xff]
    %v4475 = vld [vmem:[#allocation14 + $0x160] sm:$0xff]
    %v4476 = vld [vmem:[#allocation14 + $0x168] sm:$0xff]
    %v4477 = vld [vmem:[#allocation14 + $0x170] sm:$0xff]
    %v4478 = vld [vmem:[#allocation14 + $0x178] sm:$0xff]
    %v4479 = vld [vmem:[#allocation16] sm:$0x3]
    %v4481 = vperm.slane %v4479, 0
    %v4482 = vperm.slane %v4479, 1
    %v4533 = vunpack.c.l.b16 %v4431
    %v4534 = vunpack.c.h.b16 %v4431
    %v4535 = vunpack.c.l.b16 %v4432
    %v4536 = vunpack.c.h.b16 %v4432
    %v4537 = vunpack.c.l.b16 %v4433
    %v4538 = vunpack.c.h.b16 %v4433
    %v4539 = vunpack.c.l.b16 %v4434
    %v4540 = vunpack.c.h.b16 %v4434
    %v4541 = vunpack.c.l.b16 %v4435
    %v4542 = vunpack.c.h.b16 %v4435
    %v4543 = vunpack.c.l.b16 %v4436
    %v4544 = vunpack.c.h.b16 %v4436
    %v4545 = vunpack.c.l.b16 %v4437
    %v4546 = vunpack.c.h.b16 %v4437
    %v4547 = vunpack.c.l.b16 %v4438
    %v4548 = vunpack.c.h.b16 %v4438
    %v4549 = vunpack.c.l.b16 %v4439
    %v4550 = vunpack.c.h.b16 %v4439
    %v4551 = vunpack.c.l.b16 %v4440
    %v4552 = vunpack.c.h.b16 %v4440
    %v4553 = vunpack.c.l.b16 %v4441
    %v4554 = vunpack.c.h.b16 %v4441
    %v4555 = vunpack.c.l.b16 %v4442
    %v4556 = vunpack.c.h.b16 %v4442
    %v4557 = vunpack.c.l.b16 %v4443
    %v4558 = vunpack.c.h.b16 %v4443
    %v4559 = vunpack.c.l.b16 %v4444
    %v4560 = vunpack.c.h.b16 %v4444
    %v4561 = vunpack.c.l.b16 %v4445
    %v4562 = vunpack.c.h.b16 %v4445
    %v4563 = vunpack.c.l.b16 %v4446
    %v4564 = vunpack.c.h.b16 %v4446
    %v4565 = vunpack.c.l.b16 %v4447
    %v4566 = vunpack.c.h.b16 %v4447
    %v4567 = vunpack.c.l.b16 %v4448
    %v4568 = vunpack.c.h.b16 %v4448
    %v4569 = vunpack.c.l.b16 %v4449
    %v4570 = vunpack.c.h.b16 %v4449
    %v4571 = vunpack.c.l.b16 %v4450
    %v4572 = vunpack.c.h.b16 %v4450
    %v4573 = vunpack.c.l.b16 %v4451
    %v4574 = vunpack.c.h.b16 %v4451
    %v4575 = vunpack.c.l.b16 %v4452
    %v4576 = vunpack.c.h.b16 %v4452
    %v4577 = vunpack.c.l.b16 %v4453
    %v4578 = vunpack.c.h.b16 %v4453
    %v4579 = vunpack.c.l.b16 %v4454
    %v4580 = vunpack.c.h.b16 %v4454
    %v4581 = vunpack.c.l.b16 %v4455
    %v4582 = vunpack.c.h.b16 %v4455
    %v4583 = vunpack.c.l.b16 %v4456
    %v4584 = vunpack.c.h.b16 %v4456
    %v4585 = vunpack.c.l.b16 %v4457
    %v4586 = vunpack.c.h.b16 %v4457
    %v4587 = vunpack.c.l.b16 %v4458
    %v4588 = vunpack.c.h.b16 %v4458
    %v4589 = vunpack.c.l.b16 %v4459
    %v4590 = vunpack.c.h.b16 %v4459
    %v4591 = vunpack.c.l.b16 %v4460
    %v4592 = vunpack.c.h.b16 %v4460
    %v4593 = vunpack.c.l.b16 %v4461
    %v4594 = vunpack.c.h.b16 %v4461
    %v4595 = vunpack.c.l.b16 %v4462
    %v4596 = vunpack.c.h.b16 %v4462
    %v4597 = vunpack.c.l.b16 %v4463
    %v4598 = vunpack.c.h.b16 %v4463
    %v4599 = vunpack.c.l.b16 %v4464
    %v4600 = vunpack.c.h.b16 %v4464
    %v4601 = vunpack.c.l.b16 %v4465
    %v4602 = vunpack.c.h.b16 %v4465
    %v4603 = vunpack.c.l.b16 %v4466
    %v4604 = vunpack.c.h.b16 %v4466
    %v4605 = vunpack.c.l.b16 %v4467
    %v4606 = vunpack.c.h.b16 %v4467
    %v4607 = vunpack.c.l.b16 %v4468
    %v4608 = vunpack.c.h.b16 %v4468
    %v4609 = vunpack.c.l.b16 %v4469
    %v4610 = vunpack.c.h.b16 %v4469
    %v4611 = vunpack.c.l.b16 %v4470
    %v4612 = vunpack.c.h.b16 %v4470
    %v4613 = vunpack.c.l.b16 %v4471
    %v4614 = vunpack.c.h.b16 %v4471
    %v4615 = vunpack.c.l.b16 %v4472
    %v4616 = vunpack.c.h.b16 %v4472
    %v4617 = vunpack.c.l.b16 %v4473
    %v4618 = vunpack.c.h.b16 %v4473
    %v4619 = vunpack.c.l.b16 %v4474
    %v4620 = vunpack.c.h.b16 %v4474
    %v4621 = vunpack.c.l.b16 %v4475
    %v4622 = vunpack.c.h.b16 %v4475
    %v4623 = vunpack.c.l.b16 %v4476
    %v4624 = vunpack.c.h.b16 %v4476
    %v4625 = vunpack.c.l.b16 %v4477
    %v4626 = vunpack.c.h.b16 %v4477
    %v4627 = vunpack.c.l.b16 %v4478
    %v4628 = vunpack.c.h.b16 %v4478
    %v4629 = vpack.c.b16 %v4535, %v4533
    %v4630 = vpack.c.b16 %v4536, %v4534
    %v4631 = vpack.c.b16 %v4539, %v4537
    %v4632 = vpack.c.b16 %v4540, %v4538
    %v4633 = vpack.c.b16 %v4543, %v4541
    %v4634 = vpack.c.b16 %v4544, %v4542
    %v4635 = vpack.c.b16 %v4547, %v4545
    %v4636 = vpack.c.b16 %v4548, %v4546
    %v4637 = vpack.c.b16 %v4551, %v4549
    %v4638 = vpack.c.b16 %v4552, %v4550
    %v4639 = vpack.c.b16 %v4555, %v4553
    %v4640 = vpack.c.b16 %v4556, %v4554
    %v4641 = vpack.c.b16 %v4559, %v4557
    %v4642 = vpack.c.b16 %v4560, %v4558
    %v4643 = vpack.c.b16 %v4563, %v4561
    %v4644 = vpack.c.b16 %v4564, %v4562
    %v4645 = vpack.c.b16 %v4567, %v4565
    %v4646 = vpack.c.b16 %v4568, %v4566
    %v4647 = vpack.c.b16 %v4571, %v4569
    %v4648 = vpack.c.b16 %v4572, %v4570
    %v4649 = vpack.c.b16 %v4575, %v4573
    %v4650 = vpack.c.b16 %v4576, %v4574
    %v4651 = vpack.c.b16 %v4579, %v4577
    %v4652 = vpack.c.b16 %v4580, %v4578
    %v4653 = vpack.c.b16 %v4583, %v4581
    %v4654 = vpack.c.b16 %v4584, %v4582
    %v4655 = vpack.c.b16 %v4587, %v4585
    %v4656 = vpack.c.b16 %v4588, %v4586
    %v4657 = vpack.c.b16 %v4591, %v4589
    %v4658 = vpack.c.b16 %v4592, %v4590
    %v4659 = vpack.c.b16 %v4595, %v4593
    %v4660 = vpack.c.b16 %v4596, %v4594
    %v4661 = vpack.c.b16 %v4599, %v4597
    %v4662 = vpack.c.b16 %v4600, %v4598
    %v4663 = vpack.c.b16 %v4603, %v4601
    %v4664 = vpack.c.b16 %v4604, %v4602
    %v4665 = vpack.c.b16 %v4607, %v4605
    %v4666 = vpack.c.b16 %v4608, %v4606
    %v4667 = vpack.c.b16 %v4611, %v4609
    %v4668 = vpack.c.b16 %v4612, %v4610
    %v4669 = vpack.c.b16 %v4615, %v4613
    %v4670 = vpack.c.b16 %v4616, %v4614
    %v4671 = vpack.c.b16 %v4619, %v4617
    %v4672 = vpack.c.b16 %v4620, %v4618
    %v4673 = vpack.c.b16 %v4623, %v4621
    %v4674 = vpack.c.b16 %v4624, %v4622
    %v4675 = vpack.c.b16 %v4627, %v4625
    %v4676 = vpack.c.b16 %v4628, %v4626
    %4725 = vmatpush.bf16.msra.mxu0 %v4643
    %4726 = vmatpush.bf16.msra.mxu0 %v4641
    %4727 = vmatpush.bf16.msra.mxu0 %v4639
    %4728 = vmatpush.bf16.msra.mxu0 %v4637
    %4729 = vmatpush.bf16.msra.mxu0 %v4635
    %4730 = vmatpush.bf16.msra.mxu0 %v4633
    %4731 = vmatpush.bf16.msra.mxu0 %v4631
    %4732 = vmatpush.bf16.msra.mxu0 %v4629
    %4733 = vmatmul.bf16.gmra.mxu0 %v4428
    %v4734 = vpop.f32.mrf.mxu0
    %v4735 = vadd.f32 %v4481, %v4734
    %v4736 = vpop.f32.mrf.mxu0
    %4737 = vdwg.mxu0
    %4738 = vmatpush.bf16.msra.mxu0 %v4659
    %4739 = vmatpush.bf16.msra.mxu0 %v4657
    %4740 = vmatpush.bf16.msra.mxu0 %v4655
    %4741 = vmatpush.bf16.msra.mxu0 %v4653
    %4742 = vmatpush.bf16.msra.mxu0 %v4651
    %4743 = vmatpush.bf16.msra.mxu0 %v4649
    %4744 = vmatpush.bf16.msra.mxu0 %v4647
    %4745 = vmatpush.bf16.msra.mxu0 %v4645
    %4746 = vmatmul.bf16.gmra.mxu0 %v4429
    %v4747 = vpop.f32.mrf.mxu0
    %v4748 = vadd.f32 %v4735, %v4747
    %v4749 = vpop.f32.mrf.mxu0
    %4750 = vdwg.mxu0
    %4751 = vmatpush.bf16.msra.mxu0 %v4675
    %4752 = vmatpush.bf16.msra.mxu0 %v4673
    %4753 = vmatpush.bf16.msra.mxu0 %v4671
    %4754 = vmatpush.bf16.msra.mxu0 %v4669
    %4755 = vmatpush.bf16.msra.mxu0 %v4667
    %4756 = vmatpush.bf16.msra.mxu0 %v4665
    %4757 = vmatpush.bf16.msra.mxu0 %v4663
    %4758 = vmatpush.bf16.msra.mxu0 %v4661
    %4759 = vmatmul.bf16.gmra.mxu0 %v4430
    %v4760 = vpop.f32.mrf.mxu0
    %v4761 = vadd.f32 %v4748, %v4760
    %v4762 = vpop.f32.mrf.mxu0
    %4763 = vdwg.mxu0
    %4764 = vmatpush.bf16.msra.mxu0 %v4644
    %4765 = vmatpush.bf16.msra.mxu0 %v4642
    %4766 = vmatpush.bf16.msra.mxu0 %v4640
    %4767 = vmatpush.bf16.msra.mxu0 %v4638
    %4768 = vmatpush.bf16.msra.mxu0 %v4636
    %4769 = vmatpush.bf16.msra.mxu0 %v4634
    %4770 = vmatpush.bf16.msra.mxu0 %v4632
    %4771 = vmatpush.bf16.msra.mxu0 %v4630
    %4772 = vmatmul.bf16.gmra.mxu0 %v4428
    %v4773 = vpop.f32.mrf.mxu0
    %v4774 = vadd.f32 %v4482, %v4773
    %v4775 = vpop.f32.mrf.mxu0
    %4776 = vdwg.mxu0
    %4777 = vmatpush.bf16.msra.mxu0 %v4660
    %4778 = vmatpush.bf16.msra.mxu0 %v4658
    %4779 = vmatpush.bf16.msra.mxu0 %v4656
    %4780 = vmatpush.bf16.msra.mxu0 %v4654
    %4781 = vmatpush.bf16.msra.mxu0 %v4652
    %4782 = vmatpush.bf16.msra.mxu0 %v4650
    %4783 = vmatpush.bf16.msra.mxu0 %v4648
    %4784 = vmatpush.bf16.msra.mxu0 %v4646
    %4785 = vmatmul.bf16.gmra.mxu0 %v4429
    %v4786 = vpop.f32.mrf.mxu0
    %v4787 = vadd.f32 %v4774, %v4786
    %v4788 = vpop.f32.mrf.mxu0
    %4789 = vdwg.mxu0
    %4790 = vmatpush.bf16.msra.mxu0 %v4676
    %4791 = vmatpush.bf16.msra.mxu0 %v4674
    %4792 = vmatpush.bf16.msra.mxu0 %v4672
    %4793 = vmatpush.bf16.msra.mxu0 %v4670
    %4794 = vmatpush.bf16.msra.mxu0 %v4668
    %4795 = vmatpush.bf16.msra.mxu0 %v4666
    %4796 = vmatpush.bf16.msra.mxu0 %v4664
    %4797 = vmatpush.bf16.msra.mxu0 %v4662
    %4798 = vmatmul.bf16.gmra.mxu0 %v4430
    %v4799 = vpop.f32.mrf.mxu0
    %v4800 = vadd.f32 %v4787, %v4799
    %v4801 = vpop.f32.mrf.mxu0
    %4802 = vdwg.mxu0
    %v4803 = vmax.f32 %v4761, 0.0
    %v4804 = vmax.f32 %v4800, 0.0
    %v4805 = vpack.c.bf16 %v4803, %v4803
    %v4806 = vpack.c.bf16 %v4804, %v4804
    %v4807 = vld [vmem:[#allocation17] sm:$0xf]
    %v4808 = vld [vmem:[#allocation17 + $0x4] sm:$0xf]
    %v4809 = vld [vmem:[#allocation17 + $0x8] sm:$0xf]
    %v4810 = vld [vmem:[#allocation17 + $0xc] sm:$0xf]
    %v4811 = vld [vmem:[#allocation17 + $0x10] sm:$0xf]
    %v4812 = vld [vmem:[#allocation17 + $0x14] sm:$0xf]
    %v4813 = vld [vmem:[#allocation17 + $0x18] sm:$0xf]
    %v4814 = vld [vmem:[#allocation17 + $0x1c] sm:$0xf]
    %v4815 = vld [vmem:[#allocation17 + $0x20] sm:$0xf]
    %v4816 = vld [vmem:[#allocation17 + $0x24] sm:$0xf]
    %v4817 = vld [vmem:[#allocation17 + $0x28] sm:$0xf]
    %v4818 = vld [vmem:[#allocation17 + $0x2c] sm:$0xf]
    %v4819 = vld [vmem:[#allocation17 + $0x30] sm:$0xf]
    %v4820 = vld [vmem:[#allocation17 + $0x34] sm:$0xf]
    %v4821 = vld [vmem:[#allocation17 + $0x38] sm:$0xf]
    %v4822 = vld [vmem:[#allocation17 + $0x3c] sm:$0xf]
    %v4823 = vld [vmem:[#allocation17 + $0x40] sm:$0xf]
    %v4824 = vld [vmem:[#allocation17 + $0x44] sm:$0xf]
    %v4825 = vld [vmem:[#allocation17 + $0x48] sm:$0xf]
    %v4826 = vld [vmem:[#allocation17 + $0x4c] sm:$0xf]
    %v4827 = vld [vmem:[#allocation17 + $0x50] sm:$0xf]
    %v4828 = vld [vmem:[#allocation17 + $0x54] sm:$0xf]
    %v4829 = vld [vmem:[#allocation17 + $0x58] sm:$0xf]
    %v4830 = vld [vmem:[#allocation17 + $0x5c] sm:$0xf]
    %v4831 = vld [vmem:[#allocation17 + $0x60] sm:$0xf]
    %v4832 = vld [vmem:[#allocation17 + $0x64] sm:$0xf]
    %v4833 = vld [vmem:[#allocation17 + $0x68] sm:$0xf]
    %v4834 = vld [vmem:[#allocation17 + $0x6c] sm:$0xf]
    %v4835 = vld [vmem:[#allocation17 + $0x70] sm:$0xf]
    %v4836 = vld [vmem:[#allocation17 + $0x74] sm:$0xf]
    %v4837 = vld [vmem:[#allocation17 + $0x78] sm:$0xf]
    %v4838 = vld [vmem:[#allocation17 + $0x7c] sm:$0xf]
    %v4839 = vld [vmem:[#allocation19] sm:$0x1]
    %v4841 = vperm.slane %v4839, 0
    %v4875 = vunpack.c.l.b16 %v4807
    %v4876 = vunpack.c.l.b16 %v4808
    %v4877 = vunpack.c.l.b16 %v4809
    %v4878 = vunpack.c.l.b16 %v4810
    %v4879 = vunpack.c.l.b16 %v4811
    %v4880 = vunpack.c.l.b16 %v4812
    %v4881 = vunpack.c.l.b16 %v4813
    %v4882 = vunpack.c.l.b16 %v4814
    %v4883 = vunpack.c.l.b16 %v4815
    %v4884 = vunpack.c.l.b16 %v4816
    %v4885 = vunpack.c.l.b16 %v4817
    %v4886 = vunpack.c.l.b16 %v4818
    %v4887 = vunpack.c.l.b16 %v4819
    %v4888 = vunpack.c.l.b16 %v4820
    %v4889 = vunpack.c.l.b16 %v4821
    %v4890 = vunpack.c.l.b16 %v4822
    %v4891 = vunpack.c.l.b16 %v4823
    %v4892 = vunpack.c.l.b16 %v4824
    %v4893 = vunpack.c.l.b16 %v4825
    %v4894 = vunpack.c.l.b16 %v4826
    %v4895 = vunpack.c.l.b16 %v4827
    %v4896 = vunpack.c.l.b16 %v4828
    %v4897 = vunpack.c.l.b16 %v4829
    %v4898 = vunpack.c.l.b16 %v4830
    %v4899 = vunpack.c.l.b16 %v4831
    %v4900 = vunpack.c.l.b16 %v4832
    %v4901 = vunpack.c.l.b16 %v4833
    %v4902 = vunpack.c.l.b16 %v4834
    %v4903 = vunpack.c.l.b16 %v4835
    %v4904 = vunpack.c.l.b16 %v4836
    %v4905 = vunpack.c.l.b16 %v4837
    %v4906 = vunpack.c.l.b16 %v4838
    %v4907 = vpack.c.b16 %v4876, %v4875
    %v4908 = vpack.c.b16 %v4878, %v4877
    %v4909 = vpack.c.b16 %v4880, %v4879
    %v4910 = vpack.c.b16 %v4882, %v4881
    %v4911 = vpack.c.b16 %v4884, %v4883
    %v4912 = vpack.c.b16 %v4886, %v4885
    %v4913 = vpack.c.b16 %v4888, %v4887
    %v4914 = vpack.c.b16 %v4890, %v4889
    %v4915 = vpack.c.b16 %v4892, %v4891
    %v4916 = vpack.c.b16 %v4894, %v4893
    %v4917 = vpack.c.b16 %v4896, %v4895
    %v4918 = vpack.c.b16 %v4898, %v4897
    %v4919 = vpack.c.b16 %v4900, %v4899
    %v4920 = vpack.c.b16 %v4902, %v4901
    %v4921 = vpack.c.b16 %v4904, %v4903
    %v4922 = vpack.c.b16 %v4906, %v4905
    %4939 = vmatpush.bf16.msra.mxu0 %v4914
    %4940 = vmatpush.bf16.msra.mxu0 %v4913
    %4941 = vmatpush.bf16.msra.mxu0 %v4912
    %4942 = vmatpush.bf16.msra.mxu0 %v4911
    %4943 = vmatpush.bf16.msra.mxu0 %v4910
    %4944 = vmatpush.bf16.msra.mxu0 %v4909
    %4945 = vmatpush.bf16.msra.mxu0 %v4908
    %4946 = vmatpush.bf16.msra.mxu0 %v4907
    %4947 = vmatmul.bf16.gmra.mxu0 %v4805
    %v4948 = vpop.f32.mrf.mxu0
    %v4949 = vadd.f32 %v4841, %v4948
    %v4950 = vpop.f32.mrf.mxu0
    %4951 = vdwg.mxu0
    %4952 = vmatpush.bf16.msra.mxu0 %v4922
    %4953 = vmatpush.bf16.msra.mxu0 %v4921
    %4954 = vmatpush.bf16.msra.mxu0 %v4920
    %4955 = vmatpush.bf16.msra.mxu0 %v4919
    %4956 = vmatpush.bf16.msra.mxu0 %v4918
    %4957 = vmatpush.bf16.msra.mxu0 %v4917
    %4958 = vmatpush.bf16.msra.mxu0 %v4916
    %4959 = vmatpush.bf16.msra.mxu0 %v4915
    %4960 = vmatmul.bf16.gmra.mxu0 %v4806
    %v4961 = vpop.f32.mrf.mxu0
    %v4962 = vadd.f32 %v4949, %v4961
    %v4963 = vpop.f32.mrf.mxu0
    %4964 = vdwg.mxu0
    %v4965 = vmax.f32 %v4962, 0.0
    %v4966 = vpack.c.bf16 %v4965, %v4965
    %v4967 = vld [vmem:[#allocation20] sm:$0xf]
    %v4968 = vld [vmem:[#allocation20 + $0x4] sm:$0xf]
    %v4969 = vld [vmem:[#allocation20 + $0x8] sm:$0xf]
    %v4970 = vld [vmem:[#allocation20 + $0xc] sm:$0xf]
    %v4971 = vld [vmem:[#allocation20 + $0x10] sm:$0xf]
    %v4972 = vld [vmem:[#allocation20 + $0x14] sm:$0xf]
    %v4973 = vld [vmem:[#allocation20 + $0x18] sm:$0xf]
    %v4974 = vld [vmem:[#allocation20 + $0x1c] sm:$0xf]
    %v4975 = vld [vmem:[#allocation20 + $0x20] sm:$0xf]
    %v4976 = vld [vmem:[#allocation20 + $0x24] sm:$0xf]
    %v4977 = vld [vmem:[#allocation20 + $0x28] sm:$0xf]
    %v4978 = vld [vmem:[#allocation20 + $0x2c] sm:$0xf]
    %v4979 = vld [vmem:[#allocation20 + $0x30] sm:$0xf]
    %v4980 = vld [vmem:[#allocation20 + $0x34] sm:$0xf]
    %v4981 = vld [vmem:[#allocation20 + $0x38] sm:$0xf]
    %v4982 = vld [vmem:[#allocation20 + $0x3c] sm:$0xf]
    %v4983 = vld [vmem:[#allocation22] sm:$0x1]
    %v4985 = vperm.slane %v4983, 0
    %v5003 = vunpack.c.l.b16 %v4967
    %v5004 = vunpack.c.l.b16 %v4968
    %v5005 = vunpack.c.l.b16 %v4969
    %v5006 = vunpack.c.l.b16 %v4970
    %v5007 = vunpack.c.l.b16 %v4971
    %v5008 = vunpack.c.l.b16 %v4972
    %v5009 = vunpack.c.l.b16 %v4973
    %v5010 = vunpack.c.l.b16 %v4974
    %v5011 = vunpack.c.l.b16 %v4975
    %v5012 = vunpack.c.l.b16 %v4976
    %v5013 = vunpack.c.l.b16 %v4977
    %v5014 = vunpack.c.l.b16 %v4978
    %v5015 = vunpack.c.l.b16 %v4979
    %v5016 = vunpack.c.l.b16 %v4980
    %v5017 = vunpack.c.l.b16 %v4981
    %v5018 = vunpack.c.l.b16 %v4982
    %v5019 = vpack.c.b16 %v5004, %v5003
    %v5020 = vpack.c.b16 %v5006, %v5005
    %v5021 = vpack.c.b16 %v5008, %v5007
    %v5022 = vpack.c.b16 %v5010, %v5009
    %v5023 = vpack.c.b16 %v5012, %v5011
    %v5024 = vpack.c.b16 %v5014, %v5013
    %v5025 = vpack.c.b16 %v5016, %v5015
    %v5026 = vpack.c.b16 %v5018, %v5017
    %5035 = vmatpush.bf16.msra.mxu0 %v5026
    %5036 = vmatpush.bf16.msra.mxu0 %v5025
    %5037 = vmatpush.bf16.msra.mxu0 %v5024
    %5038 = vmatpush.bf16.msra.mxu0 %v5023
    %5039 = vmatpush.bf16.msra.mxu0 %v5022
    %5040 = vmatpush.bf16.msra.mxu0 %v5021
    %5041 = vmatpush.bf16.msra.mxu0 %v5020
    %5042 = vmatpush.bf16.msra.mxu0 %v5019
    %5043 = vmatmul.bf16.gmra.mxu0 %v4966
    %v5044 = vpop.f32.mrf.mxu0
    %v5045 = vadd.f32 %v4985, %v5044
    %v5046 = vpop.f32.mrf.mxu0
    %5047 = vdwg.mxu0
    %5048 = vst [vmem:[#allocation23] sm:$0xff] %v5045
    // Predicated region
    $region106: #{tpu_custom_call.1} parent=1 // pred_check
      _
    $region107: #{tpu_custom_call.1} parent=1 // pred_check_branch
      %5050 = sbr.rel (0) target = $region109
    $region108: #{tpu_custom_call.1} parent=1 // pred_region
      %5052 = vsyncadd [#allocation4], 0
      %s5054 = sshll.u32 [#allocation23], 4
      %s5055 = int_to_ptr.vmem [resolvable:$true] %s5054
      %s5056 = sshll.u32 %s13, 4
      %s5057 = int_to_ptr.hbm [resolvable:$true] %s5056
      %5059 = dma.vmem_to_hbm [thread:$0]  %s5055, 128, %s5057, [#allocation4]
    $region109: #{tpu_custom_call.1} parent=1 // pred_fallthru
      _
    // Predicated region
    $region110: #{tpu_custom_call.1} parent=1 // pred_check
      _
    $region111: #{tpu_custom_call.1} parent=1 // pred_check_branch
      %5061 = sbr.rel (0) target = $region113
    $region112: #{tpu_custom_call.1} parent=1 // pred_region
      %5063 = dma.done [#allocation4], 128
    $region113: #{tpu_custom_call.1} parent=1 // pred_fallthru
      _
    %5064 = vsyncpa [#allocation3], 1
    %5065 = vsyncpa [#allocation6], 1
    %5066 = vsyncpa [#allocation9], 1
    %5067 = vsyncpa [#allocation12], 1
    %5068 = vsyncpa [#allocation15], 1
    %5069 = vsyncpa [#allocation18], 1
    %5070 = vsyncpa [#allocation21], 1
    %5071 = vsyncpa [#allocation4], 1

</llo_original>
